<compile_context>
chip_gen: v7x
topology: tpu7x:2x2x1
jax: 0.10.0
libtpu: 0.0.40
codegen_flags: <defaults>
</compile_context>

<pallas_src>
import jax
import jax.numpy as jnp
from jax import lax
from jax.experimental import pallas as pl
from jax.experimental.pallas import tpu as pltpu


def _round_up(x, m):
    return ((x + m - 1) // m) * m


# ----------------------------- kernels ------------------------------------ #

def _mlp_loss_kernel(mask_ref, labels_ref, x_ref, w1_ref, b1_ref, w2_ref, b2_ref,
                     logits_ref, loss_part_ref, cnt_part_ref,
                     h_ref, m_ref, l_ref, ll_ref):
    j = pl.program_id(1)
    nv = pl.num_programs(1)

    # --- once per M tile: masked input, first matmul, ReLU; init CE state ---
    @pl.when(j == 0)
    def _():
        xm = x_ref[...] * mask_ref[...].astype(x_ref.dtype)          # (TM, H) bf16
        h = jnp.dot(xm, w1_ref[...], preferred_element_type=jnp.float32)
        h = jnp.maximum(h + b1_ref[...], 0.0)
        h_ref[...] = h.astype(h_ref.dtype)                           # bf16 scratch
        m_ref[...] = jnp.full_like(m_ref, -1e30)
        l_ref[...] = jnp.zeros_like(l_ref)
        ll_ref[...] = jnp.zeros_like(ll_ref)

    # --- per vocab tile: second matmul (MXU, f32 accumulate) ---
    logits = (jnp.dot(h_ref[...], w2_ref[...], preferred_element_type=jnp.float32)
              + b2_ref[...])                                         # (TM, TV) f32
    logits_ref[...] = logits.astype(logits_ref.dtype)

    # --- online cross-entropy statistics over the vocab axis ---
    tm, tv = logits.shape
    labels = labels_ref[...]                                         # (TM, 1) i32
    col = lax.broadcasted_iota(jnp.int32, (tm, tv), 1) + j * tv
    ll_ref[...] += jnp.sum(jnp.where(col == labels, logits, 0.0),
                           axis=-1, keepdims=True)

    m_prev = m_ref[...]
    m_new = jnp.maximum(m_prev, jnp.max(logits, axis=-1, keepdims=True))
    l_ref[...] = (l_ref[...] * jnp.exp(m_prev - m_new)
                  + jnp.sum(jnp.exp(logits - m_new), axis=-1, keepdims=True))
    m_ref[...] = m_new

    # --- finalize this M tile: per-tile partial loss sum / active count ---
    @pl.when(j == nv - 1)
    def _():
        active = (mask_ref[...] > 0.5).astype(jnp.float32)           # (TM, 1)
        nll = (m_ref[...] + jnp.log(l_ref[...]) - ll_ref[...]) * active
        loss_part_ref[...] = (jnp.zeros(loss_part_ref.shape, jnp.float32)
                              + jnp.sum(nll))
        cnt_part_ref[...] = (jnp.zeros(cnt_part_ref.shape, jnp.float32)
                             + jnp.sum(active))


def _mlp_logits_kernel(mask_ref, x_ref, w1_ref, b1_ref, w2_ref, b2_ref,
                       logits_ref, h_ref):
    j = pl.program_id(1)

    @pl.when(j == 0)
    def _():
        xm = x_ref[...] * mask_ref[...].astype(x_ref.dtype)
        h = jnp.dot(xm, w1_ref[...], preferred_element_type=jnp.float32)
        h_ref[...] = jnp.maximum(h + b1_ref[...], 0.0).astype(h_ref.dtype)

    logits_ref[...] = (jnp.dot(h_ref[...], w2_ref[...],
                               preferred_element_type=jnp.float32)
                       + b2_ref[...]).astype(logits_ref.dtype)


# ----------------------------- wrapper ------------------------------------- #

def inversion_mlp_forward(x, w1, b1, w2, b2, attention_mask=None, labels=None,
                          *, tile_m=128, tile_v=512):
    """Forward pass of InversionMLP. Returns (logits, loss)."""
    bsz, seq_len, hid = x.shape
    mlp_hidden = w1.shape[1]
    vocab = w2.shape[1]
    M = bsz * seq_len

    tile_v = min(tile_v, _round_up(vocab, 128))
    m_pad = _round_up(M, tile_m)
    v_pad = _round_up(vocab, tile_v)
    n_mt = m_pad // tile_m
    n_vt = v_pad // tile_v

    # bf16 inputs for the MXU; f32 biases / accumulation / CE math.
    x2d = jnp.zeros((m_pad, hid), jnp.bfloat16).at[:M].set(
        x.reshape(M, hid).astype(jnp.bfloat16))
    if attention_mask is None:
        mask_f = jnp.zeros((m_pad, 1), jnp.float32).at[:M].set(1.0)
    else:
        mask_f = jnp.zeros((m_pad, 1), jnp.float32).at[:M, 0].set(
            attention_mask.reshape(M).astype(jnp.float32))

    w1b = w1.astype(jnp.bfloat16)
    b1f = b1.reshape(1, mlp_hidden).astype(jnp.float32)
    w2b = jnp.zeros((mlp_hidden, v_pad), jnp.bfloat16).at[:, :vocab].set(
        w2.astype(jnp.bfloat16))
    # Padded vocab columns get a very negative bias so they never win the
    # max / contribute to the softmax; they are sliced off before returning.
    b2f = jnp.full((1, v_pad), -1e30, jnp.float32).at[0, :vocab].set(
        b2.astype(jnp.float32))

    grid = (n_mt, n_vt)
    common_in_specs = [
        pl.BlockSpec((tile_m, 1), lambda i, j: (i, 0)),             # mask
        pl.BlockSpec((tile_m, hid), lambda i, j: (i, 0)),           # x
        pl.BlockSpec((hid, mlp_hidden), lambda i, j: (0, 0)),       # w1
        pl.BlockSpec((1, mlp_hidden), lambda i, j: (0, 0)),         # b1
        pl.BlockSpec((mlp_hidden, tile_v), lambda i, j: (0, j)),    # w2 (vocab tile)
        pl.BlockSpec((1, tile_v), lambda i, j: (0, j)),             # b2 (vocab tile)
    ]
    logits_spec = pl.BlockSpec((tile_m, tile_v), lambda i, j: (i, j))
    compiler_params = pltpu.CompilerParams(
        dimension_semantics=("parallel", "arbitrary"))

    if labels is None:
        logits2d = pl.pallas_call(
            _mlp_logits_kernel,
            out_shape=jax.ShapeDtypeStruct((m_pad, v_pad), jnp.float32),
            grid_spec=pltpu.PrefetchScalarGridSpec(
                num_scalar_prefetch=0,
                grid=grid,
                in_specs=common_in_specs,
                out_specs=logits_spec,
                scratch_shapes=[pltpu.VMEM((tile_m, mlp_hidden), jnp.bfloat16)],
            ),
            compiler_params=compiler_params,
        )(mask_f, x2d, w1b, b1f, w2b, b2f)
        logits = logits2d[:M, :vocab].reshape(bsz, seq_len, vocab)
        return logits, None

    labels_i = jnp.zeros((m_pad, 1), jnp.int32).at[:M, 0].set(
        labels.reshape(M).astype(jnp.int32))

    logits2d, loss_part, cnt_part = pl.pallas_call(
        _mlp_loss_kernel,
        out_shape=(
            jax.ShapeDtypeStruct((m_pad, v_pad), jnp.float32),
            jax.ShapeDtypeStruct((n_mt, 8, 128), jnp.float32),      # loss partials
            jax.ShapeDtypeStruct((n_mt, 8, 128), jnp.float32),      # count partials
        ),
        grid_spec=pltpu.PrefetchScalarGridSpec(
            num_scalar_prefetch=0,
            grid=grid,
            in_specs=[common_in_specs[0],
                      pl.BlockSpec((tile_m, 1), lambda i, j: (i, 0)),   # labels
                      ] + common_in_specs[1:],
            out_specs=[
                logits_spec,
                pl.BlockSpec((1, 8, 128), lambda i, j: (i, 0, 0)),
                pl.BlockSpec((1, 8, 128), lambda i, j: (i, 0, 0)),
            ],
            scratch_shapes=[
                pltpu.VMEM((tile_m, mlp_hidden), jnp.bfloat16),     # h (post-ReLU)
                pltpu.VMEM((tile_m, 1), jnp.float32),               # running max
                pltpu.VMEM((tile_m, 1), jnp.float32),               # running sum-exp
                pltpu.VMEM((tile_m, 1), jnp.float32),               # label logit
            ],
        ),
        compiler_params=compiler_params,
    )(mask_f, labels_i, x2d, w1b, b1f, w2b, b2f)

    logits = logits2d[:M, :vocab].reshape(bsz, seq_len, vocab)
    loss = loss_part[:, 0, 0].sum() / cnt_part[:, 0, 0].sum()
    return logits, loss


# ----------------------------- references ---------------------------------- #

def _reference_forward_bf16(x, w1, b1, w2, b2, attention_mask, labels):
    # Mirrors the kernel's dtype choices (bf16 MXU inputs, f32 accumulation).
    bsz, seq_len, hid = x.shape
    vocab = w2.shape[1]
    mask = attention_mask.astype(jnp.float32)
    xm = (x * mask[:, :, None]).reshape(-1, hid).astype(jnp.bfloat16)
    h = jnp.dot(xm, w1.astype(jnp.bfloat16),
                preferred_element_type=jnp.float32) + b1
    h = jnp.maximum(h, 0.0).astype(jnp.bfloat16)
    logits = jnp.dot(h, w2.astype(jnp.bfloat16),
                     preferred_element_type=jnp.float32) + b2
    active = (attention_mask.reshape(-1) > 0.5).astype(jnp.float32)
    lse = jax.nn.logsumexp(logits, axis=-1)
    label_logit = jnp.take_along_axis(
        logits, labels.reshape(-1, 1).astype(jnp.int32), axis=-1)[:, 0]
    loss = jnp.sum((lse - label_logit) * active) / jnp.sum(active)
    return logits.reshape(bsz, seq_len, vocab), loss


def _reference_forward_f32(x, w1, b1, w2, b2, attention_mask, labels):
    # Pure f32 reference (original PyTorch-module numerics).
    bsz, seq_len, hid = x.shape
    vocab = w2.shape[1]
    xm = (x * attention_mask[:, :, None].astype(x.dtype)).reshape(-1, hid)
    h = jnp.maximum(xm @ w1 + b1, 0.0)
    logits = h @ w2 + b2
    active = (attention_mask.reshape(-1) > 0.5).astype(jnp.float32)
    lse = jax.nn.logsumexp(logits, axis=-1)
    label_logit = jnp.take_along_axis(
        logits, labels.reshape(-1, 1).astype(jnp.int32), axis=-1)[:, 0]
    loss = jnp.sum((lse - label_logit) * active) / jnp.sum(active)
    return logits.reshape(bsz, seq_len, vocab), loss


# ----------------------------- test driver --------------------------------- #

if __name__ == "__main__":
    # Small config consistent with the module: config.hidden_size=32,
    # config.vocab_size=128; the internal MLP hidden size is fixed at 2048.
    batch, seq, hidden, vocab, mlp_hidden = 2, 8, 32, 128, 2048

    key = jax.random.PRNGKey(0)
    kx, km, kl, kw1, kb1, kw2, kb2 = jax.random.split(key, 7)

    x = jax.random.normal(kx, (batch, seq, hidden), dtype=jnp.float32)
    attention_mask = (jax.random.uniform(km, (batch, seq)) > 0.25).astype(jnp.int32)
    labels = jax.random.randint(kl, (batch, seq), 0, vocab, dtype=jnp.int32)

    # PyTorch-Linear-style uniform init bounds.
    bound1 = 1.0 / (hidden ** 0.5)
    w1 = jax.random.uniform(kw1, (hidden, mlp_hidden), jnp.float32, -bound1, bound1)
    b1 = jax.random.uniform(kb1, (mlp_hidden,), jnp.float32, -bound1, bound1)
    bound2 = 1.0 / (mlp_hidden ** 0.5)
    w2 = jax.random.uniform(kw2, (mlp_hidden, vocab), jnp.float32, -bound2, bound2)
    b2 = jax.random.uniform(kb2, (vocab,), jnp.float32, -bound2, bound2)

    # Training path (loss requested).
    logits, loss = inversion_mlp_forward(x, w1, b1, w2, b2,
                                         attention_mask=attention_mask,
                                         labels=labels)
    logits = jax.block_until_ready(logits)
    loss = jax.block_until_ready(loss)
    assert logits.shape == (batch, seq, vocab)
    assert bool(jnp.isfinite(loss))

    # Tight check against a reference that mirrors the kernel's bf16 MXU inputs.
    ref_logits, ref_loss = _reference_forward_bf16(x, w1, b1, w2, b2,
                                                   attention_mask, labels)
    assert jnp.allclose(logits, ref_logits, atol=2e-3, rtol=2e-3)
    assert jnp.allclose(loss, ref_loss, atol=2e-3, rtol=2e-3)

    # Looser check against the pure-f32 (original module) numerics.
    f32_logits, f32_loss = _reference_forward_f32(x, w1, b1, w2, b2,
                                                  attention_mask, labels)
    assert jnp.allclose(logits, f32_logits, atol=2e-2, rtol=2e-2)
    assert jnp.allclose(loss, f32_loss, atol=2e-2, rtol=2e-2)

    # Inference path (labels=None) skips all CE work.
    logits_inf, loss_none = inversion_mlp_forward(x, w1, b1, w2, b2,
                                                  attention_mask=attention_mask)
    logits_inf = jax.block_until_ready(logits_inf)
    assert loss_none is None
    assert jnp.allclose(logits_inf, logits, atol=1e-5, rtol=1e-5)

    print("KERNEL_OK")
</pallas_src>

<mosaic_0001>
module attributes {stable_mosaic.version = 11 : i64} {
  func.func @_mlp_loss_kernel(%arg0: i32, %arg1: i32, %arg2: memref<128x1xf32, #tpu.memory_space<vmem>>, %arg3: memref<128x1xi32, #tpu.memory_space<vmem>>, %arg4: memref<128x32xbf16, #tpu.memory_space<vmem>>, %arg5: memref<32x2048xbf16, #tpu.memory_space<vmem>>, %arg6: memref<1x2048xf32, #tpu.memory_space<vmem>>, %arg7: memref<2048x128xbf16, #tpu.memory_space<vmem>>, %arg8: memref<1x128xf32, #tpu.memory_space<vmem>>, %arg9: memref<128x128xf32, #tpu.memory_space<vmem>>, %arg10: memref<1x8x128xf32, #tpu.memory_space<vmem>>, %arg11: memref<1x8x128xf32, #tpu.memory_space<vmem>>, %arg12: memref<128x2048xbf16, #tpu.memory_space<vmem>>, %arg13: memref<128x1xf32, #tpu.memory_space<vmem>>, %arg14: memref<128x1xf32, #tpu.memory_space<vmem>>, %arg15: memref<128x1xf32, #tpu.memory_space<vmem>>) attributes {dimension_semantics = [#tpu.dimension_semantics<parallel>, #tpu.dimension_semantics<arbitrary>], iteration_bounds = array<i64: 1, 1>, scalar_prefetch = 0 : i64, scratch_operands = 4 : i64, tpu.core_type = #tpu.core_type<tc>, window_params = [{transform_indices = @transform_0, window_bounds = array<i64: 128, 1>}, {transform_indices = @transform_1, window_bounds = array<i64: 128, 1>}, {transform_indices = @transform_2, window_bounds = array<i64: 128, 32>}, {pipeline_mode = #tpu.pipeline_mode<synchronous>, transform_indices = @transform_3, window_bounds = array<i64: 32, 2048>}, {pipeline_mode = #tpu.pipeline_mode<synchronous>, transform_indices = @transform_4, window_bounds = array<i64: 1, 2048>}, {transform_indices = @transform_5, window_bounds = array<i64: 2048, 128>}, {transform_indices = @transform_6, window_bounds = array<i64: 1, 128>}, {transform_indices = @transform_7, window_bounds = array<i64: 128, 128>}, {transform_indices = @transform_8, window_bounds = array<i64: 1, 8, 128>}, {transform_indices = @transform_9, window_bounds = array<i64: 1, 8, 128>}]} {
    %c0_i32 = arith.constant 0 : i32
    %0 = arith.cmpi eq, %arg1, %c0_i32 : i32
    %1 = arith.extui %0 : i1 to i32
    %c0_i32_0 = arith.constant 0 : i32
    %2 = arith.cmpi ne, %1, %c0_i32_0 : i32
    scf.if %2 {
      %c0_28 = arith.constant 0 : index
      %c0_29 = arith.constant 0 : index
      %43 = vector.load %arg4[%c0_28, %c0_29] : memref<128x32xbf16, #tpu.memory_space<vmem>>, vector<128x32xbf16>
      %c0_30 = arith.constant 0 : index
      %c0_31 = arith.constant 0 : index
      %44 = vector.load %arg2[%c0_30, %c0_31] : memref<128x1xf32, #tpu.memory_space<vmem>>, vector<128x1xf32>
      %45 = arith.truncf %44 : vector<128x1xf32> to vector<128x1xbf16>
      %46 = vector.broadcast %45 : vector<128x1xbf16> to vector<128x32xbf16>
      %47 = arith.mulf %43, %46 : vector<128x32xbf16>
      %c0_32 = arith.constant 0 : index
      %c0_33 = arith.constant 0 : index
      %48 = vector.load %arg5[%c0_32, %c0_33] : memref<32x2048xbf16, #tpu.memory_space<vmem>>, vector<32x2048xbf16>
      %cst_34 = arith.constant dense<0.000000e+00> : vector<128x2048xf32>
      %49 = tpu.matmul %47, %48, %cst_34 {dimension_numbers = #tpu.dot_dimension_numbers<[1], [0], [0], [1], [0, 0, 1, 1], [], []>} : vector<128x32xbf16>, vector<32x2048xbf16>, vector<128x2048xf32> -> vector<128x2048xf32>
      %c0_35 = arith.constant 0 : index
      %c0_36 = arith.constant 0 : index
      %50 = vector.load %arg6[%c0_35, %c0_36] : memref<1x2048xf32, #tpu.memory_space<vmem>>, vector<1x2048xf32>
      %51 = vector.broadcast %50 : vector<1x2048xf32> to vector<128x2048xf32>
      %52 = arith.addf %49, %51 : vector<128x2048xf32>
      %cst_37 = arith.constant 0.000000e+00 : f32
      %53 = vector.broadcast %cst_37 : f32 to vector<128x2048xf32>
      %54 = arith.maximumf %52, %53 : vector<128x2048xf32>
      %55 = arith.truncf %54 : vector<128x2048xf32> to vector<128x2048xbf16>
      %c0_38 = arith.constant 0 : index
      %c0_39 = arith.constant 0 : index
      %56 = vector.load %arg12[%c0_38, %c0_39] : memref<128x2048xbf16, #tpu.memory_space<vmem>>, vector<128x2048xbf16>
      tpu.vector_store %arg12[%c0_38, %c0_39], %55 {strides = array<i32>} : memref<128x2048xbf16, #tpu.memory_space<vmem>>, vector<128x2048xbf16>,
      %cst_40 = arith.constant -1.000000e+30 : f32
      %57 = vector.broadcast %cst_40 : f32 to vector<128x1xf32>
      %c0_41 = arith.constant 0 : index
      %c0_42 = arith.constant 0 : index
      %58 = vector.load %arg13[%c0_41, %c0_42] : memref<128x1xf32, #tpu.memory_space<vmem>>, vector<128x1xf32>
      tpu.vector_store %arg13[%c0_41, %c0_42], %57 {strides = array<i32>} : memref<128x1xf32, #tpu.memory_space<vmem>>, vector<128x1xf32>,
      %cst_43 = arith.constant 0.000000e+00 : f32
      %59 = vector.broadcast %cst_43 : f32 to vector<128x1xf32>
      %c0_44 = arith.constant 0 : index
      %c0_45 = arith.constant 0 : index
      %60 = vector.load %arg14[%c0_44, %c0_45] : memref<128x1xf32, #tpu.memory_space<vmem>>, vector<128x1xf32>
      tpu.vector_store %arg14[%c0_44, %c0_45], %59 {strides = array<i32>} : memref<128x1xf32, #tpu.memory_space<vmem>>, vector<128x1xf32>,
      %cst_46 = arith.constant 0.000000e+00 : f32
      %61 = vector.broadcast %cst_46 : f32 to vector<128x1xf32>
      %c0_47 = arith.constant 0 : index
      %c0_48 = arith.constant 0 : index
      %62 = vector.load %arg15[%c0_47, %c0_48] : memref<128x1xf32, #tpu.memory_space<vmem>>, vector<128x1xf32>
      tpu.vector_store %arg15[%c0_47, %c0_48], %61 {strides = array<i32>} : memref<128x1xf32, #tpu.memory_space<vmem>>, vector<128x1xf32>,
    } else {
    }
    %c0 = arith.constant 0 : index
    %c0_1 = arith.constant 0 : index
    %3 = vector.load %arg12[%c0, %c0_1] : memref<128x2048xbf16, #tpu.memory_space<vmem>>, vector<128x2048xbf16>
    %c0_2 = arith.constant 0 : index
    %c0_3 = arith.constant 0 : index
    %4 = vector.load %arg7[%c0_2, %c0_3] : memref<2048x128xbf16, #tpu.memory_space<vmem>>, vector<2048x128xbf16>
    %cst = arith.constant dense<0.000000e+00> : vector<128x128xf32>
    %5 = tpu.matmul %3, %4, %cst {dimension_numbers = #tpu.dot_dimension_numbers<[1], [0], [0], [1], [0, 0, 1, 1], [], []>} : vector<128x2048xbf16>, vector<2048x128xbf16>, vector<128x128xf32> -> vector<128x128xf32>
    %c0_4 = arith.constant 0 : index
    %c0_5 = arith.constant 0 : index
    %6 = vector.load %arg8[%c0_4, %c0_5] : memref<1x128xf32, #tpu.memory_space<vmem>>, vector<1x128xf32>
    %7 = vector.broadcast %6 : vector<1x128xf32> to vector<128x128xf32>
    %8 = arith.addf %5, %7 : vector<128x128xf32>
    %c0_6 = arith.constant 0 : index
    %c0_7 = arith.constant 0 : index
    %9 = vector.load %arg9[%c0_6, %c0_7] : memref<128x128xf32, #tpu.memory_space<vmem>>, vector<128x128xf32>
    tpu.vector_store %arg9[%c0_6, %c0_7], %8 {strides = array<i32>} : memref<128x128xf32, #tpu.memory_space<vmem>>, vector<128x128xf32>,
    %c0_8 = arith.constant 0 : index
    %c0_9 = arith.constant 0 : index
    %10 = vector.load %arg3[%c0_8, %c0_9] : memref<128x1xi32, #tpu.memory_space<vmem>>, vector<128x1xi32>
    %11 = tpu.iota {dimensions = array<i32: 1>} : vector<128x128xi32>
    %c128_i32 = arith.constant 128 : i32
    %12 = arith.muli %arg1, %c128_i32 : i32
    %13 = vector.broadcast %12 : i32 to vector<128x128xi32>
    %14 = arith.addi %11, %13 : vector<128x128xi32>
    %c0_10 = arith.constant 0 : index
    %c0_11 = arith.constant 0 : index
    %15 = vector.load %arg15[%c0_10, %c0_11] : memref<128x1xf32, #tpu.memory_space<vmem>>, vector<128x1xf32>
    %16 = vector.broadcast %10 : vector<128x1xi32> to vector<128x128xi32>
    %17 = arith.cmpi eq, %14, %16 : vector<128x128xi32>
    %cst_12 = arith.constant 0.000000e+00 : f32
    %18 = vector.broadcast %cst_12 : f32 to vector<128x128xf32>
    %19 = arith.select %17, %8, %18 : vector<128x128xi1>, vector<128x128xf32>
    %cst_13 = arith.constant dense<0.000000e+00> : vector<128xf32>
    %20 = vector.multi_reduction <add>, %19, %cst_13 [1] : vector<128x128xf32> to vector<128xf32>
    %21 = vector.shape_cast %20 : vector<128xf32> to vector<128x1xf32>
    %22 = arith.addf %15, %21 : vector<128x1xf32>
    %c0_14 = arith.constant 0 : index
    %c0_15 = arith.constant 0 : index
    %23 = vector.load %arg15[%c0_14, %c0_15] : memref<128x1xf32, #tpu.memory_space<vmem>>, vector<128x1xf32>
    tpu.vector_store %arg15[%c0_14, %c0_15], %22 {strides = array<i32>} : memref<128x1xf32, #tpu.memory_space<vmem>>, vector<128x1xf32>,
    %c0_16 = arith.constant 0 : index
    %c0_17 = arith.constant 0 : index
    %24 = vector.load %arg13[%c0_16, %c0_17] : memref<128x1xf32, #tpu.memory_space<vmem>>, vector<128x1xf32>
    %cst_18 = arith.constant dense<0xFF800000> : vector<128xf32>
    %25 = vector.multi_reduction <maximumf>, %8, %cst_18 [1] : vector<128x128xf32> to vector<128xf32>
    %26 = vector.shape_cast %25 : vector<128xf32> to vector<128x1xf32>
    %27 = arith.maximumf %24, %26 : vector<128x1xf32>
    %c0_19 = arith.constant 0 : index
    %c0_20 = arith.constant 0 : index
    %28 = vector.load %arg14[%c0_19, %c0_20] : memref<128x1xf32, #tpu.memory_space<vmem>>, vector<128x1xf32>
    %29 = arith.subf %24, %27 : vector<128x1xf32>
    %30 = math.exp %29 : vector<128x1xf32>
    %31 = arith.mulf %28, %30 : vector<128x1xf32>
    %32 = vector.broadcast %27 : vector<128x1xf32> to vector<128x128xf32>
    %33 = arith.subf %8, %32 : vector<128x128xf32>
    %34 = math.exp %33 : vector<128x128xf32>
    %cst_21 = arith.constant dense<0.000000e+00> : vector<128xf32>
    %35 = vector.multi_reduction <add>, %34, %cst_21 [1] : vector<128x128xf32> to vector<128xf32>
    %36 = vector.shape_cast %35 : vector<128xf32> to vector<128x1xf32>
    %37 = arith.addf %31, %36 : vector<128x1xf32>
    %c0_22 = arith.constant 0 : index
    %c0_23 = arith.constant 0 : index
    %38 = vector.load %arg14[%c0_22, %c0_23] : memref<128x1xf32, #tpu.memory_space<vmem>>, vector<128x1xf32>
    tpu.vector_store %arg14[%c0_22, %c0_23], %37 {strides = array<i32>} : memref<128x1xf32, #tpu.memory_space<vmem>>, vector<128x1xf32>,
    %c0_24 = arith.constant 0 : index
    %c0_25 = arith.constant 0 : index
    %39 = vector.load %arg13[%c0_24, %c0_25] : memref<128x1xf32, #tpu.memory_space<vmem>>, vector<128x1xf32>
    tpu.vector_store %arg13[%c0_24, %c0_25], %27 {strides = array<i32>} : memref<128x1xf32, #tpu.memory_space<vmem>>, vector<128x1xf32>,
    %c0_i32_26 = arith.constant 0 : i32
    %40 = arith.cmpi eq, %arg1, %c0_i32_26 : i32
    %41 = arith.extui %40 : i1 to i32
    %c0_i32_27 = arith.constant 0 : i32
    %42 = arith.cmpi ne, %41, %c0_i32_27 : i32
    scf.if %42 {
      %c0_28 = arith.constant 0 : index
      %c0_29 = arith.constant 0 : index
      %43 = vector.load %arg2[%c0_28, %c0_29] : memref<128x1xf32, #tpu.memory_space<vmem>>, vector<128x1xf32>
      %cst_30 = arith.constant 5.000000e-01 : f32
      %44 = vector.broadcast %cst_30 : f32 to vector<128x1xf32>
      %45 = arith.cmpf ogt, %43, %44 : vector<128x1xf32>
      %46 = arith.extui %45 : vector<128x1xi1> to vector<128x1xi32>
      %47 = arith.sitofp %46 : vector<128x1xi32> to vector<128x1xf32>
      %c0_31 = arith.constant 0 : index
      %c0_32 = arith.constant 0 : index
      %48 = vector.load %arg13[%c0_31, %c0_32] : memref<128x1xf32, #tpu.memory_space<vmem>>, vector<128x1xf32>
      %c0_33 = arith.constant 0 : index
      %c0_34 = arith.constant 0 : index
      %49 = vector.load %arg14[%c0_33, %c0_34] : memref<128x1xf32, #tpu.memory_space<vmem>>, vector<128x1xf32>
      %50 = math.log %49 : vector<128x1xf32>
      %51 = arith.addf %48, %50 : vector<128x1xf32>
      %c0_35 = arith.constant 0 : index
      %c0_36 = arith.constant 0 : index
      %52 = vector.load %arg15[%c0_35, %c0_36] : memref<128x1xf32, #tpu.memory_space<vmem>>, vector<128x1xf32>
      %53 = arith.subf %51, %52 : vector<128x1xf32>
      %54 = arith.mulf %53, %47 : vector<128x1xf32>
      %cst_37 = arith.constant 0.000000e+00 : f32
      %55 = vector.broadcast %cst_37 : f32 to vector<1x8x128xf32>
      %56 = vector.shape_cast %54 : vector<128x1xf32> to vector<1x128x1xf32>
      %cst_38 = arith.constant dense<0.000000e+00> : vector<1xf32>
      %57 = vector.multi_reduction <add>, %56, %cst_38 [1, 2] : vector<1x128x1xf32> to vector<1xf32>
      %58 = vector.shape_cast %57 : vector<1xf32> to vector<1x1x1xf32>
      %59 = vector.extract %58[0, 0, 0] : f32 from vector<1x1x1xf32>
      %60 = vector.broadcast %59 : f32 to vector<1x8x128xf32>
      %61 = arith.addf %55, %60 : vector<1x8x128xf32>
      %c0_39 = arith.constant 0 : index
      %c0_40 = arith.constant 0 : index
      %c0_41 = arith.constant 0 : index
      %62 = vector.load %arg10[%c0_39, %c0_40, %c0_41] : memref<1x8x128xf32, #tpu.memory_space<vmem>>, vector<1x8x128xf32>
      tpu.vector_store %arg10[%c0_39, %c0_40, %c0_41], %61 {strides = array<i32>} : memref<1x8x128xf32, #tpu.memory_space<vmem>>, vector<1x8x128xf32>,
      %cst_42 = arith.constant 0.000000e+00 : f32
      %63 = vector.broadcast %cst_42 : f32 to vector<1x8x128xf32>
      %64 = vector.shape_cast %47 : vector<128x1xf32> to vector<1x128x1xf32>
      %cst_43 = arith.constant dense<0.000000e+00> : vector<1xf32>
      %65 = vector.multi_reduction <add>, %64, %cst_43 [1, 2] : vector<1x128x1xf32> to vector<1xf32>
      %66 = vector.shape_cast %65 : vector<1xf32> to vector<1x1x1xf32>
      %67 = vector.extract %66[0, 0, 0] : f32 from vector<1x1x1xf32>
      %68 = vector.broadcast %67 : f32 to vector<1x8x128xf32>
      %69 = arith.addf %63, %68 : vector<1x8x128xf32>
      %c0_44 = arith.constant 0 : index
      %c0_45 = arith.constant 0 : index
      %c0_46 = arith.constant 0 : index
      %70 = vector.load %arg11[%c0_44, %c0_45, %c0_46] : memref<1x8x128xf32, #tpu.memory_space<vmem>>, vector<1x8x128xf32>
      tpu.vector_store %arg11[%c0_44, %c0_45, %c0_46], %69 {strides = array<i32>} : memref<1x8x128xf32, #tpu.memory_space<vmem>>, vector<1x8x128xf32>,
    } else {
    }
    return
  }
  func.func @transform_0(%arg0: i32, %arg1: i32) -> (i32, i32) {
    %c0_i32 = arith.constant 0 : i32
    %c0_i32_0 = arith.constant 0 : i32
    return %arg0, %c0_i32 : i32, i32
  }
  func.func @transform_1(%arg0: i32, %arg1: i32) -> (i32, i32) {
    %c0_i32 = arith.constant 0 : i32
    %c0_i32_0 = arith.constant 0 : i32
    return %arg0, %c0_i32 : i32, i32
  }
  func.func @transform_2(%arg0: i32, %arg1: i32) -> (i32, i32) {
    %c0_i32 = arith.constant 0 : i32
    %c0_i32_0 = arith.constant 0 : i32
    return %arg0, %c0_i32 : i32, i32
  }
  func.func @transform_3(%arg0: i32, %arg1: i32) -> (i32, i32) {
    %c0_i32 = arith.constant 0 : i32
    %c0_i32_0 = arith.constant 0 : i32
    %c0_i32_1 = arith.constant 0 : i32
    return %c0_i32, %c0_i32_0 : i32, i32
  }
  func.func @transform_4(%arg0: i32, %arg1: i32) -> (i32, i32) {
    %c0_i32 = arith.constant 0 : i32
    %c0_i32_0 = arith.constant 0 : i32
    %c0_i32_1 = arith.constant 0 : i32
    return %c0_i32, %c0_i32_0 : i32, i32
  }
  func.func @transform_5(%arg0: i32, %arg1: i32) -> (i32, i32) {
    %c0_i32 = arith.constant 0 : i32
    %c0_i32_0 = arith.constant 0 : i32
    return %c0_i32, %arg1 : i32, i32
  }
  func.func @transform_6(%arg0: i32, %arg1: i32) -> (i32, i32) {
    %c0_i32 = arith.constant 0 : i32
    %c0_i32_0 = arith.constant 0 : i32
    return %c0_i32, %arg1 : i32, i32
  }
  func.func @transform_7(%arg0: i32, %arg1: i32) -> (i32, i32) {
    %c0_i32 = arith.constant 0 : i32
    return %arg0, %arg1 : i32, i32
  }
  func.func @transform_8(%arg0: i32, %arg1: i32) -> (i32, i32, i32) {
    %c0_i32 = arith.constant 0 : i32
    %c0_i32_0 = arith.constant 0 : i32
    %c0_i32_1 = arith.constant 0 : i32
    return %arg0, %c0_i32, %c0_i32_0 : i32, i32, i32
  }
  func.func @transform_9(%arg0: i32, %arg1: i32) -> (i32, i32, i32) {
    %c0_i32 = arith.constant 0 : i32
    %c0_i32_0 = arith.constant 0 : i32
    %c0_i32_1 = arith.constant 0 : i32
    return %arg0, %c0_i32, %c0_i32_0 : i32, i32, i32
  }
}

</mosaic_0001>

<llo_original>
// kernel: tpu_custom_call.1
$region0: #{tpu_custom_call.1}
  #allocation0 [shape = 'u32[]', space=smem, size = 0x4, offset = 0x4, fixed_abs, tag = 'smem constant byte address 0x4 - core index']
  #allocation1 [shape = 'u32[144,128]{1,0:T(1,128)}', space=vmem, size = 0x12000, scoped, tag = 'internal scratch']
  #allocation2 [shape = 'bf16[128,2048]{1,0:T(16,128)(2,1)}', space=vmem, size = 0x80000, scoped, tag = 'scratch operand']
  #allocation3 [shape = 'f32[128,1]{1,0:T(8,128)}', space=vmem, size = 0x10000, scoped, tag = 'scratch operand']
  #allocation4 [shape = 'f32[128,1]{1,0:T(8,128)}', space=vmem, size = 0x10000, scoped, tag = 'scratch operand']
  #allocation5 [shape = 'f32[128,1]{1,0:T(8,128)}', space=vmem, size = 0x10000, scoped, tag = 'scratch operand']
  %s0 = inlined_call_operand.vmem [shape: f32[128,1], index: 0, kind: input, shape index: {}]
  %s1 = inlined_call_operand.vmem [shape: s32[128,1], index: 1, kind: input, shape index: {}]
  %s2 = inlined_call_operand.vmem [shape: bf16[128,32], index: 2, kind: input, shape index: {}]
  %s3 = inlined_call_operand.vmem [shape: bf16[32,2048], index: 3, kind: input, shape index: {}]
  %s4 = inlined_call_operand.vmem [shape: f32[1,2048], index: 4, kind: input, shape index: {}]
  %s5 = inlined_call_operand.hbm [shape: bf16[2048,128], index: 5, kind: input, shape index: {}]
  %s6 = inlined_call_operand.vmem [shape: f32[1,128], index: 6, kind: input, shape index: {}]
  %s7 = inlined_call_operand.hbm [shape: f32[128,128], index: 7, kind: output, shape index: {0}]
  %s8 = inlined_call_operand.hbm [shape: f32[1,8,128], index: 8, kind: output, shape index: {1}]
  %s9 = inlined_call_operand.hbm [shape: f32[1,8,128], index: 9, kind: output, shape index: {2}]
  %10 = xla_tuple %s7, %s8, %s9
  %s11 = sld [smem:[#allocation0]]
  $region66: #{tpu_custom_call.1} parent=0
    _
  %s13 = ssub.s32 1, %s11
  %s14 = scalar_select 0, %s13, %s11
  $region1: #{tpu_custom_call.1} parent=0
    #allocation6 [shape = 'u8[524288]{0}', space=vmem, size = 0x80000, scoped, tag = 'input window, operand 5, single buffered']
    #allocation7 [shape = 's32[1]{0}', space=sflag, size = 0x4, scoped, tag = 'scoped memory for tpu_custom_call.1']
    #allocation8 [shape = 's32[1]{0}', space=sflag, size = 0x4, scoped, tag = 'scoped memory for tpu_custom_call.1']
    #allocation9 [shape = 'u8[65536]{0}', space=vmem, size = 0x10000, scoped, tag = 'output window, operand 0, single buffered']
    #allocation10 [shape = 'u8[4096]{0}', space=vmem, size = 0x1000, scoped, tag = 'output window, operand 1, single buffered']
    #allocation11 [shape = 's32[1]{0}', space=sflag, size = 0x4, scoped, tag = 'scoped memory for tpu_custom_call.1']
    #allocation12 [shape = 'u8[4096]{0}', space=vmem, size = 0x1000, scoped, tag = 'output window, operand 2, single buffered']
    %15 = vsyncpa [#allocation7], 0
    %16 = vsyncpa [#allocation8], 0
    %17 = vsyncpa [#allocation11], 0
    // Predicated region
    $region2: #{tpu_custom_call.1} parent=1 // pred_check
      _
    $region3: #{tpu_custom_call.1} parent=1 // pred_check_branch
      %19 = sbr.rel (0) target = $region5
    $region4: #{tpu_custom_call.1} parent=1 // pred_region
      _
    $region5: #{tpu_custom_call.1} parent=1 // pred_fallthru
      _
    // Predicated region
    $region6: #{tpu_custom_call.1} parent=1 // pred_check
      _
    $region7: #{tpu_custom_call.1} parent=1 // pred_check_branch
      %21 = sbr.rel (0) target = $region9
    $region8: #{tpu_custom_call.1} parent=1 // pred_region
      _
    $region9: #{tpu_custom_call.1} parent=1 // pred_fallthru
      _
    // Predicated region
    $region10: #{tpu_custom_call.1} parent=1 // pred_check
      _
    $region11: #{tpu_custom_call.1} parent=1 // pred_check_branch
      %23 = sbr.rel (0) target = $region13
    $region12: #{tpu_custom_call.1} parent=1 // pred_region
      _
    $region13: #{tpu_custom_call.1} parent=1 // pred_fallthru
      _
    // Predicated region
    $region14: #{tpu_custom_call.1} parent=1 // pred_check
      _
    $region15: #{tpu_custom_call.1} parent=1 // pred_check_branch
      %25 = sbr.rel (0) target = $region17
    $region16: #{tpu_custom_call.1} parent=1 // pred_region
      _
    $region17: #{tpu_custom_call.1} parent=1 // pred_fallthru
      _
    // Predicated region
    $region18: #{tpu_custom_call.1} parent=1 // pred_check
      _
    $region19: #{tpu_custom_call.1} parent=1 // pred_check_branch
      %27 = sbr.rel (0) target = $region21
    $region20: #{tpu_custom_call.1} parent=1 // pred_region
      _
    $region21: #{tpu_custom_call.1} parent=1 // pred_fallthru
      _
    // Predicated region
    $region22: #{tpu_custom_call.1} parent=1 // pred_check
      _
    $region23: #{tpu_custom_call.1} parent=1 // pred_check_branch
      %29 = sbr.rel (0) target = $region25
    $region24: #{tpu_custom_call.1} parent=1 // pred_region
      %s31 = ssub.s32 16384, 16384
      %32 = vsyncadd [#allocation7], %s31
      %s33 = sshll.u32 [#allocation6], 4
      %s34 = int_to_ptr.vmem [resolvable:$true] %s33
      %39 = dma.hbm_to_vmem [thread:$0]  %s5, 16384, %s34, [#allocation7], 64, 64, 4
    $region25: #{tpu_custom_call.1} parent=1 // pred_fallthru
      _
    // Predicated region
    $region26: #{tpu_custom_call.1} parent=1 // pred_check
      _
    $region27: #{tpu_custom_call.1} parent=1 // pred_check_branch
      %41 = sbr.rel (0) target = $region29
    $region28: #{tpu_custom_call.1} parent=1 // pred_region
      _
    $region29: #{tpu_custom_call.1} parent=1 // pred_fallthru
      _
    // Predicated region
    $region30: #{tpu_custom_call.1} parent=1 // pred_check
      _
    $region31: #{tpu_custom_call.1} parent=1 // pred_check_branch
      %43 = sbr.rel (0) target = $region33
    $region32: #{tpu_custom_call.1} parent=1 // pred_region
      %44 = dma.done [#allocation7], 16384
    $region33: #{tpu_custom_call.1} parent=1 // pred_fallthru
      _
    %p46 = scmp.eq.s32.totalorder 0, 0
    // Predicated region
    $region34: #{tpu_custom_call.1} parent=1 // pred_check
      %p47 = pneg %p46
    $region35: #{tpu_custom_call.1} parent=1 // pred_check_branch
      %49 = sbr.rel (%p47) target = $region37
    $region36: #{tpu_custom_call.1} parent=1 // pred_region
      %v50 = vld [vmem:[%s2] sm:$0xf]
      %v51 = vld [vmem:[%s2 + $0x4] sm:$0xf]
      %v52 = vld [vmem:[%s2 + $0x8] sm:$0xf]
      %v53 = vld [vmem:[%s2 + $0xc] sm:$0xf]
      %v54 = vld [vmem:[%s2 + $0x10] sm:$0xf]
      %v55 = vld [vmem:[%s2 + $0x14] sm:$0xf]
      %v56 = vld [vmem:[%s2 + $0x18] sm:$0xf]
      %v57 = vld [vmem:[%s2 + $0x1c] sm:$0xf]
      %v58 = vld [vmem:[%s2 + $0x20] sm:$0xf]
      %v59 = vld [vmem:[%s2 + $0x24] sm:$0xf]
      %v60 = vld [vmem:[%s2 + $0x28] sm:$0xf]
      %v61 = vld [vmem:[%s2 + $0x2c] sm:$0xf]
      %v62 = vld [vmem:[%s2 + $0x30] sm:$0xf]
      %v63 = vld [vmem:[%s2 + $0x34] sm:$0xf]
      %v64 = vld [vmem:[%s2 + $0x38] sm:$0xf]
      %v65 = vld [vmem:[%s2 + $0x3c] sm:$0xf]
      %v66 = vld [vmem:[%s0] sm:$0xff]
      %v67 = vld [vmem:[%s0 + $0x8] sm:$0xff]
      %v68 = vld [vmem:[%s0 + $0x10] sm:$0xff]
      %v69 = vld [vmem:[%s0 + $0x18] sm:$0xff]
      %v70 = vld [vmem:[%s0 + $0x20] sm:$0xff]
      %v71 = vld [vmem:[%s0 + $0x28] sm:$0xff]
      %v72 = vld [vmem:[%s0 + $0x30] sm:$0xff]
      %v73 = vld [vmem:[%s0 + $0x38] sm:$0xff]
      %v74 = vld [vmem:[%s0 + $0x40] sm:$0xff]
      %v75 = vld [vmem:[%s0 + $0x48] sm:$0xff]
      %v76 = vld [vmem:[%s0 + $0x50] sm:$0xff]
      %v77 = vld [vmem:[%s0 + $0x58] sm:$0xff]
      %v78 = vld [vmem:[%s0 + $0x60] sm:$0xff]
      %v79 = vld [vmem:[%s0 + $0x68] sm:$0xff]
      %v80 = vld [vmem:[%s0 + $0x70] sm:$0xff]
      %v81 = vld [vmem:[%s0 + $0x78] sm:$0xff]
      %v82 = vpack.c.bf16 %v67, %v66
      %v83 = vpack.c.bf16 %v69, %v68
      %v84 = vpack.c.bf16 %v71, %v70
      %v85 = vpack.c.bf16 %v73, %v72
      %v86 = vpack.c.bf16 %v75, %v74
      %v87 = vpack.c.bf16 %v77, %v76
      %v88 = vpack.c.bf16 %v79, %v78
      %v89 = vpack.c.bf16 %v81, %v80
      %91 = vset.pattern.permute.xlu0 0
      %92 = vperm.xlu0 %91, %v82
      %v93 = vpop.permute.xlu0 %92
      %95 = vset.pattern.permute.xlu0 0
      %96 = vperm.xlu0 %95, %v83
      %v97 = vpop.permute.xlu0 %96
      %99 = vset.pattern.permute.xlu0 0
      %100 = vperm.xlu0 %99, %v84
      %v101 = vpop.permute.xlu0 %100
      %103 = vset.pattern.permute.xlu0 0
      %104 = vperm.xlu0 %103, %v85
      %v105 = vpop.permute.xlu0 %104
      %107 = vset.pattern.permute.xlu0 0
      %108 = vperm.xlu0 %107, %v86
      %v109 = vpop.permute.xlu0 %108
      %111 = vset.pattern.permute.xlu0 0
      %112 = vperm.xlu0 %111, %v87
      %v113 = vpop.permute.xlu0 %112
      %115 = vset.pattern.permute.xlu0 0
      %116 = vperm.xlu0 %115, %v88
      %v117 = vpop.permute.xlu0 %116
      %119 = vset.pattern.permute.xlu0 0
      %120 = vperm.xlu0 %119, %v89
      %v121 = vpop.permute.xlu0 %120
      %v131 = vunpack.c.l.s4 839922192
      %v132 = vunpack.c.0.s8 %v131
      %v133 = vlaneseq
      %v134 = vshrl.u32 %v133, 7
      %v135 = vsub.s32 %v132, %v134
      %v136 = vrot.slane %v93, %v135
      %v138 = vunpack.c.l.s4 1985246804
      %v139 = vunpack.c.0.s8 %v138
      %v140 = vlaneseq
      %v141 = vshrl.u32 %v140, 7
      %v142 = vsub.s32 %v139, %v141
      %v143 = vrot.slane %v93, %v142
      %v145 = vunpack.c.l.s4 839922192
      %v146 = vunpack.c.0.s8 %v145
      %v147 = vlaneseq
      %v148 = vshrl.u32 %v147, 7
      %v149 = vsub.s32 %v146, %v148
      %v150 = vrot.slane %v97, %v149
      %v152 = vunpack.c.l.s4 1985246804
      %v153 = vunpack.c.0.s8 %v152
      %v154 = vlaneseq
      %v155 = vshrl.u32 %v154, 7
      %v156 = vsub.s32 %v153, %v155
      %v157 = vrot.slane %v97, %v156
      %v159 = vunpack.c.l.s4 839922192
      %v160 = vunpack.c.0.s8 %v159
      %v161 = vlaneseq
      %v162 = vshrl.u32 %v161, 7
      %v163 = vsub.s32 %v160, %v162
      %v164 = vrot.slane %v101, %v163
      %v166 = vunpack.c.l.s4 1985246804
      %v167 = vunpack.c.0.s8 %v166
      %v168 = vlaneseq
      %v169 = vshrl.u32 %v168, 7
      %v170 = vsub.s32 %v167, %v169
      %v171 = vrot.slane %v101, %v170
      %v173 = vunpack.c.l.s4 839922192
      %v174 = vunpack.c.0.s8 %v173
      %v175 = vlaneseq
      %v176 = vshrl.u32 %v175, 7
      %v177 = vsub.s32 %v174, %v176
      %v178 = vrot.slane %v105, %v177
      %v180 = vunpack.c.l.s4 1985246804
      %v181 = vunpack.c.0.s8 %v180
      %v182 = vlaneseq
      %v183 = vshrl.u32 %v182, 7
      %v184 = vsub.s32 %v181, %v183
      %v185 = vrot.slane %v105, %v184
      %v187 = vunpack.c.l.s4 839922192
      %v188 = vunpack.c.0.s8 %v187
      %v189 = vlaneseq
      %v190 = vshrl.u32 %v189, 7
      %v191 = vsub.s32 %v188, %v190
      %v192 = vrot.slane %v109, %v191
      %v194 = vunpack.c.l.s4 1985246804
      %v195 = vunpack.c.0.s8 %v194
      %v196 = vlaneseq
      %v197 = vshrl.u32 %v196, 7
      %v198 = vsub.s32 %v195, %v197
      %v199 = vrot.slane %v109, %v198
      %v201 = vunpack.c.l.s4 839922192
      %v202 = vunpack.c.0.s8 %v201
      %v203 = vlaneseq
      %v204 = vshrl.u32 %v203, 7
      %v205 = vsub.s32 %v202, %v204
      %v206 = vrot.slane %v113, %v205
      %v208 = vunpack.c.l.s4 1985246804
      %v209 = vunpack.c.0.s8 %v208
      %v210 = vlaneseq
      %v211 = vshrl.u32 %v210, 7
      %v212 = vsub.s32 %v209, %v211
      %v213 = vrot.slane %v113, %v212
      %v215 = vunpack.c.l.s4 839922192
      %v216 = vunpack.c.0.s8 %v215
      %v217 = vlaneseq
      %v218 = vshrl.u32 %v217, 7
      %v219 = vsub.s32 %v216, %v218
      %v220 = vrot.slane %v117, %v219
      %v222 = vunpack.c.l.s4 1985246804
      %v223 = vunpack.c.0.s8 %v222
      %v224 = vlaneseq
      %v225 = vshrl.u32 %v224, 7
      %v226 = vsub.s32 %v223, %v225
      %v227 = vrot.slane %v117, %v226
      %v229 = vunpack.c.l.s4 839922192
      %v230 = vunpack.c.0.s8 %v229
      %v231 = vlaneseq
      %v232 = vshrl.u32 %v231, 7
      %v233 = vsub.s32 %v230, %v232
      %v234 = vrot.slane %v121, %v233
      %v236 = vunpack.c.l.s4 1985246804
      %v237 = vunpack.c.0.s8 %v236
      %v238 = vlaneseq
      %v239 = vshrl.u32 %v238, 7
      %v240 = vsub.s32 %v237, %v239
      %v241 = vrot.slane %v121, %v240
      %v258 = vmul.bf16 %v50, %v136
      %v259 = vmul.bf16 %v51, %v143
      %v260 = vmul.bf16 %v52, %v150
      %v261 = vmul.bf16 %v53, %v157
      %v262 = vmul.bf16 %v54, %v164
      %v263 = vmul.bf16 %v55, %v171
      %v264 = vmul.bf16 %v56, %v178
      %v265 = vmul.bf16 %v57, %v185
      %v266 = vmul.bf16 %v58, %v192
      %v267 = vmul.bf16 %v59, %v199
      %v268 = vmul.bf16 %v60, %v206
      %v269 = vmul.bf16 %v61, %v213
      %v270 = vmul.bf16 %v62, %v220
      %v271 = vmul.bf16 %v63, %v227
      %v272 = vmul.bf16 %v64, %v234
      %v273 = vmul.bf16 %v65, %v241
      %v274 = vld [vmem:[%s3] sm:$0xff]
      %v275 = vld [vmem:[%s3 + $0x8] sm:$0xff]
      %v276 = vld [vmem:[%s3 + $0x10] sm:$0xff]
      %v277 = vld [vmem:[%s3 + $0x18] sm:$0xff]
      %v278 = vld [vmem:[%s3 + $0x20] sm:$0xff]
      %v279 = vld [vmem:[%s3 + $0x28] sm:$0xff]
      %v280 = vld [vmem:[%s3 + $0x30] sm:$0xff]
      %v281 = vld [vmem:[%s3 + $0x38] sm:$0xff]
      %v282 = vld [vmem:[%s3 + $0x40] sm:$0xff]
      %v283 = vld [vmem:[%s3 + $0x48] sm:$0xff]
      %v284 = vld [vmem:[%s3 + $0x50] sm:$0xff]
      %v285 = vld [vmem:[%s3 + $0x58] sm:$0xff]
      %v286 = vld [vmem:[%s3 + $0x60] sm:$0xff]
      %v287 = vld [vmem:[%s3 + $0x68] sm:$0xff]
      %v288 = vld [vmem:[%s3 + $0x70] sm:$0xff]
      %v289 = vld [vmem:[%s3 + $0x78] sm:$0xff]
      %v290 = vld [vmem:[%s3 + $0x80] sm:$0xff]
      %v291 = vld [vmem:[%s3 + $0x88] sm:$0xff]
      %v292 = vld [vmem:[%s3 + $0x90] sm:$0xff]
      %v293 = vld [vmem:[%s3 + $0x98] sm:$0xff]
      %v294 = vld [vmem:[%s3 + $0xa0] sm:$0xff]
      %v295 = vld [vmem:[%s3 + $0xa8] sm:$0xff]
      %v296 = vld [vmem:[%s3 + $0xb0] sm:$0xff]
      %v297 = vld [vmem:[%s3 + $0xb8] sm:$0xff]
      %v298 = vld [vmem:[%s3 + $0xc0] sm:$0xff]
      %v299 = vld [vmem:[%s3 + $0xc8] sm:$0xff]
      %v300 = vld [vmem:[%s3 + $0xd0] sm:$0xff]
      %v301 = vld [vmem:[%s3 + $0xd8] sm:$0xff]
      %v302 = vld [vmem:[%s3 + $0xe0] sm:$0xff]
      %v303 = vld [vmem:[%s3 + $0xe8] sm:$0xff]
      %v304 = vld [vmem:[%s3 + $0xf0] sm:$0xff]
      %v305 = vld [vmem:[%s3 + $0xf8] sm:$0xff]
      %v306 = vld [vmem:[%s4] sm:$0xff]
      %v307 = vld [vmem:[%s4 + $0x8] sm:$0xff]
      %v310 = vlaneseq
      %v311 = vshrl.u32 %v310, 7
      %v312 = vsub.s32 0, %v311
      %v313 = vrot.slane %v306, %v312
      %v314 = vlaneseq
      %v315 = vshrl.u32 %v314, 7
      %v316 = vsub.s32 1, %v315
      %v317 = vrot.slane %v306, %v316
      %v318 = vlaneseq
      %v319 = vshrl.u32 %v318, 7
      %v320 = vsub.s32 2, %v319
      %v321 = vrot.slane %v306, %v320
      %v322 = vlaneseq
      %v323 = vshrl.u32 %v322, 7
      %v324 = vsub.s32 3, %v323
      %v325 = vrot.slane %v306, %v324
      %v326 = vlaneseq
      %v327 = vshrl.u32 %v326, 7
      %v328 = vsub.s32 4, %v327
      %v329 = vrot.slane %v306, %v328
      %v330 = vlaneseq
      %v331 = vshrl.u32 %v330, 7
      %v332 = vsub.s32 5, %v331
      %v333 = vrot.slane %v306, %v332
      %v334 = vlaneseq
      %v335 = vshrl.u32 %v334, 7
      %v336 = vsub.s32 6, %v335
      %v337 = vrot.slane %v306, %v336
      %v338 = vlaneseq
      %v339 = vshrl.u32 %v338, 7
      %v340 = vsub.s32 7, %v339
      %v341 = vrot.slane %v306, %v340
      %v342 = vlaneseq
      %v343 = vshrl.u32 %v342, 7
      %v344 = vsub.s32 0, %v343
      %v345 = vrot.slane %v307, %v344
      %v346 = vlaneseq
      %v347 = vshrl.u32 %v346, 7
      %v348 = vsub.s32 1, %v347
      %v349 = vrot.slane %v307, %v348
      %v350 = vlaneseq
      %v351 = vshrl.u32 %v350, 7
      %v352 = vsub.s32 2, %v351
      %v353 = vrot.slane %v307, %v352
      %v354 = vlaneseq
      %v355 = vshrl.u32 %v354, 7
      %v356 = vsub.s32 3, %v355
      %v357 = vrot.slane %v307, %v356
      %v358 = vlaneseq
      %v359 = vshrl.u32 %v358, 7
      %v360 = vsub.s32 4, %v359
      %v361 = vrot.slane %v307, %v360
      %v362 = vlaneseq
      %v363 = vshrl.u32 %v362, 7
      %v364 = vsub.s32 5, %v363
      %v365 = vrot.slane %v307, %v364
      %v366 = vlaneseq
      %v367 = vshrl.u32 %v366, 7
      %v368 = vsub.s32 6, %v367
      %v369 = vrot.slane %v307, %v368
      %v370 = vlaneseq
      %v371 = vshrl.u32 %v370, 7
      %v372 = vsub.s32 7, %v371
      %v373 = vrot.slane %v307, %v372
      %v406 = vunpack.c.l.b16 %v258
      %v407 = vunpack.c.l.b16 %v259
      %v408 = vunpack.c.l.b16 %v260
      %v409 = vunpack.c.l.b16 %v261
      %v410 = vunpack.c.l.b16 %v262
      %v411 = vunpack.c.l.b16 %v263
      %v412 = vunpack.c.l.b16 %v264
      %v413 = vunpack.c.l.b16 %v265
      %v414 = vunpack.c.l.b16 %v266
      %v415 = vunpack.c.l.b16 %v267
      %v416 = vunpack.c.l.b16 %v268
      %v417 = vunpack.c.l.b16 %v269
      %v418 = vunpack.c.l.b16 %v270
      %v419 = vunpack.c.l.b16 %v271
      %v420 = vunpack.c.l.b16 %v272
      %v421 = vunpack.c.l.b16 %v273
      %v422 = vpack.c.b16 %v407, %v406
      %v423 = vpack.c.b16 %v409, %v408
      %v424 = vpack.c.b16 %v411, %v410
      %v425 = vpack.c.b16 %v413, %v412
      %v426 = vpack.c.b16 %v415, %v414
      %v427 = vpack.c.b16 %v417, %v416
      %v428 = vpack.c.b16 %v419, %v418
      %v429 = vpack.c.b16 %v421, %v420
      %v462 = vunpack.c.l.b16 %v274
      %v463 = vunpack.c.h.b16 %v274
      %v464 = vunpack.c.l.b16 %v275
      %v465 = vunpack.c.h.b16 %v275
      %v466 = vunpack.c.l.b16 %v276
      %v467 = vunpack.c.h.b16 %v276
      %v468 = vunpack.c.l.b16 %v277
      %v469 = vunpack.c.h.b16 %v277
      %v470 = vunpack.c.l.b16 %v278
      %v471 = vunpack.c.h.b16 %v278
      %v472 = vunpack.c.l.b16 %v279
      %v473 = vunpack.c.h.b16 %v279
      %v474 = vunpack.c.l.b16 %v280
      %v475 = vunpack.c.h.b16 %v280
      %v476 = vunpack.c.l.b16 %v281
      %v477 = vunpack.c.h.b16 %v281
      %v478 = vunpack.c.l.b16 %v282
      %v479 = vunpack.c.h.b16 %v282
      %v480 = vunpack.c.l.b16 %v283
      %v481 = vunpack.c.h.b16 %v283
      %v482 = vunpack.c.l.b16 %v284
      %v483 = vunpack.c.h.b16 %v284
      %v484 = vunpack.c.l.b16 %v285
      %v485 = vunpack.c.h.b16 %v285
      %v486 = vunpack.c.l.b16 %v286
      %v487 = vunpack.c.h.b16 %v286
      %v488 = vunpack.c.l.b16 %v287
      %v489 = vunpack.c.h.b16 %v287
      %v490 = vunpack.c.l.b16 %v288
      %v491 = vunpack.c.h.b16 %v288
      %v492 = vunpack.c.l.b16 %v289
      %v493 = vunpack.c.h.b16 %v289
      %v494 = vunpack.c.l.b16 %v290
      %v495 = vunpack.c.h.b16 %v290
      %v496 = vunpack.c.l.b16 %v291
      %v497 = vunpack.c.h.b16 %v291
      %v498 = vunpack.c.l.b16 %v292
      %v499 = vunpack.c.h.b16 %v292
      %v500 = vunpack.c.l.b16 %v293
      %v501 = vunpack.c.h.b16 %v293
      %v502 = vunpack.c.l.b16 %v294
      %v503 = vunpack.c.h.b16 %v294
      %v504 = vunpack.c.l.b16 %v295
      %v505 = vunpack.c.h.b16 %v295
      %v506 = vunpack.c.l.b16 %v296
      %v507 = vunpack.c.h.b16 %v296
      %v508 = vunpack.c.l.b16 %v297
      %v509 = vunpack.c.h.b16 %v297
      %v510 = vunpack.c.l.b16 %v298
      %v511 = vunpack.c.h.b16 %v298
      %v512 = vunpack.c.l.b16 %v299
      %v513 = vunpack.c.h.b16 %v299
      %v514 = vunpack.c.l.b16 %v300
      %v515 = vunpack.c.h.b16 %v300
      %v516 = vunpack.c.l.b16 %v301
      %v517 = vunpack.c.h.b16 %v301
      %v518 = vunpack.c.l.b16 %v302
      %v519 = vunpack.c.h.b16 %v302
      %v520 = vunpack.c.l.b16 %v303
      %v521 = vunpack.c.h.b16 %v303
      %v522 = vunpack.c.l.b16 %v304
      %v523 = vunpack.c.h.b16 %v304
      %v524 = vunpack.c.l.b16 %v305
      %v525 = vunpack.c.h.b16 %v305
      %v526 = vpack.c.b16 %v478, %v462
      %v527 = vpack.c.b16 %v479, %v463
      %v528 = vpack.c.b16 %v480, %v464
      %v529 = vpack.c.b16 %v481, %v465
      %v530 = vpack.c.b16 %v482, %v466
      %v531 = vpack.c.b16 %v483, %v467
      %v532 = vpack.c.b16 %v484, %v468
      %v533 = vpack.c.b16 %v485, %v469
      %v534 = vpack.c.b16 %v486, %v470
      %v535 = vpack.c.b16 %v487, %v471
      %v536 = vpack.c.b16 %v488, %v472
      %v537 = vpack.c.b16 %v489, %v473
      %v538 = vpack.c.b16 %v490, %v474
      %v539 = vpack.c.b16 %v491, %v475
      %v540 = vpack.c.b16 %v492, %v476
      %v541 = vpack.c.b16 %v493, %v477
      %v542 = vpack.c.b16 %v510, %v494
      %v543 = vpack.c.b16 %v511, %v495
      %v544 = vpack.c.b16 %v512, %v496
      %v545 = vpack.c.b16 %v513, %v497
      %v546 = vpack.c.b16 %v514, %v498
      %v547 = vpack.c.b16 %v515, %v499
      %v548 = vpack.c.b16 %v516, %v500
      %v549 = vpack.c.b16 %v517, %v501
      %v550 = vpack.c.b16 %v518, %v502
      %v551 = vpack.c.b16 %v519, %v503
      %v552 = vpack.c.b16 %v520, %v504
      %v553 = vpack.c.b16 %v521, %v505
      %v554 = vpack.c.b16 %v522, %v506
      %v555 = vpack.c.b16 %v523, %v507
      %v556 = vpack.c.b16 %v524, %v508
      %v557 = vpack.c.b16 %v525, %v509
      %vm590 = vcmask 261120
      %v592 = vsel %vm590, %v422, 0
      %v595 = vsel %vm590, %v423, 0
      %v598 = vsel %vm590, %v424, 0
      %v601 = vsel %vm590, %v425, 0
      %v604 = vsel %vm590, %v426, 0
      %v607 = vsel %vm590, %v427, 0
      %v610 = vsel %vm590, %v428, 0
      %v613 = vsel %vm590, %v429, 0
      %615 = vmatprep.subr.bf16.mxu0 %v527
      %616 = vmatpush1.bf16.msra.mxu0 %v526
      %617 = vmatprep.subr.bf16.mxu0 %v543
      %618 = vmatpush1.bf16.msra.mxu0 %v542
      %619 = vmatprep.subr.bf16.mxu0 0
      %620 = vmatpush1.bf16.msra.mxu0 0
      %621 = vmatprep.subr.bf16.mxu0 0
      %622 = vmatpush1.bf16.msra.mxu0 0
      %623 = vmatprep.subr.bf16.mxu0 0
      %624 = vmatpush1.bf16.msra.mxu0 0
      %625 = vmatprep.subr.bf16.mxu0 0
      %626 = vmatpush1.bf16.msra.mxu0 0
      %627 = vmatprep.subr.bf16.mxu0 0
      %628 = vmatpush1.bf16.msra.mxu0 0
      %629 = vmatprep.subr.bf16.mxu0 0
      %630 = vmatpush1.bf16.msra.mxu0 0
      %631 = vmatprep.subr.bf16.mxu0 0
      %632 = vmatpush1.bf16.msra.mxu0 0
      %633 = vmatprep.subr.bf16.mxu0 0
      %634 = vmatpush1.bf16.msra.mxu0 0
      %635 = vmatprep.subr.bf16.mxu0 0
      %636 = vmatpush1.bf16.msra.mxu0 0
      %637 = vmatprep.subr.bf16.mxu0 0
      %638 = vmatpush1.bf16.msra.mxu0 0
      %639 = vmatprep.subr.bf16.mxu0 0
      %640 = vmatpush1.bf16.msra.mxu0 0
      %641 = vmatprep.subr.bf16.mxu0 0
      %642 = vmatpush1.bf16.msra.mxu0 0
      %643 = vmatprep.subr.bf16.mxu0 0
      %644 = vmatpush1.bf16.msra.mxu0 0
      %645 = vmatprep.subr.bf16.mxu0 0
      %646 = vmatpush1.bf16.msra.mxu0 0
      %647 = vmatprep.mubr.bf16.mxu0 0
      %648 = vmatmul.mubr.bf16.gmra.mrb[0].mxu0 %v592
      %v649 = vpop.f32.mrb[0].mxu0
      %v650 = vadd.f32 %v313, %v649
      %v651 = vpop.f32.mrb[0].mxu0
      %v652 = vadd.f32 %v317, %v651
      %v653 = vpop.f32.mrb[0].mxu0
      %v654 = vadd.f32 %v313, %v653
      %v655 = vpop.f32.mrb[0].mxu0
      %v656 = vadd.f32 %v317, %v655
      %657 = vmatprep.mubr.bf16.mxu0 0
      %658 = vmatmul.mubr.bf16.gmra.mrb[0].mxu0 %v595
      %v659 = vpop.f32.mrb[0].mxu0
      %v660 = vadd.f32 %v313, %v659
      %v661 = vpop.f32.mrb[0].mxu0
      %v662 = vadd.f32 %v317, %v661
      %v663 = vpop.f32.mrb[0].mxu0
      %v664 = vadd.f32 %v313, %v663
      %v665 = vpop.f32.mrb[0].mxu0
      %v666 = vadd.f32 %v317, %v665
      %667 = vmatprep.mubr.bf16.mxu0 0
      %668 = vmatmul.mubr.bf16.gmra.mrb[0].mxu0 %v598
      %v669 = vpop.f32.mrb[0].mxu0
      %v670 = vadd.f32 %v313, %v669
      %v671 = vpop.f32.mrb[0].mxu0
      %v672 = vadd.f32 %v317, %v671
      %v673 = vpop.f32.mrb[0].mxu0
      %v674 = vadd.f32 %v313, %v673
      %v675 = vpop.f32.mrb[0].mxu0
      %v676 = vadd.f32 %v317, %v675
      %677 = vmatprep.mubr.bf16.mxu0 0
      %678 = vmatmul.mubr.bf16.gmra.mrb[0].mxu0 %v601
      %v679 = vpop.f32.mrb[0].mxu0
      %v680 = vadd.f32 %v313, %v679
      %v681 = vpop.f32.mrb[0].mxu0
      %v682 = vadd.f32 %v317, %v681
      %v683 = vpop.f32.mrb[0].mxu0
      %v684 = vadd.f32 %v313, %v683
      %v685 = vpop.f32.mrb[0].mxu0
      %v686 = vadd.f32 %v317, %v685
      %687 = vmatprep.mubr.bf16.mxu0 0
      %688 = vmatmul.mubr.bf16.gmra.mrb[0].mxu0 %v604
      %v689 = vpop.f32.mrb[0].mxu0
      %v690 = vadd.f32 %v313, %v689
      %v691 = vpop.f32.mrb[0].mxu0
      %v692 = vadd.f32 %v317, %v691
      %v693 = vpop.f32.mrb[0].mxu0
      %v694 = vadd.f32 %v313, %v693
      %v695 = vpop.f32.mrb[0].mxu0
      %v696 = vadd.f32 %v317, %v695
      %697 = vmatprep.mubr.bf16.mxu0 0
      %698 = vmatmul.mubr.bf16.gmra.mrb[0].mxu0 %v607
      %v699 = vpop.f32.mrb[0].mxu0
      %v700 = vadd.f32 %v313, %v699
      %v701 = vpop.f32.mrb[0].mxu0
      %v702 = vadd.f32 %v317, %v701
      %v703 = vpop.f32.mrb[0].mxu0
      %v704 = vadd.f32 %v313, %v703
      %v705 = vpop.f32.mrb[0].mxu0
      %v706 = vadd.f32 %v317, %v705
      %707 = vmatprep.mubr.bf16.mxu0 0
      %708 = vmatmul.mubr.bf16.gmra.mrb[0].mxu0 %v610
      %v709 = vpop.f32.mrb[0].mxu0
      %v710 = vadd.f32 %v313, %v709
      %v711 = vpop.f32.mrb[0].mxu0
      %v712 = vadd.f32 %v317, %v711
      %v713 = vpop.f32.mrb[0].mxu0
      %v714 = vadd.f32 %v313, %v713
      %v715 = vpop.f32.mrb[0].mxu0
      %v716 = vadd.f32 %v317, %v715
      %717 = vmatprep.mubr.bf16.mxu0 0
      %718 = vmatmul.mubr.bf16.gmra.mrb[0].mxu0 %v613
      %v719 = vpop.f32.mrb[0].mxu0
      %v720 = vadd.f32 %v313, %v719
      %v721 = vpop.f32.mrb[0].mxu0
      %v722 = vadd.f32 %v317, %v721
      %v723 = vpop.f32.mrb[0].mxu0
      %v724 = vadd.f32 %v313, %v723
      %v725 = vpop.f32.mrb[0].mxu0
      %v726 = vadd.f32 %v317, %v725
      %727 = vdwg.mxu0
      %728 = vmatprep.subr.bf16.mxu0 %v529
      %729 = vmatpush1.bf16.msra.mxu0 %v528
      %730 = vmatprep.subr.bf16.mxu0 %v545
      %731 = vmatpush1.bf16.msra.mxu0 %v544
      %732 = vmatprep.subr.bf16.mxu0 0
      %733 = vmatpush1.bf16.msra.mxu0 0
      %734 = vmatprep.subr.bf16.mxu0 0
      %735 = vmatpush1.bf16.msra.mxu0 0
      %736 = vmatprep.subr.bf16.mxu0 0
      %737 = vmatpush1.bf16.msra.mxu0 0
      %738 = vmatprep.subr.bf16.mxu0 0
      %739 = vmatpush1.bf16.msra.mxu0 0
      %740 = vmatprep.subr.bf16.mxu0 0
      %741 = vmatpush1.bf16.msra.mxu0 0
      %742 = vmatprep.subr.bf16.mxu0 0
      %743 = vmatpush1.bf16.msra.mxu0 0
      %744 = vmatprep.subr.bf16.mxu0 0
      %745 = vmatpush1.bf16.msra.mxu0 0
      %746 = vmatprep.subr.bf16.mxu0 0
      %747 = vmatpush1.bf16.msra.mxu0 0
      %748 = vmatprep.subr.bf16.mxu0 0
      %749 = vmatpush1.bf16.msra.mxu0 0
      %750 = vmatprep.subr.bf16.mxu0 0
      %751 = vmatpush1.bf16.msra.mxu0 0
      %752 = vmatprep.subr.bf16.mxu0 0
      %753 = vmatpush1.bf16.msra.mxu0 0
      %754 = vmatprep.subr.bf16.mxu0 0
      %755 = vmatpush1.bf16.msra.mxu0 0
      %756 = vmatprep.subr.bf16.mxu0 0
      %757 = vmatpush1.bf16.msra.mxu0 0
      %758 = vmatprep.subr.bf16.mxu0 0
      %759 = vmatpush1.bf16.msra.mxu0 0
      %760 = vmatprep.mubr.bf16.mxu0 0
      %761 = vmatmul.mubr.bf16.gmra.mrb[0].mxu0 %v592
      %v762 = vpop.f32.mrb[0].mxu0
      %v763 = vadd.f32 %v321, %v762
      %v764 = vpop.f32.mrb[0].mxu0
      %v765 = vadd.f32 %v325, %v764
      %v766 = vpop.f32.mrb[0].mxu0
      %v767 = vadd.f32 %v321, %v766
      %v768 = vpop.f32.mrb[0].mxu0
      %v769 = vadd.f32 %v325, %v768
      %770 = vmatprep.mubr.bf16.mxu0 0
      %771 = vmatmul.mubr.bf16.gmra.mrb[0].mxu0 %v595
      %v772 = vpop.f32.mrb[0].mxu0
      %v773 = vadd.f32 %v321, %v772
      %v774 = vpop.f32.mrb[0].mxu0
      %v775 = vadd.f32 %v325, %v774
      %v776 = vpop.f32.mrb[0].mxu0
      %v777 = vadd.f32 %v321, %v776
      %v778 = vpop.f32.mrb[0].mxu0
      %v779 = vadd.f32 %v325, %v778
      %780 = vmatprep.mubr.bf16.mxu0 0
      %781 = vmatmul.mubr.bf16.gmra.mrb[0].mxu0 %v598
      %v782 = vpop.f32.mrb[0].mxu0
      %v783 = vadd.f32 %v321, %v782
      %v784 = vpop.f32.mrb[0].mxu0
      %v785 = vadd.f32 %v325, %v784
      %v786 = vpop.f32.mrb[0].mxu0
      %v787 = vadd.f32 %v321, %v786
      %v788 = vpop.f32.mrb[0].mxu0
      %v789 = vadd.f32 %v325, %v788
      %790 = vmatprep.mubr.bf16.mxu0 0
      %791 = vmatmul.mubr.bf16.gmra.mrb[0].mxu0 %v601
      %v792 = vpop.f32.mrb[0].mxu0
      %v793 = vadd.f32 %v321, %v792
      %v794 = vpop.f32.mrb[0].mxu0
      %v795 = vadd.f32 %v325, %v794
      %v796 = vpop.f32.mrb[0].mxu0
      %v797 = vadd.f32 %v321, %v796
      %v798 = vpop.f32.mrb[0].mxu0
      %v799 = vadd.f32 %v325, %v798
      %800 = vmatprep.mubr.bf16.mxu0 0
      %801 = vmatmul.mubr.bf16.gmra.mrb[0].mxu0 %v604
      %v802 = vpop.f32.mrb[0].mxu0
      %v803 = vadd.f32 %v321, %v802
      %v804 = vpop.f32.mrb[0].mxu0
      %v805 = vadd.f32 %v325, %v804
      %v806 = vpop.f32.mrb[0].mxu0
      %v807 = vadd.f32 %v321, %v806
      %v808 = vpop.f32.mrb[0].mxu0
      %v809 = vadd.f32 %v325, %v808
      %810 = vmatprep.mubr.bf16.mxu0 0
      %811 = vmatmul.mubr.bf16.gmra.mrb[0].mxu0 %v607
      %v812 = vpop.f32.mrb[0].mxu0
      %v813 = vadd.f32 %v321, %v812
      %v814 = vpop.f32.mrb[0].mxu0
      %v815 = vadd.f32 %v325, %v814
      %v816 = vpop.f32.mrb[0].mxu0
      %v817 = vadd.f32 %v321, %v816
      %v818 = vpop.f32.mrb[0].mxu0
      %v819 = vadd.f32 %v325, %v818
      %820 = vmatprep.mubr.bf16.mxu0 0
      %821 = vmatmul.mubr.bf16.gmra.mrb[0].mxu0 %v610
      %v822 = vpop.f32.mrb[0].mxu0
      %v823 = vadd.f32 %v321, %v822
      %v824 = vpop.f32.mrb[0].mxu0
      %v825 = vadd.f32 %v325, %v824
      %v826 = vpop.f32.mrb[0].mxu0
      %v827 = vadd.f32 %v321, %v826
      %v828 = vpop.f32.mrb[0].mxu0
      %v829 = vadd.f32 %v325, %v828
      %830 = vmatprep.mubr.bf16.mxu0 0
      %831 = vmatmul.mubr.bf16.gmra.mrb[0].mxu0 %v613
      %v832 = vpop.f32.mrb[0].mxu0
      %v833 = vadd.f32 %v321, %v832
      %v834 = vpop.f32.mrb[0].mxu0
      %v835 = vadd.f32 %v325, %v834
      %v836 = vpop.f32.mrb[0].mxu0
      %v837 = vadd.f32 %v321, %v836
      %v838 = vpop.f32.mrb[0].mxu0
      %v839 = vadd.f32 %v325, %v838
      %840 = vdwg.mxu0
      %841 = vmatprep.subr.bf16.mxu0 %v531
      %842 = vmatpush1.bf16.msra.mxu0 %v530
      %843 = vmatprep.subr.bf16.mxu0 %v547
      %844 = vmatpush1.bf16.msra.mxu0 %v546
      %845 = vmatprep.subr.bf16.mxu0 0
      %846 = vmatpush1.bf16.msra.mxu0 0
      %847 = vmatprep.subr.bf16.mxu0 0
      %848 = vmatpush1.bf16.msra.mxu0 0
      %849 = vmatprep.subr.bf16.mxu0 0
      %850 = vmatpush1.bf16.msra.mxu0 0
      %851 = vmatprep.subr.bf16.mxu0 0
      %852 = vmatpush1.bf16.msra.mxu0 0
      %853 = vmatprep.subr.bf16.mxu0 0
      %854 = vmatpush1.bf16.msra.mxu0 0
      %855 = vmatprep.subr.bf16.mxu0 0
      %856 = vmatpush1.bf16.msra.mxu0 0
      %857 = vmatprep.subr.bf16.mxu0 0
      %858 = vmatpush1.bf16.msra.mxu0 0
      %859 = vmatprep.subr.bf16.mxu0 0
      %860 = vmatpush1.bf16.msra.mxu0 0
      %861 = vmatprep.subr.bf16.mxu0 0
      %862 = vmatpush1.bf16.msra.mxu0 0
      %863 = vmatprep.subr.bf16.mxu0 0
      %864 = vmatpush1.bf16.msra.mxu0 0
      %865 = vmatprep.subr.bf16.mxu0 0
      %866 = vmatpush1.bf16.msra.mxu0 0
      %867 = vmatprep.subr.bf16.mxu0 0
      %868 = vmatpush1.bf16.msra.mxu0 0
      %869 = vmatprep.subr.bf16.mxu0 0
      %870 = vmatpush1.bf16.msra.mxu0 0
      %871 = vmatprep.subr.bf16.mxu0 0
      %872 = vmatpush1.bf16.msra.mxu0 0
      %873 = vmatprep.mubr.bf16.mxu0 0
      %874 = vmatmul.mubr.bf16.gmra.mrb[0].mxu0 %v592
      %v875 = vpop.f32.mrb[0].mxu0
      %v876 = vadd.f32 %v329, %v875
      %v877 = vpop.f32.mrb[0].mxu0
      %v878 = vadd.f32 %v333, %v877
      %v879 = vpop.f32.mrb[0].mxu0
      %v880 = vadd.f32 %v329, %v879
      %v881 = vpop.f32.mrb[0].mxu0
      %v882 = vadd.f32 %v333, %v881
      %883 = vmatprep.mubr.bf16.mxu0 0
      %884 = vmatmul.mubr.bf16.gmra.mrb[0].mxu0 %v595
      %v885 = vpop.f32.mrb[0].mxu0
      %v886 = vadd.f32 %v329, %v885
      %v887 = vpop.f32.mrb[0].mxu0
      %v888 = vadd.f32 %v333, %v887
      %v889 = vpop.f32.mrb[0].mxu0
      %v890 = vadd.f32 %v329, %v889
      %v891 = vpop.f32.mrb[0].mxu0
      %v892 = vadd.f32 %v333, %v891
      %893 = vmatprep.mubr.bf16.mxu0 0
      %894 = vmatmul.mubr.bf16.gmra.mrb[0].mxu0 %v598
      %v895 = vpop.f32.mrb[0].mxu0
      %v896 = vadd.f32 %v329, %v895
      %v897 = vpop.f32.mrb[0].mxu0
      %v898 = vadd.f32 %v333, %v897
      %v899 = vpop.f32.mrb[0].mxu0
      %v900 = vadd.f32 %v329, %v899
      %v901 = vpop.f32.mrb[0].mxu0
      %v902 = vadd.f32 %v333, %v901
      %903 = vmatprep.mubr.bf16.mxu0 0
      %904 = vmatmul.mubr.bf16.gmra.mrb[0].mxu0 %v601
      %v905 = vpop.f32.mrb[0].mxu0
      %v906 = vadd.f32 %v329, %v905
      %v907 = vpop.f32.mrb[0].mxu0
      %v908 = vadd.f32 %v333, %v907
      %v909 = vpop.f32.mrb[0].mxu0
      %v910 = vadd.f32 %v329, %v909
      %v911 = vpop.f32.mrb[0].mxu0
      %v912 = vadd.f32 %v333, %v911
      %913 = vmatprep.mubr.bf16.mxu0 0
      %914 = vmatmul.mubr.bf16.gmra.mrb[0].mxu0 %v604
      %v915 = vpop.f32.mrb[0].mxu0
      %v916 = vadd.f32 %v329, %v915
      %v917 = vpop.f32.mrb[0].mxu0
      %v918 = vadd.f32 %v333, %v917
      %v919 = vpop.f32.mrb[0].mxu0
      %v920 = vadd.f32 %v329, %v919
      %v921 = vpop.f32.mrb[0].mxu0
      %v922 = vadd.f32 %v333, %v921
      %923 = vmatprep.mubr.bf16.mxu0 0
      %924 = vmatmul.mubr.bf16.gmra.mrb[0].mxu0 %v607
      %v925 = vpop.f32.mrb[0].mxu0
      %v926 = vadd.f32 %v329, %v925
      %v927 = vpop.f32.mrb[0].mxu0
      %v928 = vadd.f32 %v333, %v927
      %v929 = vpop.f32.mrb[0].mxu0
      %v930 = vadd.f32 %v329, %v929
      %v931 = vpop.f32.mrb[0].mxu0
      %v932 = vadd.f32 %v333, %v931
      %933 = vmatprep.mubr.bf16.mxu0 0
      %934 = vmatmul.mubr.bf16.gmra.mrb[0].mxu0 %v610
      %v935 = vpop.f32.mrb[0].mxu0
      %v936 = vadd.f32 %v329, %v935
      %v937 = vpop.f32.mrb[0].mxu0
      %v938 = vadd.f32 %v333, %v937
      %v939 = vpop.f32.mrb[0].mxu0
      %v940 = vadd.f32 %v329, %v939
      %v941 = vpop.f32.mrb[0].mxu0
      %v942 = vadd.f32 %v333, %v941
      %943 = vmatprep.mubr.bf16.mxu0 0
      %944 = vmatmul.mubr.bf16.gmra.mrb[0].mxu0 %v613
      %v945 = vpop.f32.mrb[0].mxu0
      %v946 = vadd.f32 %v329, %v945
      %v947 = vpop.f32.mrb[0].mxu0
      %v948 = vadd.f32 %v333, %v947
      %v949 = vpop.f32.mrb[0].mxu0
      %v950 = vadd.f32 %v329, %v949
      %v951 = vpop.f32.mrb[0].mxu0
      %v952 = vadd.f32 %v333, %v951
      %953 = vdwg.mxu0
      %954 = vmatprep.subr.bf16.mxu0 %v533
      %955 = vmatpush1.bf16.msra.mxu0 %v532
      %956 = vmatprep.subr.bf16.mxu0 %v549
      %957 = vmatpush1.bf16.msra.mxu0 %v548
      %958 = vmatprep.subr.bf16.mxu0 0
      %959 = vmatpush1.bf16.msra.mxu0 0
      %960 = vmatprep.subr.bf16.mxu0 0
      %961 = vmatpush1.bf16.msra.mxu0 0
      %962 = vmatprep.subr.bf16.mxu0 0
      %963 = vmatpush1.bf16.msra.mxu0 0
      %964 = vmatprep.subr.bf16.mxu0 0
      %965 = vmatpush1.bf16.msra.mxu0 0
      %966 = vmatprep.subr.bf16.mxu0 0
      %967 = vmatpush1.bf16.msra.mxu0 0
      %968 = vmatprep.subr.bf16.mxu0 0
      %969 = vmatpush1.bf16.msra.mxu0 0
      %970 = vmatprep.subr.bf16.mxu0 0
      %971 = vmatpush1.bf16.msra.mxu0 0
      %972 = vmatprep.subr.bf16.mxu0 0
      %973 = vmatpush1.bf16.msra.mxu0 0
      %974 = vmatprep.subr.bf16.mxu0 0
      %975 = vmatpush1.bf16.msra.mxu0 0
      %976 = vmatprep.subr.bf16.mxu0 0
      %977 = vmatpush1.bf16.msra.mxu0 0
      %978 = vmatprep.subr.bf16.mxu0 0
      %979 = vmatpush1.bf16.msra.mxu0 0
      %980 = vmatprep.subr.bf16.mxu0 0
      %981 = vmatpush1.bf16.msra.mxu0 0
      %982 = vmatprep.subr.bf16.mxu0 0
      %983 = vmatpush1.bf16.msra.mxu0 0
      %984 = vmatprep.subr.bf16.mxu0 0
      %985 = vmatpush1.bf16.msra.mxu0 0
      %986 = vmatprep.mubr.bf16.mxu0 0
      %987 = vmatmul.mubr.bf16.gmra.mrb[0].mxu0 %v592
      %v988 = vpop.f32.mrb[0].mxu0
      %v989 = vadd.f32 %v337, %v988
      %v990 = vpop.f32.mrb[0].mxu0
      %v991 = vadd.f32 %v341, %v990
      %v992 = vpop.f32.mrb[0].mxu0
      %v993 = vadd.f32 %v337, %v992
      %v994 = vpop.f32.mrb[0].mxu0
      %v995 = vadd.f32 %v341, %v994
      %996 = vmatprep.mubr.bf16.mxu0 0
      %997 = vmatmul.mubr.bf16.gmra.mrb[0].mxu0 %v595
      %v998 = vpop.f32.mrb[0].mxu0
      %v999 = vadd.f32 %v337, %v998
      %v1000 = vpop.f32.mrb[0].mxu0
      %v1001 = vadd.f32 %v341, %v1000
      %v1002 = vpop.f32.mrb[0].mxu0
      %v1003 = vadd.f32 %v337, %v1002
      %v1004 = vpop.f32.mrb[0].mxu0
      %v1005 = vadd.f32 %v341, %v1004
      %1006 = vmatprep.mubr.bf16.mxu0 0
      %1007 = vmatmul.mubr.bf16.gmra.mrb[0].mxu0 %v598
      %v1008 = vpop.f32.mrb[0].mxu0
      %v1009 = vadd.f32 %v337, %v1008
      %v1010 = vpop.f32.mrb[0].mxu0
      %v1011 = vadd.f32 %v341, %v1010
      %v1012 = vpop.f32.mrb[0].mxu0
      %v1013 = vadd.f32 %v337, %v1012
      %v1014 = vpop.f32.mrb[0].mxu0
      %v1015 = vadd.f32 %v341, %v1014
      %1016 = vmatprep.mubr.bf16.mxu0 0
      %1017 = vmatmul.mubr.bf16.gmra.mrb[0].mxu0 %v601
      %v1018 = vpop.f32.mrb[0].mxu0
      %v1019 = vadd.f32 %v337, %v1018
      %v1020 = vpop.f32.mrb[0].mxu0
      %v1021 = vadd.f32 %v341, %v1020
      %v1022 = vpop.f32.mrb[0].mxu0
      %v1023 = vadd.f32 %v337, %v1022
      %v1024 = vpop.f32.mrb[0].mxu0
      %v1025 = vadd.f32 %v341, %v1024
      %1026 = vmatprep.mubr.bf16.mxu0 0
      %1027 = vmatmul.mubr.bf16.gmra.mrb[0].mxu0 %v604
      %v1028 = vpop.f32.mrb[0].mxu0
      %v1029 = vadd.f32 %v337, %v1028
      %v1030 = vpop.f32.mrb[0].mxu0
      %v1031 = vadd.f32 %v341, %v1030
      %v1032 = vpop.f32.mrb[0].mxu0
      %v1033 = vadd.f32 %v337, %v1032
      %v1034 = vpop.f32.mrb[0].mxu0
      %v1035 = vadd.f32 %v341, %v1034
      %1036 = vmatprep.mubr.bf16.mxu0 0
      %1037 = vmatmul.mubr.bf16.gmra.mrb[0].mxu0 %v607
      %v1038 = vpop.f32.mrb[0].mxu0
      %v1039 = vadd.f32 %v337, %v1038
      %v1040 = vpop.f32.mrb[0].mxu0
      %v1041 = vadd.f32 %v341, %v1040
      %v1042 = vpop.f32.mrb[0].mxu0
      %v1043 = vadd.f32 %v337, %v1042
      %v1044 = vpop.f32.mrb[0].mxu0
      %v1045 = vadd.f32 %v341, %v1044
      %1046 = vmatprep.mubr.bf16.mxu0 0
      %1047 = vmatmul.mubr.bf16.gmra.mrb[0].mxu0 %v610
      %v1048 = vpop.f32.mrb[0].mxu0
      %v1049 = vadd.f32 %v337, %v1048
      %v1050 = vpop.f32.mrb[0].mxu0
      %v1051 = vadd.f32 %v341, %v1050
      %v1052 = vpop.f32.mrb[0].mxu0
      %v1053 = vadd.f32 %v337, %v1052
      %v1054 = vpop.f32.mrb[0].mxu0
      %v1055 = vadd.f32 %v341, %v1054
      %1056 = vmatprep.mubr.bf16.mxu0 0
      %1057 = vmatmul.mubr.bf16.gmra.mrb[0].mxu0 %v613
      %v1058 = vpop.f32.mrb[0].mxu0
      %v1059 = vadd.f32 %v337, %v1058
      %v1060 = vpop.f32.mrb[0].mxu0
      %v1061 = vadd.f32 %v341, %v1060
      %v1062 = vpop.f32.mrb[0].mxu0
      %v1063 = vadd.f32 %v337, %v1062
      %v1064 = vpop.f32.mrb[0].mxu0
      %v1065 = vadd.f32 %v341, %v1064
      %1066 = vdwg.mxu0
      %1067 = vmatprep.subr.bf16.mxu0 %v535
      %1068 = vmatpush1.bf16.msra.mxu0 %v534
      %1069 = vmatprep.subr.bf16.mxu0 %v551
      %1070 = vmatpush1.bf16.msra.mxu0 %v550
      %1071 = vmatprep.subr.bf16.mxu0 0
      %1072 = vmatpush1.bf16.msra.mxu0 0
      %1073 = vmatprep.subr.bf16.mxu0 0
      %1074 = vmatpush1.bf16.msra.mxu0 0
      %1075 = vmatprep.subr.bf16.mxu0 0
      %1076 = vmatpush1.bf16.msra.mxu0 0
      %1077 = vmatprep.subr.bf16.mxu0 0
      %1078 = vmatpush1.bf16.msra.mxu0 0
      %1079 = vmatprep.subr.bf16.mxu0 0
      %1080 = vmatpush1.bf16.msra.mxu0 0
      %1081 = vmatprep.subr.bf16.mxu0 0
      %1082 = vmatpush1.bf16.msra.mxu0 0
      %1083 = vmatprep.subr.bf16.mxu0 0
      %1084 = vmatpush1.bf16.msra.mxu0 0
      %1085 = vmatprep.subr.bf16.mxu0 0
      %1086 = vmatpush1.bf16.msra.mxu0 0
      %1087 = vmatprep.subr.bf16.mxu0 0
      %1088 = vmatpush1.bf16.msra.mxu0 0
      %1089 = vmatprep.subr.bf16.mxu0 0
      %1090 = vmatpush1.bf16.msra.mxu0 0
      %1091 = vmatprep.subr.bf16.mxu0 0
      %1092 = vmatpush1.bf16.msra.mxu0 0
      %1093 = vmatprep.subr.bf16.mxu0 0
      %1094 = vmatpush1.bf16.msra.mxu0 0
      %1095 = vmatprep.subr.bf16.mxu0 0
      %1096 = vmatpush1.bf16.msra.mxu0 0
      %1097 = vmatprep.subr.bf16.mxu0 0
      %1098 = vmatpush1.bf16.msra.mxu0 0
      %1099 = vmatprep.mubr.bf16.mxu0 0
      %1100 = vmatmul.mubr.bf16.gmra.mrb[0].mxu0 %v592
      %v1101 = vpop.f32.mrb[0].mxu0
      %v1102 = vadd.f32 %v345, %v1101
      %v1103 = vpop.f32.mrb[0].mxu0
      %v1104 = vadd.f32 %v349, %v1103
      %v1105 = vpop.f32.mrb[0].mxu0
      %v1106 = vadd.f32 %v345, %v1105
      %v1107 = vpop.f32.mrb[0].mxu0
      %v1108 = vadd.f32 %v349, %v1107
      %1109 = vmatprep.mubr.bf16.mxu0 0
      %1110 = vmatmul.mubr.bf16.gmra.mrb[0].mxu0 %v595
      %v1111 = vpop.f32.mrb[0].mxu0
      %v1112 = vadd.f32 %v345, %v1111
      %v1113 = vpop.f32.mrb[0].mxu0
      %v1114 = vadd.f32 %v349, %v1113
      %v1115 = vpop.f32.mrb[0].mxu0
      %v1116 = vadd.f32 %v345, %v1115
      %v1117 = vpop.f32.mrb[0].mxu0
      %v1118 = vadd.f32 %v349, %v1117
      %1119 = vmatprep.mubr.bf16.mxu0 0
      %1120 = vmatmul.mubr.bf16.gmra.mrb[0].mxu0 %v598
      %v1121 = vpop.f32.mrb[0].mxu0
      %v1122 = vadd.f32 %v345, %v1121
      %v1123 = vpop.f32.mrb[0].mxu0
      %v1124 = vadd.f32 %v349, %v1123
      %v1125 = vpop.f32.mrb[0].mxu0
      %v1126 = vadd.f32 %v345, %v1125
      %v1127 = vpop.f32.mrb[0].mxu0
      %v1128 = vadd.f32 %v349, %v1127
      %1129 = vmatprep.mubr.bf16.mxu0 0
      %1130 = vmatmul.mubr.bf16.gmra.mrb[0].mxu0 %v601
      %v1131 = vpop.f32.mrb[0].mxu0
      %v1132 = vadd.f32 %v345, %v1131
      %v1133 = vpop.f32.mrb[0].mxu0
      %v1134 = vadd.f32 %v349, %v1133
      %v1135 = vpop.f32.mrb[0].mxu0
      %v1136 = vadd.f32 %v345, %v1135
      %v1137 = vpop.f32.mrb[0].mxu0
      %v1138 = vadd.f32 %v349, %v1137
      %1139 = vmatprep.mubr.bf16.mxu0 0
      %1140 = vmatmul.mubr.bf16.gmra.mrb[0].mxu0 %v604
      %v1141 = vpop.f32.mrb[0].mxu0
      %v1142 = vadd.f32 %v345, %v1141
      %v1143 = vpop.f32.mrb[0].mxu0
      %v1144 = vadd.f32 %v349, %v1143
      %v1145 = vpop.f32.mrb[0].mxu0
      %v1146 = vadd.f32 %v345, %v1145
      %v1147 = vpop.f32.mrb[0].mxu0
      %v1148 = vadd.f32 %v349, %v1147
      %1149 = vmatprep.mubr.bf16.mxu0 0
      %1150 = vmatmul.mubr.bf16.gmra.mrb[0].mxu0 %v607
      %v1151 = vpop.f32.mrb[0].mxu0
      %v1152 = vadd.f32 %v345, %v1151
      %v1153 = vpop.f32.mrb[0].mxu0
      %v1154 = vadd.f32 %v349, %v1153
      %v1155 = vpop.f32.mrb[0].mxu0
      %v1156 = vadd.f32 %v345, %v1155
      %v1157 = vpop.f32.mrb[0].mxu0
      %v1158 = vadd.f32 %v349, %v1157
      %1159 = vmatprep.mubr.bf16.mxu0 0
      %1160 = vmatmul.mubr.bf16.gmra.mrb[0].mxu0 %v610
      %v1161 = vpop.f32.mrb[0].mxu0
      %v1162 = vadd.f32 %v345, %v1161
      %v1163 = vpop.f32.mrb[0].mxu0
      %v1164 = vadd.f32 %v349, %v1163
      %v1165 = vpop.f32.mrb[0].mxu0
      %v1166 = vadd.f32 %v345, %v1165
      %v1167 = vpop.f32.mrb[0].mxu0
      %v1168 = vadd.f32 %v349, %v1167
      %1169 = vmatprep.mubr.bf16.mxu0 0
      %1170 = vmatmul.mubr.bf16.gmra.mrb[0].mxu0 %v613
      %v1171 = vpop.f32.mrb[0].mxu0
      %v1172 = vadd.f32 %v345, %v1171
      %v1173 = vpop.f32.mrb[0].mxu0
      %v1174 = vadd.f32 %v349, %v1173
      %v1175 = vpop.f32.mrb[0].mxu0
      %v1176 = vadd.f32 %v345, %v1175
      %v1177 = vpop.f32.mrb[0].mxu0
      %v1178 = vadd.f32 %v349, %v1177
      %1179 = vdwg.mxu0
      %1180 = vmatprep.subr.bf16.mxu0 %v537
      %1181 = vmatpush1.bf16.msra.mxu0 %v536
      %1182 = vmatprep.subr.bf16.mxu0 %v553
      %1183 = vmatpush1.bf16.msra.mxu0 %v552
      %1184 = vmatprep.subr.bf16.mxu0 0
      %1185 = vmatpush1.bf16.msra.mxu0 0
      %1186 = vmatprep.subr.bf16.mxu0 0
      %1187 = vmatpush1.bf16.msra.mxu0 0
      %1188 = vmatprep.subr.bf16.mxu0 0
      %1189 = vmatpush1.bf16.msra.mxu0 0
      %1190 = vmatprep.subr.bf16.mxu0 0
      %1191 = vmatpush1.bf16.msra.mxu0 0
      %1192 = vmatprep.subr.bf16.mxu0 0
      %1193 = vmatpush1.bf16.msra.mxu0 0
      %1194 = vmatprep.subr.bf16.mxu0 0
      %1195 = vmatpush1.bf16.msra.mxu0 0
      %1196 = vmatprep.subr.bf16.mxu0 0
      %1197 = vmatpush1.bf16.msra.mxu0 0
      %1198 = vmatprep.subr.bf16.mxu0 0
      %1199 = vmatpush1.bf16.msra.mxu0 0
      %1200 = vmatprep.subr.bf16.mxu0 0
      %1201 = vmatpush1.bf16.msra.mxu0 0
      %1202 = vmatprep.subr.bf16.mxu0 0
      %1203 = vmatpush1.bf16.msra.mxu0 0
      %1204 = vmatprep.subr.bf16.mxu0 0
      %1205 = vmatpush1.bf16.msra.mxu0 0
      %1206 = vmatprep.subr.bf16.mxu0 0
      %1207 = vmatpush1.bf16.msra.mxu0 0
      %1208 = vmatprep.subr.bf16.mxu0 0
      %1209 = vmatpush1.bf16.msra.mxu0 0
      %1210 = vmatprep.subr.bf16.mxu0 0
      %1211 = vmatpush1.bf16.msra.mxu0 0
      %1212 = vmatprep.mubr.bf16.mxu0 0
      %1213 = vmatmul.mubr.bf16.gmra.mrb[0].mxu0 %v592
      %v1214 = vpop.f32.mrb[0].mxu0
      %v1215 = vadd.f32 %v353, %v1214
      %v1216 = vpop.f32.mrb[0].mxu0
      %v1217 = vadd.f32 %v357, %v1216
      %v1218 = vpop.f32.mrb[0].mxu0
      %v1219 = vadd.f32 %v353, %v1218
      %v1220 = vpop.f32.mrb[0].mxu0
      %v1221 = vadd.f32 %v357, %v1220
      %1222 = vmatprep.mubr.bf16.mxu0 0
      %1223 = vmatmul.mubr.bf16.gmra.mrb[0].mxu0 %v595
      %v1224 = vpop.f32.mrb[0].mxu0
      %v1225 = vadd.f32 %v353, %v1224
      %v1226 = vpop.f32.mrb[0].mxu0
      %v1227 = vadd.f32 %v357, %v1226
      %v1228 = vpop.f32.mrb[0].mxu0
      %v1229 = vadd.f32 %v353, %v1228
      %v1230 = vpop.f32.mrb[0].mxu0
      %v1231 = vadd.f32 %v357, %v1230
      %1232 = vmatprep.mubr.bf16.mxu0 0
      %1233 = vmatmul.mubr.bf16.gmra.mrb[0].mxu0 %v598
      %v1234 = vpop.f32.mrb[0].mxu0
      %v1235 = vadd.f32 %v353, %v1234
      %v1236 = vpop.f32.mrb[0].mxu0
      %v1237 = vadd.f32 %v357, %v1236
      %v1238 = vpop.f32.mrb[0].mxu0
      %v1239 = vadd.f32 %v353, %v1238
      %v1240 = vpop.f32.mrb[0].mxu0
      %v1241 = vadd.f32 %v357, %v1240
      %1242 = vmatprep.mubr.bf16.mxu0 0
      %1243 = vmatmul.mubr.bf16.gmra.mrb[0].mxu0 %v601
      %v1244 = vpop.f32.mrb[0].mxu0
      %v1245 = vadd.f32 %v353, %v1244
      %v1246 = vpop.f32.mrb[0].mxu0
      %v1247 = vadd.f32 %v357, %v1246
      %v1248 = vpop.f32.mrb[0].mxu0
      %v1249 = vadd.f32 %v353, %v1248
      %v1250 = vpop.f32.mrb[0].mxu0
      %v1251 = vadd.f32 %v357, %v1250
      %1252 = vmatprep.mubr.bf16.mxu0 0
      %1253 = vmatmul.mubr.bf16.gmra.mrb[0].mxu0 %v604
      %v1254 = vpop.f32.mrb[0].mxu0
      %v1255 = vadd.f32 %v353, %v1254
      %v1256 = vpop.f32.mrb[0].mxu0
      %v1257 = vadd.f32 %v357, %v1256
      %v1258 = vpop.f32.mrb[0].mxu0
      %v1259 = vadd.f32 %v353, %v1258
      %v1260 = vpop.f32.mrb[0].mxu0
      %v1261 = vadd.f32 %v357, %v1260
      %1262 = vmatprep.mubr.bf16.mxu0 0
      %1263 = vmatmul.mubr.bf16.gmra.mrb[0].mxu0 %v607
      %v1264 = vpop.f32.mrb[0].mxu0
      %v1265 = vadd.f32 %v353, %v1264
      %v1266 = vpop.f32.mrb[0].mxu0
      %v1267 = vadd.f32 %v357, %v1266
      %v1268 = vpop.f32.mrb[0].mxu0
      %v1269 = vadd.f32 %v353, %v1268
      %v1270 = vpop.f32.mrb[0].mxu0
      %v1271 = vadd.f32 %v357, %v1270
      %1272 = vmatprep.mubr.bf16.mxu0 0
      %1273 = vmatmul.mubr.bf16.gmra.mrb[0].mxu0 %v610
      %v1274 = vpop.f32.mrb[0].mxu0
      %v1275 = vadd.f32 %v353, %v1274
      %v1276 = vpop.f32.mrb[0].mxu0
      %v1277 = vadd.f32 %v357, %v1276
      %v1278 = vpop.f32.mrb[0].mxu0
      %v1279 = vadd.f32 %v353, %v1278
      %v1280 = vpop.f32.mrb[0].mxu0
      %v1281 = vadd.f32 %v357, %v1280
      %1282 = vmatprep.mubr.bf16.mxu0 0
      %1283 = vmatmul.mubr.bf16.gmra.mrb[0].mxu0 %v613
      %v1284 = vpop.f32.mrb[0].mxu0
      %v1285 = vadd.f32 %v353, %v1284
      %v1286 = vpop.f32.mrb[0].mxu0
      %v1287 = vadd.f32 %v357, %v1286
      %v1288 = vpop.f32.mrb[0].mxu0
      %v1289 = vadd.f32 %v353, %v1288
      %v1290 = vpop.f32.mrb[0].mxu0
      %v1291 = vadd.f32 %v357, %v1290
      %1292 = vdwg.mxu0
      %1293 = vmatprep.subr.bf16.mxu0 %v539
      %1294 = vmatpush1.bf16.msra.mxu0 %v538
      %1295 = vmatprep.subr.bf16.mxu0 %v555
      %1296 = vmatpush1.bf16.msra.mxu0 %v554
      %1297 = vmatprep.subr.bf16.mxu0 0
      %1298 = vmatpush1.bf16.msra.mxu0 0
      %1299 = vmatprep.subr.bf16.mxu0 0
      %1300 = vmatpush1.bf16.msra.mxu0 0
      %1301 = vmatprep.subr.bf16.mxu0 0
      %1302 = vmatpush1.bf16.msra.mxu0 0
      %1303 = vmatprep.subr.bf16.mxu0 0
      %1304 = vmatpush1.bf16.msra.mxu0 0
      %1305 = vmatprep.subr.bf16.mxu0 0
      %1306 = vmatpush1.bf16.msra.mxu0 0
      %1307 = vmatprep.subr.bf16.mxu0 0
      %1308 = vmatpush1.bf16.msra.mxu0 0
      %1309 = vmatprep.subr.bf16.mxu0 0
      %1310 = vmatpush1.bf16.msra.mxu0 0
      %1311 = vmatprep.subr.bf16.mxu0 0
      %1312 = vmatpush1.bf16.msra.mxu0 0
      %1313 = vmatprep.subr.bf16.mxu0 0
      %1314 = vmatpush1.bf16.msra.mxu0 0
      %1315 = vmatprep.subr.bf16.mxu0 0
      %1316 = vmatpush1.bf16.msra.mxu0 0
      %1317 = vmatprep.subr.bf16.mxu0 0
      %1318 = vmatpush1.bf16.msra.mxu0 0
      %1319 = vmatprep.subr.bf16.mxu0 0
      %1320 = vmatpush1.bf16.msra.mxu0 0
      %1321 = vmatprep.subr.bf16.mxu0 0
      %1322 = vmatpush1.bf16.msra.mxu0 0
      %1323 = vmatprep.subr.bf16.mxu0 0
      %1324 = vmatpush1.bf16.msra.mxu0 0
      %1325 = vmatprep.mubr.bf16.mxu0 0
      %1326 = vmatmul.mubr.bf16.gmra.mrb[0].mxu0 %v592
      %v1327 = vpop.f32.mrb[0].mxu0
      %v1328 = vadd.f32 %v361, %v1327
      %v1329 = vpop.f32.mrb[0].mxu0
      %v1330 = vadd.f32 %v365, %v1329
      %v1331 = vpop.f32.mrb[0].mxu0
      %v1332 = vadd.f32 %v361, %v1331
      %v1333 = vpop.f32.mrb[0].mxu0
      %v1334 = vadd.f32 %v365, %v1333
      %1335 = vmatprep.mubr.bf16.mxu0 0
      %1336 = vmatmul.mubr.bf16.gmra.mrb[0].mxu0 %v595
      %v1337 = vpop.f32.mrb[0].mxu0
      %v1338 = vadd.f32 %v361, %v1337
      %v1339 = vpop.f32.mrb[0].mxu0
      %v1340 = vadd.f32 %v365, %v1339
      %v1341 = vpop.f32.mrb[0].mxu0
      %v1342 = vadd.f32 %v361, %v1341
      %v1343 = vpop.f32.mrb[0].mxu0
      %v1344 = vadd.f32 %v365, %v1343
      %1345 = vmatprep.mubr.bf16.mxu0 0
      %1346 = vmatmul.mubr.bf16.gmra.mrb[0].mxu0 %v598
      %v1347 = vpop.f32.mrb[0].mxu0
      %v1348 = vadd.f32 %v361, %v1347
      %v1349 = vpop.f32.mrb[0].mxu0
      %v1350 = vadd.f32 %v365, %v1349
      %v1351 = vpop.f32.mrb[0].mxu0
      %v1352 = vadd.f32 %v361, %v1351
      %v1353 = vpop.f32.mrb[0].mxu0
      %v1354 = vadd.f32 %v365, %v1353
      %1355 = vmatprep.mubr.bf16.mxu0 0
      %1356 = vmatmul.mubr.bf16.gmra.mrb[0].mxu0 %v601
      %v1357 = vpop.f32.mrb[0].mxu0
      %v1358 = vadd.f32 %v361, %v1357
      %v1359 = vpop.f32.mrb[0].mxu0
      %v1360 = vadd.f32 %v365, %v1359
      %v1361 = vpop.f32.mrb[0].mxu0
      %v1362 = vadd.f32 %v361, %v1361
      %v1363 = vpop.f32.mrb[0].mxu0
      %v1364 = vadd.f32 %v365, %v1363
      %1365 = vmatprep.mubr.bf16.mxu0 0
      %1366 = vmatmul.mubr.bf16.gmra.mrb[0].mxu0 %v604
      %v1367 = vpop.f32.mrb[0].mxu0
      %v1368 = vadd.f32 %v361, %v1367
      %v1369 = vpop.f32.mrb[0].mxu0
      %v1370 = vadd.f32 %v365, %v1369
      %v1371 = vpop.f32.mrb[0].mxu0
      %v1372 = vadd.f32 %v361, %v1371
      %v1373 = vpop.f32.mrb[0].mxu0
      %v1374 = vadd.f32 %v365, %v1373
      %1375 = vmatprep.mubr.bf16.mxu0 0
      %1376 = vmatmul.mubr.bf16.gmra.mrb[0].mxu0 %v607
      %v1377 = vpop.f32.mrb[0].mxu0
      %v1378 = vadd.f32 %v361, %v1377
      %v1379 = vpop.f32.mrb[0].mxu0
      %v1380 = vadd.f32 %v365, %v1379
      %v1381 = vpop.f32.mrb[0].mxu0
      %v1382 = vadd.f32 %v361, %v1381
      %v1383 = vpop.f32.mrb[0].mxu0
      %v1384 = vadd.f32 %v365, %v1383
      %1385 = vmatprep.mubr.bf16.mxu0 0
      %1386 = vmatmul.mubr.bf16.gmra.mrb[0].mxu0 %v610
      %v1387 = vpop.f32.mrb[0].mxu0
      %v1388 = vadd.f32 %v361, %v1387
      %v1389 = vpop.f32.mrb[0].mxu0
      %v1390 = vadd.f32 %v365, %v1389
      %v1391 = vpop.f32.mrb[0].mxu0
      %v1392 = vadd.f32 %v361, %v1391
      %v1393 = vpop.f32.mrb[0].mxu0
      %v1394 = vadd.f32 %v365, %v1393
      %1395 = vmatprep.mubr.bf16.mxu0 0
      %1396 = vmatmul.mubr.bf16.gmra.mrb[0].mxu0 %v613
      %v1397 = vpop.f32.mrb[0].mxu0
      %v1398 = vadd.f32 %v361, %v1397
      %v1399 = vpop.f32.mrb[0].mxu0
      %v1400 = vadd.f32 %v365, %v1399
      %v1401 = vpop.f32.mrb[0].mxu0
      %v1402 = vadd.f32 %v361, %v1401
      %v1403 = vpop.f32.mrb[0].mxu0
      %v1404 = vadd.f32 %v365, %v1403
      %1405 = vdwg.mxu0
      %1406 = vmatprep.subr.bf16.mxu0 %v541
      %1407 = vmatpush1.bf16.msra.mxu0 %v540
      %1408 = vmatprep.subr.bf16.mxu0 %v557
      %1409 = vmatpush1.bf16.msra.mxu0 %v556
      %1410 = vmatprep.subr.bf16.mxu0 0
      %1411 = vmatpush1.bf16.msra.mxu0 0
      %1412 = vmatprep.subr.bf16.mxu0 0
      %1413 = vmatpush1.bf16.msra.mxu0 0
      %1414 = vmatprep.subr.bf16.mxu0 0
      %1415 = vmatpush1.bf16.msra.mxu0 0
      %1416 = vmatprep.subr.bf16.mxu0 0
      %1417 = vmatpush1.bf16.msra.mxu0 0
      %1418 = vmatprep.subr.bf16.mxu0 0
      %1419 = vmatpush1.bf16.msra.mxu0 0
      %1420 = vmatprep.subr.bf16.mxu0 0
      %1421 = vmatpush1.bf16.msra.mxu0 0
      %1422 = vmatprep.subr.bf16.mxu0 0
      %1423 = vmatpush1.bf16.msra.mxu0 0
      %1424 = vmatprep.subr.bf16.mxu0 0
      %1425 = vmatpush1.bf16.msra.mxu0 0
      %1426 = vmatprep.subr.bf16.mxu0 0
      %1427 = vmatpush1.bf16.msra.mxu0 0
      %1428 = vmatprep.subr.bf16.mxu0 0
      %1429 = vmatpush1.bf16.msra.mxu0 0
      %1430 = vmatprep.subr.bf16.mxu0 0
      %1431 = vmatpush1.bf16.msra.mxu0 0
      %1432 = vmatprep.subr.bf16.mxu0 0
      %1433 = vmatpush1.bf16.msra.mxu0 0
      %1434 = vmatprep.subr.bf16.mxu0 0
      %1435 = vmatpush1.bf16.msra.mxu0 0
      %1436 = vmatprep.subr.bf16.mxu0 0
      %1437 = vmatpush1.bf16.msra.mxu0 0
      %1438 = vmatprep.mubr.bf16.mxu0 0
      %1439 = vmatmul.mubr.bf16.gmra.mrb[0].mxu0 %v592
      %v1440 = vpop.f32.mrb[0].mxu0
      %v1441 = vadd.f32 %v369, %v1440
      %v1442 = vpop.f32.mrb[0].mxu0
      %v1443 = vadd.f32 %v373, %v1442
      %v1444 = vpop.f32.mrb[0].mxu0
      %v1445 = vadd.f32 %v369, %v1444
      %v1446 = vpop.f32.mrb[0].mxu0
      %v1447 = vadd.f32 %v373, %v1446
      %1448 = vmatprep.mubr.bf16.mxu0 0
      %1449 = vmatmul.mubr.bf16.gmra.mrb[0].mxu0 %v595
      %v1450 = vpop.f32.mrb[0].mxu0
      %v1451 = vadd.f32 %v369, %v1450
      %v1452 = vpop.f32.mrb[0].mxu0
      %v1453 = vadd.f32 %v373, %v1452
      %v1454 = vpop.f32.mrb[0].mxu0
      %v1455 = vadd.f32 %v369, %v1454
      %v1456 = vpop.f32.mrb[0].mxu0
      %v1457 = vadd.f32 %v373, %v1456
      %1458 = vmatprep.mubr.bf16.mxu0 0
      %1459 = vmatmul.mubr.bf16.gmra.mrb[0].mxu0 %v598
      %v1460 = vpop.f32.mrb[0].mxu0
      %v1461 = vadd.f32 %v369, %v1460
      %v1462 = vpop.f32.mrb[0].mxu0
      %v1463 = vadd.f32 %v373, %v1462
      %v1464 = vpop.f32.mrb[0].mxu0
      %v1465 = vadd.f32 %v369, %v1464
      %v1466 = vpop.f32.mrb[0].mxu0
      %v1467 = vadd.f32 %v373, %v1466
      %1468 = vmatprep.mubr.bf16.mxu0 0
      %1469 = vmatmul.mubr.bf16.gmra.mrb[0].mxu0 %v601
      %v1470 = vpop.f32.mrb[0].mxu0
      %v1471 = vadd.f32 %v369, %v1470
      %v1472 = vpop.f32.mrb[0].mxu0
      %v1473 = vadd.f32 %v373, %v1472
      %v1474 = vpop.f32.mrb[0].mxu0
      %v1475 = vadd.f32 %v369, %v1474
      %v1476 = vpop.f32.mrb[0].mxu0
      %v1477 = vadd.f32 %v373, %v1476
      %1478 = vmatprep.mubr.bf16.mxu0 0
      %1479 = vmatmul.mubr.bf16.gmra.mrb[0].mxu0 %v604
      %v1480 = vpop.f32.mrb[0].mxu0
      %v1481 = vadd.f32 %v369, %v1480
      %v1482 = vpop.f32.mrb[0].mxu0
      %v1483 = vadd.f32 %v373, %v1482
      %v1484 = vpop.f32.mrb[0].mxu0
      %v1485 = vadd.f32 %v369, %v1484
      %v1486 = vpop.f32.mrb[0].mxu0
      %v1487 = vadd.f32 %v373, %v1486
      %1488 = vmatprep.mubr.bf16.mxu0 0
      %1489 = vmatmul.mubr.bf16.gmra.mrb[0].mxu0 %v607
      %v1490 = vpop.f32.mrb[0].mxu0
      %v1491 = vadd.f32 %v369, %v1490
      %v1492 = vpop.f32.mrb[0].mxu0
      %v1493 = vadd.f32 %v373, %v1492
      %v1494 = vpop.f32.mrb[0].mxu0
      %v1495 = vadd.f32 %v369, %v1494
      %v1496 = vpop.f32.mrb[0].mxu0
      %v1497 = vadd.f32 %v373, %v1496
      %1498 = vmatprep.mubr.bf16.mxu0 0
      %1499 = vmatmul.mubr.bf16.gmra.mrb[0].mxu0 %v610
      %v1500 = vpop.f32.mrb[0].mxu0
      %v1501 = vadd.f32 %v369, %v1500
      %v1502 = vpop.f32.mrb[0].mxu0
      %v1503 = vadd.f32 %v373, %v1502
      %v1504 = vpop.f32.mrb[0].mxu0
      %v1505 = vadd.f32 %v369, %v1504
      %v1506 = vpop.f32.mrb[0].mxu0
      %v1507 = vadd.f32 %v373, %v1506
      %1508 = vmatprep.mubr.bf16.mxu0 0
      %1509 = vmatmul.mubr.bf16.gmra.mrb[0].mxu0 %v613
      %v1510 = vpop.f32.mrb[0].mxu0
      %v1511 = vadd.f32 %v369, %v1510
      %v1512 = vpop.f32.mrb[0].mxu0
      %v1513 = vadd.f32 %v373, %v1512
      %v1514 = vpop.f32.mrb[0].mxu0
      %v1515 = vadd.f32 %v369, %v1514
      %v1516 = vpop.f32.mrb[0].mxu0
      %v1517 = vadd.f32 %v373, %v1516
      %1518 = vdwg.mxu0
      %v1519 = vmax.f32 %v650, 0.0
      %v1520 = vmax.f32 %v652, 0.0
      %v1521 = vmax.f32 %v763, 0.0
      %v1522 = vmax.f32 %v765, 0.0
      %v1523 = vmax.f32 %v876, 0.0
      %v1524 = vmax.f32 %v878, 0.0
      %v1525 = vmax.f32 %v989, 0.0
      %v1526 = vmax.f32 %v991, 0.0
      %v1527 = vmax.f32 %v1102, 0.0
      %v1528 = vmax.f32 %v1104, 0.0
      %v1529 = vmax.f32 %v1215, 0.0
      %v1530 = vmax.f32 %v1217, 0.0
      %v1531 = vmax.f32 %v1328, 0.0
      %v1532 = vmax.f32 %v1330, 0.0
      %v1533 = vmax.f32 %v1441, 0.0
      %v1534 = vmax.f32 %v1443, 0.0
      %v1535 = vmax.f32 %v654, 0.0
      %v1536 = vmax.f32 %v656, 0.0
      %v1537 = vmax.f32 %v767, 0.0
      %v1538 = vmax.f32 %v769, 0.0
      %v1539 = vmax.f32 %v880, 0.0
      %v1540 = vmax.f32 %v882, 0.0
      %v1541 = vmax.f32 %v993, 0.0
      %v1542 = vmax.f32 %v995, 0.0
      %v1543 = vmax.f32 %v1106, 0.0
      %v1544 = vmax.f32 %v1108, 0.0
      %v1545 = vmax.f32 %v1219, 0.0
      %v1546 = vmax.f32 %v1221, 0.0
      %v1547 = vmax.f32 %v1332, 0.0
      %v1548 = vmax.f32 %v1334, 0.0
      %v1549 = vmax.f32 %v1445, 0.0
      %v1550 = vmax.f32 %v1447, 0.0
      %v1551 = vmax.f32 %v660, 0.0
      %v1552 = vmax.f32 %v662, 0.0
      %v1553 = vmax.f32 %v773, 0.0
      %v1554 = vmax.f32 %v775, 0.0
      %v1555 = vmax.f32 %v886, 0.0
      %v1556 = vmax.f32 %v888, 0.0
      %v1557 = vmax.f32 %v999, 0.0
      %v1558 = vmax.f32 %v1001, 0.0
      %v1559 = vmax.f32 %v1112, 0.0
      %v1560 = vmax.f32 %v1114, 0.0
      %v1561 = vmax.f32 %v1225, 0.0
      %v1562 = vmax.f32 %v1227, 0.0
      %v1563 = vmax.f32 %v1338, 0.0
      %v1564 = vmax.f32 %v1340, 0.0
      %v1565 = vmax.f32 %v1451, 0.0
      %v1566 = vmax.f32 %v1453, 0.0
      %v1567 = vmax.f32 %v664, 0.0
      %v1568 = vmax.f32 %v666, 0.0
      %v1569 = vmax.f32 %v777, 0.0
      %v1570 = vmax.f32 %v779, 0.0
      %v1571 = vmax.f32 %v890, 0.0
      %v1572 = vmax.f32 %v892, 0.0
      %v1573 = vmax.f32 %v1003, 0.0
      %v1574 = vmax.f32 %v1005, 0.0
      %v1575 = vmax.f32 %v1116, 0.0
      %v1576 = vmax.f32 %v1118, 0.0
      %v1577 = vmax.f32 %v1229, 0.0
      %v1578 = vmax.f32 %v1231, 0.0
      %v1579 = vmax.f32 %v1342, 0.0
      %v1580 = vmax.f32 %v1344, 0.0
      %v1581 = vmax.f32 %v1455, 0.0
      %v1582 = vmax.f32 %v1457, 0.0
      %v1583 = vmax.f32 %v670, 0.0
      %v1584 = vmax.f32 %v672, 0.0
      %v1585 = vmax.f32 %v783, 0.0
      %v1586 = vmax.f32 %v785, 0.0
      %v1587 = vmax.f32 %v896, 0.0
      %v1588 = vmax.f32 %v898, 0.0
      %v1589 = vmax.f32 %v1009, 0.0
      %v1590 = vmax.f32 %v1011, 0.0
      %v1591 = vmax.f32 %v1122, 0.0
      %v1592 = vmax.f32 %v1124, 0.0
      %v1593 = vmax.f32 %v1235, 0.0
      %v1594 = vmax.f32 %v1237, 0.0
      %v1595 = vmax.f32 %v1348, 0.0
      %v1596 = vmax.f32 %v1350, 0.0
      %v1597 = vmax.f32 %v1461, 0.0
      %v1598 = vmax.f32 %v1463, 0.0
      %v1599 = vmax.f32 %v674, 0.0
      %v1600 = vmax.f32 %v676, 0.0
      %v1601 = vmax.f32 %v787, 0.0
      %v1602 = vmax.f32 %v789, 0.0
      %v1603 = vmax.f32 %v900, 0.0
      %v1604 = vmax.f32 %v902, 0.0
      %v1605 = vmax.f32 %v1013, 0.0
      %v1606 = vmax.f32 %v1015, 0.0
      %v1607 = vmax.f32 %v1126, 0.0
      %v1608 = vmax.f32 %v1128, 0.0
      %v1609 = vmax.f32 %v1239, 0.0
      %v1610 = vmax.f32 %v1241, 0.0
      %v1611 = vmax.f32 %v1352, 0.0
      %v1612 = vmax.f32 %v1354, 0.0
      %v1613 = vmax.f32 %v1465, 0.0
      %v1614 = vmax.f32 %v1467, 0.0
      %v1615 = vmax.f32 %v680, 0.0
      %v1616 = vmax.f32 %v682, 0.0
      %v1617 = vmax.f32 %v793, 0.0
      %v1618 = vmax.f32 %v795, 0.0
      %v1619 = vmax.f32 %v906, 0.0
      %v1620 = vmax.f32 %v908, 0.0
      %v1621 = vmax.f32 %v1019, 0.0
      %v1622 = vmax.f32 %v1021, 0.0
      %v1623 = vmax.f32 %v1132, 0.0
      %v1624 = vmax.f32 %v1134, 0.0
      %v1625 = vmax.f32 %v1245, 0.0
      %v1626 = vmax.f32 %v1247, 0.0
      %v1627 = vmax.f32 %v1358, 0.0
      %v1628 = vmax.f32 %v1360, 0.0
      %v1629 = vmax.f32 %v1471, 0.0
      %v1630 = vmax.f32 %v1473, 0.0
      %v1631 = vmax.f32 %v684, 0.0
      %v1632 = vmax.f32 %v686, 0.0
      %v1633 = vmax.f32 %v797, 0.0
      %v1634 = vmax.f32 %v799, 0.0
      %v1635 = vmax.f32 %v910, 0.0
      %v1636 = vmax.f32 %v912, 0.0
      %v1637 = vmax.f32 %v1023, 0.0
      %v1638 = vmax.f32 %v1025, 0.0
      %v1639 = vmax.f32 %v1136, 0.0
      %v1640 = vmax.f32 %v1138, 0.0
      %v1641 = vmax.f32 %v1249, 0.0
      %v1642 = vmax.f32 %v1251, 0.0
      %v1643 = vmax.f32 %v1362, 0.0
      %v1644 = vmax.f32 %v1364, 0.0
      %v1645 = vmax.f32 %v1475, 0.0
      %v1646 = vmax.f32 %v1477, 0.0
      %v1647 = vmax.f32 %v690, 0.0
      %v1648 = vmax.f32 %v692, 0.0
      %v1649 = vmax.f32 %v803, 0.0
      %v1650 = vmax.f32 %v805, 0.0
      %v1651 = vmax.f32 %v916, 0.0
      %v1652 = vmax.f32 %v918, 0.0
      %v1653 = vmax.f32 %v1029, 0.0
      %v1654 = vmax.f32 %v1031, 0.0
      %v1655 = vmax.f32 %v1142, 0.0
      %v1656 = vmax.f32 %v1144, 0.0
      %v1657 = vmax.f32 %v1255, 0.0
      %v1658 = vmax.f32 %v1257, 0.0
      %v1659 = vmax.f32 %v1368, 0.0
      %v1660 = vmax.f32 %v1370, 0.0
      %v1661 = vmax.f32 %v1481, 0.0
      %v1662 = vmax.f32 %v1483, 0.0
      %v1663 = vmax.f32 %v694, 0.0
      %v1664 = vmax.f32 %v696, 0.0
      %v1665 = vmax.f32 %v807, 0.0
      %v1666 = vmax.f32 %v809, 0.0
      %v1667 = vmax.f32 %v920, 0.0
      %v1668 = vmax.f32 %v922, 0.0
      %v1669 = vmax.f32 %v1033, 0.0
      %v1670 = vmax.f32 %v1035, 0.0
      %v1671 = vmax.f32 %v1146, 0.0
      %v1672 = vmax.f32 %v1148, 0.0
      %v1673 = vmax.f32 %v1259, 0.0
      %v1674 = vmax.f32 %v1261, 0.0
      %v1675 = vmax.f32 %v1372, 0.0
      %v1676 = vmax.f32 %v1374, 0.0
      %v1677 = vmax.f32 %v1485, 0.0
      %v1678 = vmax.f32 %v1487, 0.0
      %v1679 = vmax.f32 %v700, 0.0
      %v1680 = vmax.f32 %v702, 0.0
      %v1681 = vmax.f32 %v813, 0.0
      %v1682 = vmax.f32 %v815, 0.0
      %v1683 = vmax.f32 %v926, 0.0
      %v1684 = vmax.f32 %v928, 0.0
      %v1685 = vmax.f32 %v1039, 0.0
      %v1686 = vmax.f32 %v1041, 0.0
      %v1687 = vmax.f32 %v1152, 0.0
      %v1688 = vmax.f32 %v1154, 0.0
      %v1689 = vmax.f32 %v1265, 0.0
      %v1690 = vmax.f32 %v1267, 0.0
      %v1691 = vmax.f32 %v1378, 0.0
      %v1692 = vmax.f32 %v1380, 0.0
      %v1693 = vmax.f32 %v1491, 0.0
      %v1694 = vmax.f32 %v1493, 0.0
      %v1695 = vmax.f32 %v704, 0.0
      %v1696 = vmax.f32 %v706, 0.0
      %v1697 = vmax.f32 %v817, 0.0
      %v1698 = vmax.f32 %v819, 0.0
      %v1699 = vmax.f32 %v930, 0.0
      %v1700 = vmax.f32 %v932, 0.0
      %v1701 = vmax.f32 %v1043, 0.0
      %v1702 = vmax.f32 %v1045, 0.0
      %v1703 = vmax.f32 %v1156, 0.0
      %v1704 = vmax.f32 %v1158, 0.0
      %v1705 = vmax.f32 %v1269, 0.0
      %v1706 = vmax.f32 %v1271, 0.0
      %v1707 = vmax.f32 %v1382, 0.0
      %v1708 = vmax.f32 %v1384, 0.0
      %v1709 = vmax.f32 %v1495, 0.0
      %v1710 = vmax.f32 %v1497, 0.0
      %v1711 = vmax.f32 %v710, 0.0
      %v1712 = vmax.f32 %v712, 0.0
      %v1713 = vmax.f32 %v823, 0.0
      %v1714 = vmax.f32 %v825, 0.0
      %v1715 = vmax.f32 %v936, 0.0
      %v1716 = vmax.f32 %v938, 0.0
      %v1717 = vmax.f32 %v1049, 0.0
      %v1718 = vmax.f32 %v1051, 0.0
      %v1719 = vmax.f32 %v1162, 0.0
      %v1720 = vmax.f32 %v1164, 0.0
      %v1721 = vmax.f32 %v1275, 0.0
      %v1722 = vmax.f32 %v1277, 0.0
      %v1723 = vmax.f32 %v1388, 0.0
      %v1724 = vmax.f32 %v1390, 0.0
      %v1725 = vmax.f32 %v1501, 0.0
      %v1726 = vmax.f32 %v1503, 0.0
      %v1727 = vmax.f32 %v714, 0.0
      %v1728 = vmax.f32 %v716, 0.0
      %v1729 = vmax.f32 %v827, 0.0
      %v1730 = vmax.f32 %v829, 0.0
      %v1731 = vmax.f32 %v940, 0.0
      %v1732 = vmax.f32 %v942, 0.0
      %v1733 = vmax.f32 %v1053, 0.0
      %v1734 = vmax.f32 %v1055, 0.0
      %v1735 = vmax.f32 %v1166, 0.0
      %v1736 = vmax.f32 %v1168, 0.0
      %v1737 = vmax.f32 %v1279, 0.0
      %v1738 = vmax.f32 %v1281, 0.0
      %v1739 = vmax.f32 %v1392, 0.0
      %v1740 = vmax.f32 %v1394, 0.0
      %v1741 = vmax.f32 %v1505, 0.0
      %v1742 = vmax.f32 %v1507, 0.0
      %v1743 = vmax.f32 %v720, 0.0
      %v1744 = vmax.f32 %v722, 0.0
      %v1745 = vmax.f32 %v833, 0.0
      %v1746 = vmax.f32 %v835, 0.0
      %v1747 = vmax.f32 %v946, 0.0
      %v1748 = vmax.f32 %v948, 0.0
      %v1749 = vmax.f32 %v1059, 0.0
      %v1750 = vmax.f32 %v1061, 0.0
      %v1751 = vmax.f32 %v1172, 0.0
      %v1752 = vmax.f32 %v1174, 0.0
      %v1753 = vmax.f32 %v1285, 0.0
      %v1754 = vmax.f32 %v1287, 0.0
      %v1755 = vmax.f32 %v1398, 0.0
      %v1756 = vmax.f32 %v1400, 0.0
      %v1757 = vmax.f32 %v1511, 0.0
      %v1758 = vmax.f32 %v1513, 0.0
      %v1759 = vmax.f32 %v724, 0.0
      %v1760 = vmax.f32 %v726, 0.0
      %v1761 = vmax.f32 %v837, 0.0
      %v1762 = vmax.f32 %v839, 0.0
      %v1763 = vmax.f32 %v950, 0.0
      %v1764 = vmax.f32 %v952, 0.0
      %v1765 = vmax.f32 %v1063, 0.0
      %v1766 = vmax.f32 %v1065, 0.0
      %v1767 = vmax.f32 %v1176, 0.0
      %v1768 = vmax.f32 %v1178, 0.0
      %v1769 = vmax.f32 %v1289, 0.0
      %v1770 = vmax.f32 %v1291, 0.0
      %v1771 = vmax.f32 %v1402, 0.0
      %v1772 = vmax.f32 %v1404, 0.0
      %v1773 = vmax.f32 %v1515, 0.0
      %v1774 = vmax.f32 %v1517, 0.0
      %v1775 = vpack.c.bf16 %v1535, %v1519
      %v1776 = vpack.c.bf16 %v1536, %v1520
      %v1777 = vpack.c.bf16 %v1537, %v1521
      %v1778 = vpack.c.bf16 %v1538, %v1522
      %v1779 = vpack.c.bf16 %v1539, %v1523
      %v1780 = vpack.c.bf16 %v1540, %v1524
      %v1781 = vpack.c.bf16 %v1541, %v1525
      %v1782 = vpack.c.bf16 %v1542, %v1526
      %v1783 = vpack.c.bf16 %v1543, %v1527
      %v1784 = vpack.c.bf16 %v1544, %v1528
      %v1785 = vpack.c.bf16 %v1545, %v1529
      %v1786 = vpack.c.bf16 %v1546, %v1530
      %v1787 = vpack.c.bf16 %v1547, %v1531
      %v1788 = vpack.c.bf16 %v1548, %v1532
      %v1789 = vpack.c.bf16 %v1549, %v1533
      %v1790 = vpack.c.bf16 %v1550, %v1534
      %v1791 = vpack.c.bf16 %v1567, %v1551
      %v1792 = vpack.c.bf16 %v1568, %v1552
      %v1793 = vpack.c.bf16 %v1569, %v1553
      %v1794 = vpack.c.bf16 %v1570, %v1554
      %v1795 = vpack.c.bf16 %v1571, %v1555
      %v1796 = vpack.c.bf16 %v1572, %v1556
      %v1797 = vpack.c.bf16 %v1573, %v1557
      %v1798 = vpack.c.bf16 %v1574, %v1558
      %v1799 = vpack.c.bf16 %v1575, %v1559
      %v1800 = vpack.c.bf16 %v1576, %v1560
      %v1801 = vpack.c.bf16 %v1577, %v1561
      %v1802 = vpack.c.bf16 %v1578, %v1562
      %v1803 = vpack.c.bf16 %v1579, %v1563
      %v1804 = vpack.c.bf16 %v1580, %v1564
      %v1805 = vpack.c.bf16 %v1581, %v1565
      %v1806 = vpack.c.bf16 %v1582, %v1566
      %v1807 = vpack.c.bf16 %v1599, %v1583
      %v1808 = vpack.c.bf16 %v1600, %v1584
      %v1809 = vpack.c.bf16 %v1601, %v1585
      %v1810 = vpack.c.bf16 %v1602, %v1586
      %v1811 = vpack.c.bf16 %v1603, %v1587
      %v1812 = vpack.c.bf16 %v1604, %v1588
      %v1813 = vpack.c.bf16 %v1605, %v1589
      %v1814 = vpack.c.bf16 %v1606, %v1590
      %v1815 = vpack.c.bf16 %v1607, %v1591
      %v1816 = vpack.c.bf16 %v1608, %v1592
      %v1817 = vpack.c.bf16 %v1609, %v1593
      %v1818 = vpack.c.bf16 %v1610, %v1594
      %v1819 = vpack.c.bf16 %v1611, %v1595
      %v1820 = vpack.c.bf16 %v1612, %v1596
      %v1821 = vpack.c.bf16 %v1613, %v1597
      %v1822 = vpack.c.bf16 %v1614, %v1598
      %v1823 = vpack.c.bf16 %v1631, %v1615
      %v1824 = vpack.c.bf16 %v1632, %v1616
      %v1825 = vpack.c.bf16 %v1633, %v1617
      %v1826 = vpack.c.bf16 %v1634, %v1618
      %v1827 = vpack.c.bf16 %v1635, %v1619
      %v1828 = vpack.c.bf16 %v1636, %v1620
      %v1829 = vpack.c.bf16 %v1637, %v1621
      %v1830 = vpack.c.bf16 %v1638, %v1622
      %v1831 = vpack.c.bf16 %v1639, %v1623
      %v1832 = vpack.c.bf16 %v1640, %v1624
      %v1833 = vpack.c.bf16 %v1641, %v1625
      %v1834 = vpack.c.bf16 %v1642, %v1626
      %v1835 = vpack.c.bf16 %v1643, %v1627
      %v1836 = vpack.c.bf16 %v1644, %v1628
      %v1837 = vpack.c.bf16 %v1645, %v1629
      %v1838 = vpack.c.bf16 %v1646, %v1630
      %v1839 = vpack.c.bf16 %v1663, %v1647
      %v1840 = vpack.c.bf16 %v1664, %v1648
      %v1841 = vpack.c.bf16 %v1665, %v1649
      %v1842 = vpack.c.bf16 %v1666, %v1650
      %v1843 = vpack.c.bf16 %v1667, %v1651
      %v1844 = vpack.c.bf16 %v1668, %v1652
      %v1845 = vpack.c.bf16 %v1669, %v1653
      %v1846 = vpack.c.bf16 %v1670, %v1654
      %v1847 = vpack.c.bf16 %v1671, %v1655
      %v1848 = vpack.c.bf16 %v1672, %v1656
      %v1849 = vpack.c.bf16 %v1673, %v1657
      %v1850 = vpack.c.bf16 %v1674, %v1658
      %v1851 = vpack.c.bf16 %v1675, %v1659
      %v1852 = vpack.c.bf16 %v1676, %v1660
      %v1853 = vpack.c.bf16 %v1677, %v1661
      %v1854 = vpack.c.bf16 %v1678, %v1662
      %v1855 = vpack.c.bf16 %v1695, %v1679
      %v1856 = vpack.c.bf16 %v1696, %v1680
      %v1857 = vpack.c.bf16 %v1697, %v1681
      %v1858 = vpack.c.bf16 %v1698, %v1682
      %v1859 = vpack.c.bf16 %v1699, %v1683
      %v1860 = vpack.c.bf16 %v1700, %v1684
      %v1861 = vpack.c.bf16 %v1701, %v1685
      %v1862 = vpack.c.bf16 %v1702, %v1686
      %v1863 = vpack.c.bf16 %v1703, %v1687
      %v1864 = vpack.c.bf16 %v1704, %v1688
      %v1865 = vpack.c.bf16 %v1705, %v1689
      %v1866 = vpack.c.bf16 %v1706, %v1690
      %v1867 = vpack.c.bf16 %v1707, %v1691
      %v1868 = vpack.c.bf16 %v1708, %v1692
      %v1869 = vpack.c.bf16 %v1709, %v1693
      %v1870 = vpack.c.bf16 %v1710, %v1694
      %v1871 = vpack.c.bf16 %v1727, %v1711
      %v1872 = vpack.c.bf16 %v1728, %v1712
      %v1873 = vpack.c.bf16 %v1729, %v1713
      %v1874 = vpack.c.bf16 %v1730, %v1714
      %v1875 = vpack.c.bf16 %v1731, %v1715
      %v1876 = vpack.c.bf16 %v1732, %v1716
      %v1877 = vpack.c.bf16 %v1733, %v1717
      %v1878 = vpack.c.bf16 %v1734, %v1718
      %v1879 = vpack.c.bf16 %v1735, %v1719
      %v1880 = vpack.c.bf16 %v1736, %v1720
      %v1881 = vpack.c.bf16 %v1737, %v1721
      %v1882 = vpack.c.bf16 %v1738, %v1722
      %v1883 = vpack.c.bf16 %v1739, %v1723
      %v1884 = vpack.c.bf16 %v1740, %v1724
      %v1885 = vpack.c.bf16 %v1741, %v1725
      %v1886 = vpack.c.bf16 %v1742, %v1726
      %v1887 = vpack.c.bf16 %v1759, %v1743
      %v1888 = vpack.c.bf16 %v1760, %v1744
      %v1889 = vpack.c.bf16 %v1761, %v1745
      %v1890 = vpack.c.bf16 %v1762, %v1746
      %v1891 = vpack.c.bf16 %v1763, %v1747
      %v1892 = vpack.c.bf16 %v1764, %v1748
      %v1893 = vpack.c.bf16 %v1765, %v1749
      %v1894 = vpack.c.bf16 %v1766, %v1750
      %v1895 = vpack.c.bf16 %v1767, %v1751
      %v1896 = vpack.c.bf16 %v1768, %v1752
      %v1897 = vpack.c.bf16 %v1769, %v1753
      %v1898 = vpack.c.bf16 %v1770, %v1754
      %v1899 = vpack.c.bf16 %v1771, %v1755
      %v1900 = vpack.c.bf16 %v1772, %v1756
      %v1901 = vpack.c.bf16 %v1773, %v1757
      %v1902 = vpack.c.bf16 %v1774, %v1758
      %1903 = vst [vmem:[#allocation2] sm:$0xff] %v1775
      %1904 = vst [vmem:[#allocation2 + $0x8] sm:$0xff] %v1776
      %1905 = vst [vmem:[#allocation2 + $0x10] sm:$0xff] %v1777
      %1906 = vst [vmem:[#allocation2 + $0x18] sm:$0xff] %v1778
      %1907 = vst [vmem:[#allocation2 + $0x20] sm:$0xff] %v1779
      %1908 = vst [vmem:[#allocation2 + $0x28] sm:$0xff] %v1780
      %1909 = vst [vmem:[#allocation2 + $0x30] sm:$0xff] %v1781
      %1910 = vst [vmem:[#allocation2 + $0x38] sm:$0xff] %v1782
      %1911 = vst [vmem:[#allocation2 + $0x40] sm:$0xff] %v1783
      %1912 = vst [vmem:[#allocation2 + $0x48] sm:$0xff] %v1784
      %1913 = vst [vmem:[#allocation2 + $0x50] sm:$0xff] %v1785
      %1914 = vst [vmem:[#allocation2 + $0x58] sm:$0xff] %v1786
      %1915 = vst [vmem:[#allocation2 + $0x60] sm:$0xff] %v1787
      %1916 = vst [vmem:[#allocation2 + $0x68] sm:$0xff] %v1788
      %1917 = vst [vmem:[#allocation2 + $0x70] sm:$0xff] %v1789
      %1918 = vst [vmem:[#allocation2 + $0x78] sm:$0xff] %v1790
      %1919 = vst [vmem:[#allocation2 + $0x80] sm:$0xff] %v1791
      %1920 = vst [vmem:[#allocation2 + $0x88] sm:$0xff] %v1792
      %1921 = vst [vmem:[#allocation2 + $0x90] sm:$0xff] %v1793
      %1922 = vst [vmem:[#allocation2 + $0x98] sm:$0xff] %v1794
      %1923 = vst [vmem:[#allocation2 + $0xa0] sm:$0xff] %v1795
      %1924 = vst [vmem:[#allocation2 + $0xa8] sm:$0xff] %v1796
      %1925 = vst [vmem:[#allocation2 + $0xb0] sm:$0xff] %v1797
      %1926 = vst [vmem:[#allocation2 + $0xb8] sm:$0xff] %v1798
      %1927 = vst [vmem:[#allocation2 + $0xc0] sm:$0xff] %v1799
      %1928 = vst [vmem:[#allocation2 + $0xc8] sm:$0xff] %v1800
      %1929 = vst [vmem:[#allocation2 + $0xd0] sm:$0xff] %v1801
      %1930 = vst [vmem:[#allocation2 + $0xd8] sm:$0xff] %v1802
      %1931 = vst [vmem:[#allocation2 + $0xe0] sm:$0xff] %v1803
      %1932 = vst [vmem:[#allocation2 + $0xe8] sm:$0xff] %v1804
      %1933 = vst [vmem:[#allocation2 + $0xf0] sm:$0xff] %v1805
      %1934 = vst [vmem:[#allocation2 + $0xf8] sm:$0xff] %v1806
      %1935 = vst [vmem:[#allocation2 + $0x100] sm:$0xff] %v1807
      %1936 = vst [vmem:[#allocation2 + $0x108] sm:$0xff] %v1808
      %1937 = vst [vmem:[#allocation2 + $0x110] sm:$0xff] %v1809
      %1938 = vst [vmem:[#allocation2 + $0x118] sm:$0xff] %v1810
      %1939 = vst [vmem:[#allocation2 + $0x120] sm:$0xff] %v1811
      %1940 = vst [vmem:[#allocation2 + $0x128] sm:$0xff] %v1812
      %1941 = vst [vmem:[#allocation2 + $0x130] sm:$0xff] %v1813
      %1942 = vst [vmem:[#allocation2 + $0x138] sm:$0xff] %v1814
      %1943 = vst [vmem:[#allocation2 + $0x140] sm:$0xff] %v1815
      %1944 = vst [vmem:[#allocation2 + $0x148] sm:$0xff] %v1816
      %1945 = vst [vmem:[#allocation2 + $0x150] sm:$0xff] %v1817
      %1946 = vst [vmem:[#allocation2 + $0x158] sm:$0xff] %v1818
      %1947 = vst [vmem:[#allocation2 + $0x160] sm:$0xff] %v1819
      %1948 = vst [vmem:[#allocation2 + $0x168] sm:$0xff] %v1820
      %1949 = vst [vmem:[#allocation2 + $0x170] sm:$0xff] %v1821
      %1950 = vst [vmem:[#allocation2 + $0x178] sm:$0xff] %v1822
      %1951 = vst [vmem:[#allocation2 + $0x180] sm:$0xff] %v1823
      %1952 = vst [vmem:[#allocation2 + $0x188] sm:$0xff] %v1824
      %1953 = vst [vmem:[#allocation2 + $0x190] sm:$0xff] %v1825
      %1954 = vst [vmem:[#allocation2 + $0x198] sm:$0xff] %v1826
      %1955 = vst [vmem:[#allocation2 + $0x1a0] sm:$0xff] %v1827
      %1956 = vst [vmem:[#allocation2 + $0x1a8] sm:$0xff] %v1828
      %1957 = vst [vmem:[#allocation2 + $0x1b0] sm:$0xff] %v1829
      %1958 = vst [vmem:[#allocation2 + $0x1b8] sm:$0xff] %v1830
      %1959 = vst [vmem:[#allocation2 + $0x1c0] sm:$0xff] %v1831
      %1960 = vst [vmem:[#allocation2 + $0x1c8] sm:$0xff] %v1832
      %1961 = vst [vmem:[#allocation2 + $0x1d0] sm:$0xff] %v1833
      %1962 = vst [vmem:[#allocation2 + $0x1d8] sm:$0xff] %v1834
      %1963 = vst [vmem:[#allocation2 + $0x1e0] sm:$0xff] %v1835
      %1964 = vst [vmem:[#allocation2 + $0x1e8] sm:$0xff] %v1836
      %1965 = vst [vmem:[#allocation2 + $0x1f0] sm:$0xff] %v1837
      %1966 = vst [vmem:[#allocation2 + $0x1f8] sm:$0xff] %v1838
      %1967 = vst [vmem:[#allocation2 + $0x200] sm:$0xff] %v1839
      %1968 = vst [vmem:[#allocation2 + $0x208] sm:$0xff] %v1840
      %1969 = vst [vmem:[#allocation2 + $0x210] sm:$0xff] %v1841
      %1970 = vst [vmem:[#allocation2 + $0x218] sm:$0xff] %v1842
      %1971 = vst [vmem:[#allocation2 + $0x220] sm:$0xff] %v1843
      %1972 = vst [vmem:[#allocation2 + $0x228] sm:$0xff] %v1844
      %1973 = vst [vmem:[#allocation2 + $0x230] sm:$0xff] %v1845
      %1974 = vst [vmem:[#allocation2 + $0x238] sm:$0xff] %v1846
      %1975 = vst [vmem:[#allocation2 + $0x240] sm:$0xff] %v1847
      %1976 = vst [vmem:[#allocation2 + $0x248] sm:$0xff] %v1848
      %1977 = vst [vmem:[#allocation2 + $0x250] sm:$0xff] %v1849
      %1978 = vst [vmem:[#allocation2 + $0x258] sm:$0xff] %v1850
      %1979 = vst [vmem:[#allocation2 + $0x260] sm:$0xff] %v1851
      %1980 = vst [vmem:[#allocation2 + $0x268] sm:$0xff] %v1852
      %1981 = vst [vmem:[#allocation2 + $0x270] sm:$0xff] %v1853
      %1982 = vst [vmem:[#allocation2 + $0x278] sm:$0xff] %v1854
      %1983 = vst [vmem:[#allocation2 + $0x280] sm:$0xff] %v1855
      %1984 = vst [vmem:[#allocation2 + $0x288] sm:$0xff] %v1856
      %1985 = vst [vmem:[#allocation2 + $0x290] sm:$0xff] %v1857
      %1986 = vst [vmem:[#allocation2 + $0x298] sm:$0xff] %v1858
      %1987 = vst [vmem:[#allocation2 + $0x2a0] sm:$0xff] %v1859
      %1988 = vst [vmem:[#allocation2 + $0x2a8] sm:$0xff] %v1860
      %1989 = vst [vmem:[#allocation2 + $0x2b0] sm:$0xff] %v1861
      %1990 = vst [vmem:[#allocation2 + $0x2b8] sm:$0xff] %v1862
      %1991 = vst [vmem:[#allocation2 + $0x2c0] sm:$0xff] %v1863
      %1992 = vst [vmem:[#allocation2 + $0x2c8] sm:$0xff] %v1864
      %1993 = vst [vmem:[#allocation2 + $0x2d0] sm:$0xff] %v1865
      %1994 = vst [vmem:[#allocation2 + $0x2d8] sm:$0xff] %v1866
      %1995 = vst [vmem:[#allocation2 + $0x2e0] sm:$0xff] %v1867
      %1996 = vst [vmem:[#allocation2 + $0x2e8] sm:$0xff] %v1868
      %1997 = vst [vmem:[#allocation2 + $0x2f0] sm:$0xff] %v1869
      %1998 = vst [vmem:[#allocation2 + $0x2f8] sm:$0xff] %v1870
      %1999 = vst [vmem:[#allocation2 + $0x300] sm:$0xff] %v1871
      %2000 = vst [vmem:[#allocation2 + $0x308] sm:$0xff] %v1872
      %2001 = vst [vmem:[#allocation2 + $0x310] sm:$0xff] %v1873
      %2002 = vst [vmem:[#allocation2 + $0x318] sm:$0xff] %v1874
      %2003 = vst [vmem:[#allocation2 + $0x320] sm:$0xff] %v1875
      %2004 = vst [vmem:[#allocation2 + $0x328] sm:$0xff] %v1876
      %2005 = vst [vmem:[#allocation2 + $0x330] sm:$0xff] %v1877
      %2006 = vst [vmem:[#allocation2 + $0x338] sm:$0xff] %v1878
      %2007 = vst [vmem:[#allocation2 + $0x340] sm:$0xff] %v1879
      %2008 = vst [vmem:[#allocation2 + $0x348] sm:$0xff] %v1880
      %2009 = vst [vmem:[#allocation2 + $0x350] sm:$0xff] %v1881
      %2010 = vst [vmem:[#allocation2 + $0x358] sm:$0xff] %v1882
      %2011 = vst [vmem:[#allocation2 + $0x360] sm:$0xff] %v1883
      %2012 = vst [vmem:[#allocation2 + $0x368] sm:$0xff] %v1884
      %2013 = vst [vmem:[#allocation2 + $0x370] sm:$0xff] %v1885
      %2014 = vst [vmem:[#allocation2 + $0x378] sm:$0xff] %v1886
      %2015 = vst [vmem:[#allocation2 + $0x380] sm:$0xff] %v1887
      %2016 = vst [vmem:[#allocation2 + $0x388] sm:$0xff] %v1888
      %2017 = vst [vmem:[#allocation2 + $0x390] sm:$0xff] %v1889
      %2018 = vst [vmem:[#allocation2 + $0x398] sm:$0xff] %v1890
      %2019 = vst [vmem:[#allocation2 + $0x3a0] sm:$0xff] %v1891
      %2020 = vst [vmem:[#allocation2 + $0x3a8] sm:$0xff] %v1892
      %2021 = vst [vmem:[#allocation2 + $0x3b0] sm:$0xff] %v1893
      %2022 = vst [vmem:[#allocation2 + $0x3b8] sm:$0xff] %v1894
      %2023 = vst [vmem:[#allocation2 + $0x3c0] sm:$0xff] %v1895
      %2024 = vst [vmem:[#allocation2 + $0x3c8] sm:$0xff] %v1896
      %2025 = vst [vmem:[#allocation2 + $0x3d0] sm:$0xff] %v1897
      %2026 = vst [vmem:[#allocation2 + $0x3d8] sm:$0xff] %v1898
      %2027 = vst [vmem:[#allocation2 + $0x3e0] sm:$0xff] %v1899
      %2028 = vst [vmem:[#allocation2 + $0x3e8] sm:$0xff] %v1900
      %2029 = vst [vmem:[#allocation2 + $0x3f0] sm:$0xff] %v1901
      %2030 = vst [vmem:[#allocation2 + $0x3f8] sm:$0xff] %v1902
      %vm2031 = vcmask 7168
      %2032 = vst.msk [vmem:[#allocation3] sm:$0xff] %vm2031, -1e+30
      %2033 = vst.msk [vmem:[#allocation3 + $0x8] sm:$0xff] %vm2031, -1e+30
      %2034 = vst.msk [vmem:[#allocation3 + $0x10] sm:$0xff] %vm2031, -1e+30
      %2035 = vst.msk [vmem:[#allocation3 + $0x18] sm:$0xff] %vm2031, -1e+30
      %2036 = vst.msk [vmem:[#allocation3 + $0x20] sm:$0xff] %vm2031, -1e+30
      %2037 = vst.msk [vmem:[#allocation3 + $0x28] sm:$0xff] %vm2031, -1e+30
      %2038 = vst.msk [vmem:[#allocation3 + $0x30] sm:$0xff] %vm2031, -1e+30
      %2039 = vst.msk [vmem:[#allocation3 + $0x38] sm:$0xff] %vm2031, -1e+30
      %2040 = vst.msk [vmem:[#allocation3 + $0x40] sm:$0xff] %vm2031, -1e+30
      %2041 = vst.msk [vmem:[#allocation3 + $0x48] sm:$0xff] %vm2031, -1e+30
      %2042 = vst.msk [vmem:[#allocation3 + $0x50] sm:$0xff] %vm2031, -1e+30
      %2043 = vst.msk [vmem:[#allocation3 + $0x58] sm:$0xff] %vm2031, -1e+30
      %2044 = vst.msk [vmem:[#allocation3 + $0x60] sm:$0xff] %vm2031, -1e+30
      %2045 = vst.msk [vmem:[#allocation3 + $0x68] sm:$0xff] %vm2031, -1e+30
      %2046 = vst.msk [vmem:[#allocation3 + $0x70] sm:$0xff] %vm2031, -1e+30
      %2047 = vst.msk [vmem:[#allocation3 + $0x78] sm:$0xff] %vm2031, -1e+30
      %2048 = vst.msk [vmem:[#allocation4] sm:$0xff] %vm2031, 0.0
      %2049 = vst.msk [vmem:[#allocation4 + $0x8] sm:$0xff] %vm2031, 0.0
      %2050 = vst.msk [vmem:[#allocation4 + $0x10] sm:$0xff] %vm2031, 0.0
      %2051 = vst.msk [vmem:[#allocation4 + $0x18] sm:$0xff] %vm2031, 0.0
      %2052 = vst.msk [vmem:[#allocation4 + $0x20] sm:$0xff] %vm2031, 0.0
      %2053 = vst.msk [vmem:[#allocation4 + $0x28] sm:$0xff] %vm2031, 0.0
      %2054 = vst.msk [vmem:[#allocation4 + $0x30] sm:$0xff] %vm2031, 0.0
      %2055 = vst.msk [vmem:[#allocation4 + $0x38] sm:$0xff] %vm2031, 0.0
      %2056 = vst.msk [vmem:[#allocation4 + $0x40] sm:$0xff] %vm2031, 0.0
      %2057 = vst.msk [vmem:[#allocation4 + $0x48] sm:$0xff] %vm2031, 0.0
      %2058 = vst.msk [vmem:[#allocation4 + $0x50] sm:$0xff] %vm2031, 0.0
      %2059 = vst.msk [vmem:[#allocation4 + $0x58] sm:$0xff] %vm2031, 0.0
      %2060 = vst.msk [vmem:[#allocation4 + $0x60] sm:$0xff] %vm2031, 0.0
      %2061 = vst.msk [vmem:[#allocation4 + $0x68] sm:$0xff] %vm2031, 0.0
      %2062 = vst.msk [vmem:[#allocation4 + $0x70] sm:$0xff] %vm2031, 0.0
      %2063 = vst.msk [vmem:[#allocation4 + $0x78] sm:$0xff] %vm2031, 0.0
      %2064 = vst.msk [vmem:[#allocation5] sm:$0xff] %vm2031, 0.0
      %2065 = vst.msk [vmem:[#allocation5 + $0x8] sm:$0xff] %vm2031, 0.0
      %2066 = vst.msk [vmem:[#allocation5 + $0x10] sm:$0xff] %vm2031, 0.0
      %2067 = vst.msk [vmem:[#allocation5 + $0x18] sm:$0xff] %vm2031, 0.0
      %2068 = vst.msk [vmem:[#allocation5 + $0x20] sm:$0xff] %vm2031, 0.0
      %2069 = vst.msk [vmem:[#allocation5 + $0x28] sm:$0xff] %vm2031, 0.0
      %2070 = vst.msk [vmem:[#allocation5 + $0x30] sm:$0xff] %vm2031, 0.0
      %2071 = vst.msk [vmem:[#allocation5 + $0x38] sm:$0xff] %vm2031, 0.0
      %2072 = vst.msk [vmem:[#allocation5 + $0x40] sm:$0xff] %vm2031, 0.0
      %2073 = vst.msk [vmem:[#allocation5 + $0x48] sm:$0xff] %vm2031, 0.0
      %2074 = vst.msk [vmem:[#allocation5 + $0x50] sm:$0xff] %vm2031, 0.0
      %2075 = vst.msk [vmem:[#allocation5 + $0x58] sm:$0xff] %vm2031, 0.0
      %2076 = vst.msk [vmem:[#allocation5 + $0x60] sm:$0xff] %vm2031, 0.0
      %2077 = vst.msk [vmem:[#allocation5 + $0x68] sm:$0xff] %vm2031, 0.0
      %2078 = vst.msk [vmem:[#allocation5 + $0x70] sm:$0xff] %vm2031, 0.0
      %2079 = vst.msk [vmem:[#allocation5 + $0x78] sm:$0xff] %vm2031, 0.0
    $region37: #{tpu_custom_call.1} parent=1 // pred_fallthru
      _
    %v2080 = vld [vmem:[#allocation2] sm:$0xff]
    %v2081 = vld [vmem:[#allocation2 + $0x8] sm:$0xff]
    %v2082 = vld [vmem:[#allocation2 + $0x10] sm:$0xff]
    %v2083 = vld [vmem:[#allocation2 + $0x18] sm:$0xff]
    %v2084 = vld [vmem:[#allocation2 + $0x20] sm:$0xff]
    %v2085 = vld [vmem:[#allocation2 + $0x28] sm:$0xff]
    %v2086 = vld [vmem:[#allocation2 + $0x30] sm:$0xff]
    %v2087 = vld [vmem:[#allocation2 + $0x38] sm:$0xff]
    %v2088 = vld [vmem:[#allocation2 + $0x40] sm:$0xff]
    %v2089 = vld [vmem:[#allocation2 + $0x48] sm:$0xff]
    %v2090 = vld [vmem:[#allocation2 + $0x50] sm:$0xff]
    %v2091 = vld [vmem:[#allocation2 + $0x58] sm:$0xff]
    %v2092 = vld [vmem:[#allocation2 + $0x60] sm:$0xff]
    %v2093 = vld [vmem:[#allocation2 + $0x68] sm:$0xff]
    %v2094 = vld [vmem:[#allocation2 + $0x70] sm:$0xff]
    %v2095 = vld [vmem:[#allocation2 + $0x78] sm:$0xff]
    %v2096 = vld [vmem:[#allocation2 + $0x80] sm:$0xff]
    %v2097 = vld [vmem:[#allocation2 + $0x88] sm:$0xff]
    %v2098 = vld [vmem:[#allocation2 + $0x90] sm:$0xff]
    %v2099 = vld [vmem:[#allocation2 + $0x98] sm:$0xff]
    %v2100 = vld [vmem:[#allocation2 + $0xa0] sm:$0xff]
    %v2101 = vld [vmem:[#allocation2 + $0xa8] sm:$0xff]
    %v2102 = vld [vmem:[#allocation2 + $0xb0] sm:$0xff]
    %v2103 = vld [vmem:[#allocation2 + $0xb8] sm:$0xff]
    %v2104 = vld [vmem:[#allocation2 + $0xc0] sm:$0xff]
    %v2105 = vld [vmem:[#allocation2 + $0xc8] sm:$0xff]
    %v2106 = vld [vmem:[#allocation2 + $0xd0] sm:$0xff]
    %v2107 = vld [vmem:[#allocation2 + $0xd8] sm:$0xff]
    %v2108 = vld [vmem:[#allocation2 + $0xe0] sm:$0xff]
    %v2109 = vld [vmem:[#allocation2 + $0xe8] sm:$0xff]
    %v2110 = vld [vmem:[#allocation2 + $0xf0] sm:$0xff]
    %v2111 = vld [vmem:[#allocation2 + $0xf8] sm:$0xff]
    %v2112 = vld [vmem:[#allocation2 + $0x100] sm:$0xff]
    %v2113 = vld [vmem:[#allocation2 + $0x108] sm:$0xff]
    %v2114 = vld [vmem:[#allocation2 + $0x110] sm:$0xff]
    %v2115 = vld [vmem:[#allocation2 + $0x118] sm:$0xff]
    %v2116 = vld [vmem:[#allocation2 + $0x120] sm:$0xff]
    %v2117 = vld [vmem:[#allocation2 + $0x128] sm:$0xff]
    %v2118 = vld [vmem:[#allocation2 + $0x130] sm:$0xff]
    %v2119 = vld [vmem:[#allocation2 + $0x138] sm:$0xff]
    %v2120 = vld [vmem:[#allocation2 + $0x140] sm:$0xff]
    %v2121 = vld [vmem:[#allocation2 + $0x148] sm:$0xff]
    %v2122 = vld [vmem:[#allocation2 + $0x150] sm:$0xff]
    %v2123 = vld [vmem:[#allocation2 + $0x158] sm:$0xff]
    %v2124 = vld [vmem:[#allocation2 + $0x160] sm:$0xff]
    %v2125 = vld [vmem:[#allocation2 + $0x168] sm:$0xff]
    %v2126 = vld [vmem:[#allocation2 + $0x170] sm:$0xff]
    %v2127 = vld [vmem:[#allocation2 + $0x178] sm:$0xff]
    %v2128 = vld [vmem:[#allocation2 + $0x180] sm:$0xff]
    %v2129 = vld [vmem:[#allocation2 + $0x188] sm:$0xff]
    %v2130 = vld [vmem:[#allocation2 + $0x190] sm:$0xff]
    %v2131 = vld [vmem:[#allocation2 + $0x198] sm:$0xff]
    %v2132 = vld [vmem:[#allocation2 + $0x1a0] sm:$0xff]
    %v2133 = vld [vmem:[#allocation2 + $0x1a8] sm:$0xff]
    %v2134 = vld [vmem:[#allocation2 + $0x1b0] sm:$0xff]
    %v2135 = vld [vmem:[#allocation2 + $0x1b8] sm:$0xff]
    %v2136 = vld [vmem:[#allocation2 + $0x1c0] sm:$0xff]
    %v2137 = vld [vmem:[#allocation2 + $0x1c8] sm:$0xff]
    %v2138 = vld [vmem:[#allocation2 + $0x1d0] sm:$0xff]
    %v2139 = vld [vmem:[#allocation2 + $0x1d8] sm:$0xff]
    %v2140 = vld [vmem:[#allocation2 + $0x1e0] sm:$0xff]
    %v2141 = vld [vmem:[#allocation2 + $0x1e8] sm:$0xff]
    %v2142 = vld [vmem:[#allocation2 + $0x1f0] sm:$0xff]
    %v2143 = vld [vmem:[#allocation2 + $0x1f8] sm:$0xff]
    %v2144 = vld [vmem:[#allocation2 + $0x200] sm:$0xff]
    %v2145 = vld [vmem:[#allocation2 + $0x208] sm:$0xff]
    %v2146 = vld [vmem:[#allocation2 + $0x210] sm:$0xff]
    %v2147 = vld [vmem:[#allocation2 + $0x218] sm:$0xff]
    %v2148 = vld [vmem:[#allocation2 + $0x220] sm:$0xff]
    %v2149 = vld [vmem:[#allocation2 + $0x228] sm:$0xff]
    %v2150 = vld [vmem:[#allocation2 + $0x230] sm:$0xff]
    %v2151 = vld [vmem:[#allocation2 + $0x238] sm:$0xff]
    %v2152 = vld [vmem:[#allocation2 + $0x240] sm:$0xff]
    %v2153 = vld [vmem:[#allocation2 + $0x248] sm:$0xff]
    %v2154 = vld [vmem:[#allocation2 + $0x250] sm:$0xff]
    %v2155 = vld [vmem:[#allocation2 + $0x258] sm:$0xff]
    %v2156 = vld [vmem:[#allocation2 + $0x260] sm:$0xff]
    %v2157 = vld [vmem:[#allocation2 + $0x268] sm:$0xff]
    %v2158 = vld [vmem:[#allocation2 + $0x270] sm:$0xff]
    %v2159 = vld [vmem:[#allocation2 + $0x278] sm:$0xff]
    %v2160 = vld [vmem:[#allocation2 + $0x280] sm:$0xff]
    %v2161 = vld [vmem:[#allocation2 + $0x288] sm:$0xff]
    %v2162 = vld [vmem:[#allocation2 + $0x290] sm:$0xff]
    %v2163 = vld [vmem:[#allocation2 + $0x298] sm:$0xff]
    %v2164 = vld [vmem:[#allocation2 + $0x2a0] sm:$0xff]
    %v2165 = vld [vmem:[#allocation2 + $0x2a8] sm:$0xff]
    %v2166 = vld [vmem:[#allocation2 + $0x2b0] sm:$0xff]
    %v2167 = vld [vmem:[#allocation2 + $0x2b8] sm:$0xff]
    %v2168 = vld [vmem:[#allocation2 + $0x2c0] sm:$0xff]
    %v2169 = vld [vmem:[#allocation2 + $0x2c8] sm:$0xff]
    %v2170 = vld [vmem:[#allocation2 + $0x2d0] sm:$0xff]
    %v2171 = vld [vmem:[#allocation2 + $0x2d8] sm:$0xff]
    %v2172 = vld [vmem:[#allocation2 + $0x2e0] sm:$0xff]
    %v2173 = vld [vmem:[#allocation2 + $0x2e8] sm:$0xff]
    %v2174 = vld [vmem:[#allocation2 + $0x2f0] sm:$0xff]
    %v2175 = vld [vmem:[#allocation2 + $0x2f8] sm:$0xff]
    %v2176 = vld [vmem:[#allocation2 + $0x300] sm:$0xff]
    %v2177 = vld [vmem:[#allocation2 + $0x308] sm:$0xff]
    %v2178 = vld [vmem:[#allocation2 + $0x310] sm:$0xff]
    %v2179 = vld [vmem:[#allocation2 + $0x318] sm:$0xff]
    %v2180 = vld [vmem:[#allocation2 + $0x320] sm:$0xff]
    %v2181 = vld [vmem:[#allocation2 + $0x328] sm:$0xff]
    %v2182 = vld [vmem:[#allocation2 + $0x330] sm:$0xff]
    %v2183 = vld [vmem:[#allocation2 + $0x338] sm:$0xff]
    %v2184 = vld [vmem:[#allocation2 + $0x340] sm:$0xff]
    %v2185 = vld [vmem:[#allocation2 + $0x348] sm:$0xff]
    %v2186 = vld [vmem:[#allocation2 + $0x350] sm:$0xff]
    %v2187 = vld [vmem:[#allocation2 + $0x358] sm:$0xff]
    %v2188 = vld [vmem:[#allocation2 + $0x360] sm:$0xff]
    %v2189 = vld [vmem:[#allocation2 + $0x368] sm:$0xff]
    %v2190 = vld [vmem:[#allocation2 + $0x370] sm:$0xff]
    %v2191 = vld [vmem:[#allocation2 + $0x378] sm:$0xff]
    %v2192 = vld [vmem:[#allocation2 + $0x380] sm:$0xff]
    %v2193 = vld [vmem:[#allocation2 + $0x388] sm:$0xff]
    %v2194 = vld [vmem:[#allocation2 + $0x390] sm:$0xff]
    %v2195 = vld [vmem:[#allocation2 + $0x398] sm:$0xff]
    %v2196 = vld [vmem:[#allocation2 + $0x3a0] sm:$0xff]
    %v2197 = vld [vmem:[#allocation2 + $0x3a8] sm:$0xff]
    %v2198 = vld [vmem:[#allocation2 + $0x3b0] sm:$0xff]
    %v2199 = vld [vmem:[#allocation2 + $0x3b8] sm:$0xff]
    %v2200 = vld [vmem:[#allocation2 + $0x3c0] sm:$0xff]
    %v2201 = vld [vmem:[#allocation2 + $0x3c8] sm:$0xff]
    %v2202 = vld [vmem:[#allocation2 + $0x3d0] sm:$0xff]
    %v2203 = vld [vmem:[#allocation2 + $0x3d8] sm:$0xff]
    %v2204 = vld [vmem:[#allocation2 + $0x3e0] sm:$0xff]
    %v2205 = vld [vmem:[#allocation2 + $0x3e8] sm:$0xff]
    %v2206 = vld [vmem:[#allocation2 + $0x3f0] sm:$0xff]
    %v2207 = vld [vmem:[#allocation2 + $0x3f8] sm:$0xff]
    %v2208 = vld [vmem:[#allocation6] sm:$0xf]
    %v2209 = vld [vmem:[#allocation6 + $0x4] sm:$0xf]
    %v2210 = vld [vmem:[#allocation6 + $0x8] sm:$0xf]
    %v2211 = vld [vmem:[#allocation6 + $0xc] sm:$0xf]
    %v2212 = vld [vmem:[#allocation6 + $0x10] sm:$0xf]
    %v2213 = vld [vmem:[#allocation6 + $0x14] sm:$0xf]
    %v2214 = vld [vmem:[#allocation6 + $0x18] sm:$0xf]
    %v2215 = vld [vmem:[#allocation6 + $0x1c] sm:$0xf]
    %v2216 = vld [vmem:[#allocation6 + $0x20] sm:$0xf]
    %v2217 = vld [vmem:[#allocation6 + $0x24] sm:$0xf]
    %v2218 = vld [vmem:[#allocation6 + $0x28] sm:$0xf]
    %v2219 = vld [vmem:[#allocation6 + $0x2c] sm:$0xf]
    %v2220 = vld [vmem:[#allocation6 + $0x30] sm:$0xf]
    %v2221 = vld [vmem:[#allocation6 + $0x34] sm:$0xf]
    %v2222 = vld [vmem:[#allocation6 + $0x38] sm:$0xf]
    %v2223 = vld [vmem:[#allocation6 + $0x3c] sm:$0xf]
    %v2224 = vld [vmem:[#allocation6 + $0x40] sm:$0xf]
    %v2225 = vld [vmem:[#allocation6 + $0x44] sm:$0xf]
    %v2226 = vld [vmem:[#allocation6 + $0x48] sm:$0xf]
    %v2227 = vld [vmem:[#allocation6 + $0x4c] sm:$0xf]
    %v2228 = vld [vmem:[#allocation6 + $0x50] sm:$0xf]
    %v2229 = vld [vmem:[#allocation6 + $0x54] sm:$0xf]
    %v2230 = vld [vmem:[#allocation6 + $0x58] sm:$0xf]
    %v2231 = vld [vmem:[#allocation6 + $0x5c] sm:$0xf]
    %v2232 = vld [vmem:[#allocation6 + $0x60] sm:$0xf]
    %v2233 = vld [vmem:[#allocation6 + $0x64] sm:$0xf]
    %v2234 = vld [vmem:[#allocation6 + $0x68] sm:$0xf]
    %v2235 = vld [vmem:[#allocation6 + $0x6c] sm:$0xf]
    %v2236 = vld [vmem:[#allocation6 + $0x70] sm:$0xf]
    %v2237 = vld [vmem:[#allocation6 + $0x74] sm:$0xf]
    %v2238 = vld [vmem:[#allocation6 + $0x78] sm:$0xf]
    %v2239 = vld [vmem:[#allocation6 + $0x7c] sm:$0xf]
    %v2240 = vld [vmem:[#allocation6 + $0x80] sm:$0xf]
    %v2241 = vld [vmem:[#allocation6 + $0x84] sm:$0xf]
    %v2242 = vld [vmem:[#allocation6 + $0x88] sm:$0xf]
    %v2243 = vld [vmem:[#allocation6 + $0x8c] sm:$0xf]
    %v2244 = vld [vmem:[#allocation6 + $0x90] sm:$0xf]
    %v2245 = vld [vmem:[#allocation6 + $0x94] sm:$0xf]
    %v2246 = vld [vmem:[#allocation6 + $0x98] sm:$0xf]
    %v2247 = vld [vmem:[#allocation6 + $0x9c] sm:$0xf]
    %v2248 = vld [vmem:[#allocation6 + $0xa0] sm:$0xf]
    %v2249 = vld [vmem:[#allocation6 + $0xa4] sm:$0xf]
    %v2250 = vld [vmem:[#allocation6 + $0xa8] sm:$0xf]
    %v2251 = vld [vmem:[#allocation6 + $0xac] sm:$0xf]
    %v2252 = vld [vmem:[#allocation6 + $0xb0] sm:$0xf]
    %v2253 = vld [vmem:[#allocation6 + $0xb4] sm:$0xf]
    %v2254 = vld [vmem:[#allocation6 + $0xb8] sm:$0xf]
    %v2255 = vld [vmem:[#allocation6 + $0xbc] sm:$0xf]
    %v2256 = vld [vmem:[#allocation6 + $0xc0] sm:$0xf]
    %v2257 = vld [vmem:[#allocation6 + $0xc4] sm:$0xf]
    %v2258 = vld [vmem:[#allocation6 + $0xc8] sm:$0xf]
    %v2259 = vld [vmem:[#allocation6 + $0xcc] sm:$0xf]
    %v2260 = vld [vmem:[#allocation6 + $0xd0] sm:$0xf]
    %v2261 = vld [vmem:[#allocation6 + $0xd4] sm:$0xf]
    %v2262 = vld [vmem:[#allocation6 + $0xd8] sm:$0xf]
    %v2263 = vld [vmem:[#allocation6 + $0xdc] sm:$0xf]
    %v2264 = vld [vmem:[#allocation6 + $0xe0] sm:$0xf]
    %v2265 = vld [vmem:[#allocation6 + $0xe4] sm:$0xf]
    %v2266 = vld [vmem:[#allocation6 + $0xe8] sm:$0xf]
    %v2267 = vld [vmem:[#allocation6 + $0xec] sm:$0xf]
    %v2268 = vld [vmem:[#allocation6 + $0xf0] sm:$0xf]
    %v2269 = vld [vmem:[#allocation6 + $0xf4] sm:$0xf]
    %v2270 = vld [vmem:[#allocation6 + $0xf8] sm:$0xf]
    %v2271 = vld [vmem:[#allocation6 + $0xfc] sm:$0xf]
    %v2272 = vld [vmem:[#allocation6 + $0x100] sm:$0xf]
    %v2273 = vld [vmem:[#allocation6 + $0x104] sm:$0xf]
    %v2274 = vld [vmem:[#allocation6 + $0x108] sm:$0xf]
    %v2275 = vld [vmem:[#allocation6 + $0x10c] sm:$0xf]
    %v2276 = vld [vmem:[#allocation6 + $0x110] sm:$0xf]
    %v2277 = vld [vmem:[#allocation6 + $0x114] sm:$0xf]
    %v2278 = vld [vmem:[#allocation6 + $0x118] sm:$0xf]
    %v2279 = vld [vmem:[#allocation6 + $0x11c] sm:$0xf]
    %v2280 = vld [vmem:[#allocation6 + $0x120] sm:$0xf]
    %v2281 = vld [vmem:[#allocation6 + $0x124] sm:$0xf]
    %v2282 = vld [vmem:[#allocation6 + $0x128] sm:$0xf]
    %v2283 = vld [vmem:[#allocation6 + $0x12c] sm:$0xf]
    %v2284 = vld [vmem:[#allocation6 + $0x130] sm:$0xf]
    %v2285 = vld [vmem:[#allocation6 + $0x134] sm:$0xf]
    %v2286 = vld [vmem:[#allocation6 + $0x138] sm:$0xf]
    %v2287 = vld [vmem:[#allocation6 + $0x13c] sm:$0xf]
    %v2288 = vld [vmem:[#allocation6 + $0x140] sm:$0xf]
    %v2289 = vld [vmem:[#allocation6 + $0x144] sm:$0xf]
    %v2290 = vld [vmem:[#allocation6 + $0x148] sm:$0xf]
    %v2291 = vld [vmem:[#allocation6 + $0x14c] sm:$0xf]
    %v2292 = vld [vmem:[#allocation6 + $0x150] sm:$0xf]
    %v2293 = vld [vmem:[#allocation6 + $0x154] sm:$0xf]
    %v2294 = vld [vmem:[#allocation6 + $0x158] sm:$0xf]
    %v2295 = vld [vmem:[#allocation6 + $0x15c] sm:$0xf]
    %v2296 = vld [vmem:[#allocation6 + $0x160] sm:$0xf]
    %v2297 = vld [vmem:[#allocation6 + $0x164] sm:$0xf]
    %v2298 = vld [vmem:[#allocation6 + $0x168] sm:$0xf]
    %v2299 = vld [vmem:[#allocation6 + $0x16c] sm:$0xf]
    %v2300 = vld [vmem:[#allocation6 + $0x170] sm:$0xf]
    %v2301 = vld [vmem:[#allocation6 + $0x174] sm:$0xf]
    %v2302 = vld [vmem:[#allocation6 + $0x178] sm:$0xf]
    %v2303 = vld [vmem:[#allocation6 + $0x17c] sm:$0xf]
    %v2304 = vld [vmem:[#allocation6 + $0x180] sm:$0xf]
    %v2305 = vld [vmem:[#allocation6 + $0x184] sm:$0xf]
    %v2306 = vld [vmem:[#allocation6 + $0x188] sm:$0xf]
    %v2307 = vld [vmem:[#allocation6 + $0x18c] sm:$0xf]
    %v2308 = vld [vmem:[#allocation6 + $0x190] sm:$0xf]
    %v2309 = vld [vmem:[#allocation6 + $0x194] sm:$0xf]
    %v2310 = vld [vmem:[#allocation6 + $0x198] sm:$0xf]
    %v2311 = vld [vmem:[#allocation6 + $0x19c] sm:$0xf]
    %v2312 = vld [vmem:[#allocation6 + $0x1a0] sm:$0xf]
    %v2313 = vld [vmem:[#allocation6 + $0x1a4] sm:$0xf]
    %v2314 = vld [vmem:[#allocation6 + $0x1a8] sm:$0xf]
    %v2315 = vld [vmem:[#allocation6 + $0x1ac] sm:$0xf]
    %v2316 = vld [vmem:[#allocation6 + $0x1b0] sm:$0xf]
    %v2317 = vld [vmem:[#allocation6 + $0x1b4] sm:$0xf]
    %v2318 = vld [vmem:[#allocation6 + $0x1b8] sm:$0xf]
    %v2319 = vld [vmem:[#allocation6 + $0x1bc] sm:$0xf]
    %v2320 = vld [vmem:[#allocation6 + $0x1c0] sm:$0xf]
    %v2321 = vld [vmem:[#allocation6 + $0x1c4] sm:$0xf]
    %v2322 = vld [vmem:[#allocation6 + $0x1c8] sm:$0xf]
    %v2323 = vld [vmem:[#allocation6 + $0x1cc] sm:$0xf]
    %v2324 = vld [vmem:[#allocation6 + $0x1d0] sm:$0xf]
    %v2325 = vld [vmem:[#allocation6 + $0x1d4] sm:$0xf]
    %v2326 = vld [vmem:[#allocation6 + $0x1d8] sm:$0xf]
    %v2327 = vld [vmem:[#allocation6 + $0x1dc] sm:$0xf]
    %v2328 = vld [vmem:[#allocation6 + $0x1e0] sm:$0xf]
    %v2329 = vld [vmem:[#allocation6 + $0x1e4] sm:$0xf]
    %v2330 = vld [vmem:[#allocation6 + $0x1e8] sm:$0xf]
    %v2331 = vld [vmem:[#allocation6 + $0x1ec] sm:$0xf]
    %v2332 = vld [vmem:[#allocation6 + $0x1f0] sm:$0xf]
    %v2333 = vld [vmem:[#allocation6 + $0x1f4] sm:$0xf]
    %v2334 = vld [vmem:[#allocation6 + $0x1f8] sm:$0xf]
    %v2335 = vld [vmem:[#allocation6 + $0x1fc] sm:$0xf]
    %v2336 = vld [vmem:[#allocation6 + $0x200] sm:$0xf]
    %v2337 = vld [vmem:[#allocation6 + $0x204] sm:$0xf]
    %v2338 = vld [vmem:[#allocation6 + $0x208] sm:$0xf]
    %v2339 = vld [vmem:[#allocation6 + $0x20c] sm:$0xf]
    %v2340 = vld [vmem:[#allocation6 + $0x210] sm:$0xf]
    %v2341 = vld [vmem:[#allocation6 + $0x214] sm:$0xf]
    %v2342 = vld [vmem:[#allocation6 + $0x218] sm:$0xf]
    %v2343 = vld [vmem:[#allocation6 + $0x21c] sm:$0xf]
    %v2344 = vld [vmem:[#allocation6 + $0x220] sm:$0xf]
    %v2345 = vld [vmem:[#allocation6 + $0x224] sm:$0xf]
    %v2346 = vld [vmem:[#allocation6 + $0x228] sm:$0xf]
    %v2347 = vld [vmem:[#allocation6 + $0x22c] sm:$0xf]
    %v2348 = vld [vmem:[#allocation6 + $0x230] sm:$0xf]
    %v2349 = vld [vmem:[#allocation6 + $0x234] sm:$0xf]
    %v2350 = vld [vmem:[#allocation6 + $0x238] sm:$0xf]
    %v2351 = vld [vmem:[#allocation6 + $0x23c] sm:$0xf]
    %v2352 = vld [vmem:[#allocation6 + $0x240] sm:$0xf]
    %v2353 = vld [vmem:[#allocation6 + $0x244] sm:$0xf]
    %v2354 = vld [vmem:[#allocation6 + $0x248] sm:$0xf]
    %v2355 = vld [vmem:[#allocation6 + $0x24c] sm:$0xf]
    %v2356 = vld [vmem:[#allocation6 + $0x250] sm:$0xf]
    %v2357 = vld [vmem:[#allocation6 + $0x254] sm:$0xf]
    %v2358 = vld [vmem:[#allocation6 + $0x258] sm:$0xf]
    %v2359 = vld [vmem:[#allocation6 + $0x25c] sm:$0xf]
    %v2360 = vld [vmem:[#allocation6 + $0x260] sm:$0xf]
    %v2361 = vld [vmem:[#allocation6 + $0x264] sm:$0xf]
    %v2362 = vld [vmem:[#allocation6 + $0x268] sm:$0xf]
    %v2363 = vld [vmem:[#allocation6 + $0x26c] sm:$0xf]
    %v2364 = vld [vmem:[#allocation6 + $0x270] sm:$0xf]
    %v2365 = vld [vmem:[#allocation6 + $0x274] sm:$0xf]
    %v2366 = vld [vmem:[#allocation6 + $0x278] sm:$0xf]
    %v2367 = vld [vmem:[#allocation6 + $0x27c] sm:$0xf]
    %v2368 = vld [vmem:[#allocation6 + $0x280] sm:$0xf]
    %v2369 = vld [vmem:[#allocation6 + $0x284] sm:$0xf]
    %v2370 = vld [vmem:[#allocation6 + $0x288] sm:$0xf]
    %v2371 = vld [vmem:[#allocation6 + $0x28c] sm:$0xf]
    %v2372 = vld [vmem:[#allocation6 + $0x290] sm:$0xf]
    %v2373 = vld [vmem:[#allocation6 + $0x294] sm:$0xf]
    %v2374 = vld [vmem:[#allocation6 + $0x298] sm:$0xf]
    %v2375 = vld [vmem:[#allocation6 + $0x29c] sm:$0xf]
    %v2376 = vld [vmem:[#allocation6 + $0x2a0] sm:$0xf]
    %v2377 = vld [vmem:[#allocation6 + $0x2a4] sm:$0xf]
    %v2378 = vld [vmem:[#allocation6 + $0x2a8] sm:$0xf]
    %v2379 = vld [vmem:[#allocation6 + $0x2ac] sm:$0xf]
    %v2380 = vld [vmem:[#allocation6 + $0x2b0] sm:$0xf]
    %v2381 = vld [vmem:[#allocation6 + $0x2b4] sm:$0xf]
    %v2382 = vld [vmem:[#allocation6 + $0x2b8] sm:$0xf]
    %v2383 = vld [vmem:[#allocation6 + $0x2bc] sm:$0xf]
    %v2384 = vld [vmem:[#allocation6 + $0x2c0] sm:$0xf]
    %v2385 = vld [vmem:[#allocation6 + $0x2c4] sm:$0xf]
    %v2386 = vld [vmem:[#allocation6 + $0x2c8] sm:$0xf]
    %v2387 = vld [vmem:[#allocation6 + $0x2cc] sm:$0xf]
    %v2388 = vld [vmem:[#allocation6 + $0x2d0] sm:$0xf]
    %v2389 = vld [vmem:[#allocation6 + $0x2d4] sm:$0xf]
    %v2390 = vld [vmem:[#allocation6 + $0x2d8] sm:$0xf]
    %v2391 = vld [vmem:[#allocation6 + $0x2dc] sm:$0xf]
    %v2392 = vld [vmem:[#allocation6 + $0x2e0] sm:$0xf]
    %v2393 = vld [vmem:[#allocation6 + $0x2e4] sm:$0xf]
    %v2394 = vld [vmem:[#allocation6 + $0x2e8] sm:$0xf]
    %v2395 = vld [vmem:[#allocation6 + $0x2ec] sm:$0xf]
    %v2396 = vld [vmem:[#allocation6 + $0x2f0] sm:$0xf]
    %v2397 = vld [vmem:[#allocation6 + $0x2f4] sm:$0xf]
    %v2398 = vld [vmem:[#allocation6 + $0x2f8] sm:$0xf]
    %v2399 = vld [vmem:[#allocation6 + $0x2fc] sm:$0xf]
    %v2400 = vld [vmem:[#allocation6 + $0x300] sm:$0xf]
    %v2401 = vld [vmem:[#allocation6 + $0x304] sm:$0xf]
    %v2402 = vld [vmem:[#allocation6 + $0x308] sm:$0xf]
    %v2403 = vld [vmem:[#allocation6 + $0x30c] sm:$0xf]
    %v2404 = vld [vmem:[#allocation6 + $0x310] sm:$0xf]
    %v2405 = vld [vmem:[#allocation6 + $0x314] sm:$0xf]
    %v2406 = vld [vmem:[#allocation6 + $0x318] sm:$0xf]
    %v2407 = vld [vmem:[#allocation6 + $0x31c] sm:$0xf]
    %v2408 = vld [vmem:[#allocation6 + $0x320] sm:$0xf]
    %v2409 = vld [vmem:[#allocation6 + $0x324] sm:$0xf]
    %v2410 = vld [vmem:[#allocation6 + $0x328] sm:$0xf]
    %v2411 = vld [vmem:[#allocation6 + $0x32c] sm:$0xf]
    %v2412 = vld [vmem:[#allocation6 + $0x330] sm:$0xf]
    %v2413 = vld [vmem:[#allocation6 + $0x334] sm:$0xf]
    %v2414 = vld [vmem:[#allocation6 + $0x338] sm:$0xf]
    %v2415 = vld [vmem:[#allocation6 + $0x33c] sm:$0xf]
    %v2416 = vld [vmem:[#allocation6 + $0x340] sm:$0xf]
    %v2417 = vld [vmem:[#allocation6 + $0x344] sm:$0xf]
    %v2418 = vld [vmem:[#allocation6 + $0x348] sm:$0xf]
    %v2419 = vld [vmem:[#allocation6 + $0x34c] sm:$0xf]
    %v2420 = vld [vmem:[#allocation6 + $0x350] sm:$0xf]
    %v2421 = vld [vmem:[#allocation6 + $0x354] sm:$0xf]
    %v2422 = vld [vmem:[#allocation6 + $0x358] sm:$0xf]
    %v2423 = vld [vmem:[#allocation6 + $0x35c] sm:$0xf]
    %v2424 = vld [vmem:[#allocation6 + $0x360] sm:$0xf]
    %v2425 = vld [vmem:[#allocation6 + $0x364] sm:$0xf]
    %v2426 = vld [vmem:[#allocation6 + $0x368] sm:$0xf]
    %v2427 = vld [vmem:[#allocation6 + $0x36c] sm:$0xf]
    %v2428 = vld [vmem:[#allocation6 + $0x370] sm:$0xf]
    %v2429 = vld [vmem:[#allocation6 + $0x374] sm:$0xf]
    %v2430 = vld [vmem:[#allocation6 + $0x378] sm:$0xf]
    %v2431 = vld [vmem:[#allocation6 + $0x37c] sm:$0xf]
    %v2432 = vld [vmem:[#allocation6 + $0x380] sm:$0xf]
    %v2433 = vld [vmem:[#allocation6 + $0x384] sm:$0xf]
    %v2434 = vld [vmem:[#allocation6 + $0x388] sm:$0xf]
    %v2435 = vld [vmem:[#allocation6 + $0x38c] sm:$0xf]
    %v2436 = vld [vmem:[#allocation6 + $0x390] sm:$0xf]
    %v2437 = vld [vmem:[#allocation6 + $0x394] sm:$0xf]
    %v2438 = vld [vmem:[#allocation6 + $0x398] sm:$0xf]
    %v2439 = vld [vmem:[#allocation6 + $0x39c] sm:$0xf]
    %v2440 = vld [vmem:[#allocation6 + $0x3a0] sm:$0xf]
    %v2441 = vld [vmem:[#allocation6 + $0x3a4] sm:$0xf]
    %v2442 = vld [vmem:[#allocation6 + $0x3a8] sm:$0xf]
    %v2443 = vld [vmem:[#allocation6 + $0x3ac] sm:$0xf]
    %v2444 = vld [vmem:[#allocation6 + $0x3b0] sm:$0xf]
    %v2445 = vld [vmem:[#allocation6 + $0x3b4] sm:$0xf]
    %v2446 = vld [vmem:[#allocation6 + $0x3b8] sm:$0xf]
    %v2447 = vld [vmem:[#allocation6 + $0x3bc] sm:$0xf]
    %v2448 = vld [vmem:[#allocation6 + $0x3c0] sm:$0xf]
    %v2449 = vld [vmem:[#allocation6 + $0x3c4] sm:$0xf]
    %v2450 = vld [vmem:[#allocation6 + $0x3c8] sm:$0xf]
    %v2451 = vld [vmem:[#allocation6 + $0x3cc] sm:$0xf]
    %v2452 = vld [vmem:[#allocation6 + $0x3d0] sm:$0xf]
    %v2453 = vld [vmem:[#allocation6 + $0x3d4] sm:$0xf]
    %v2454 = vld [vmem:[#allocation6 + $0x3d8] sm:$0xf]
    %v2455 = vld [vmem:[#allocation6 + $0x3dc] sm:$0xf]
    %v2456 = vld [vmem:[#allocation6 + $0x3e0] sm:$0xf]
    %v2457 = vld [vmem:[#allocation6 + $0x3e4] sm:$0xf]
    %v2458 = vld [vmem:[#allocation6 + $0x3e8] sm:$0xf]
    %v2459 = vld [vmem:[#allocation6 + $0x3ec] sm:$0xf]
    %v2460 = vld [vmem:[#allocation6 + $0x3f0] sm:$0xf]
    %v2461 = vld [vmem:[#allocation6 + $0x3f4] sm:$0xf]
    %v2462 = vld [vmem:[#allocation6 + $0x3f8] sm:$0xf]
    %v2463 = vld [vmem:[#allocation6 + $0x3fc] sm:$0xf]
    %v2464 = vld [vmem:[%s6] sm:$0x1]
    %v2466 = vlaneseq
    %v2467 = vshrl.u32 %v2466, 7
    %v2468 = vsub.s32 0, %v2467
    %v2469 = vrot.slane %v2464, %v2468
    %v2727 = vunpack.c.l.b16 %v2208
    %v2728 = vunpack.c.l.b16 %v2209
    %v2729 = vunpack.c.l.b16 %v2210
    %v2730 = vunpack.c.l.b16 %v2211
    %v2731 = vunpack.c.l.b16 %v2212
    %v2732 = vunpack.c.l.b16 %v2213
    %v2733 = vunpack.c.l.b16 %v2214
    %v2734 = vunpack.c.l.b16 %v2215
    %v2735 = vunpack.c.l.b16 %v2216
    %v2736 = vunpack.c.l.b16 %v2217
    %v2737 = vunpack.c.l.b16 %v2218
    %v2738 = vunpack.c.l.b16 %v2219
    %v2739 = vunpack.c.l.b16 %v2220
    %v2740 = vunpack.c.l.b16 %v2221
    %v2741 = vunpack.c.l.b16 %v2222
    %v2742 = vunpack.c.l.b16 %v2223
    %v2743 = vunpack.c.l.b16 %v2224
    %v2744 = vunpack.c.l.b16 %v2225
    %v2745 = vunpack.c.l.b16 %v2226
    %v2746 = vunpack.c.l.b16 %v2227
    %v2747 = vunpack.c.l.b16 %v2228
    %v2748 = vunpack.c.l.b16 %v2229
    %v2749 = vunpack.c.l.b16 %v2230
    %v2750 = vunpack.c.l.b16 %v2231
    %v2751 = vunpack.c.l.b16 %v2232
    %v2752 = vunpack.c.l.b16 %v2233
    %v2753 = vunpack.c.l.b16 %v2234
    %v2754 = vunpack.c.l.b16 %v2235
    %v2755 = vunpack.c.l.b16 %v2236
    %v2756 = vunpack.c.l.b16 %v2237
    %v2757 = vunpack.c.l.b16 %v2238
    %v2758 = vunpack.c.l.b16 %v2239
    %v2759 = vunpack.c.l.b16 %v2240
    %v2760 = vunpack.c.l.b16 %v2241
    %v2761 = vunpack.c.l.b16 %v2242
    %v2762 = vunpack.c.l.b16 %v2243
    %v2763 = vunpack.c.l.b16 %v2244
    %v2764 = vunpack.c.l.b16 %v2245
    %v2765 = vunpack.c.l.b16 %v2246
    %v2766 = vunpack.c.l.b16 %v2247
    %v2767 = vunpack.c.l.b16 %v2248
    %v2768 = vunpack.c.l.b16 %v2249
    %v2769 = vunpack.c.l.b16 %v2250
    %v2770 = vunpack.c.l.b16 %v2251
    %v2771 = vunpack.c.l.b16 %v2252
    %v2772 = vunpack.c.l.b16 %v2253
    %v2773 = vunpack.c.l.b16 %v2254
    %v2774 = vunpack.c.l.b16 %v2255
    %v2775 = vunpack.c.l.b16 %v2256
    %v2776 = vunpack.c.l.b16 %v2257
    %v2777 = vunpack.c.l.b16 %v2258
    %v2778 = vunpack.c.l.b16 %v2259
    %v2779 = vunpack.c.l.b16 %v2260
    %v2780 = vunpack.c.l.b16 %v2261
    %v2781 = vunpack.c.l.b16 %v2262
    %v2782 = vunpack.c.l.b16 %v2263
    %v2783 = vunpack.c.l.b16 %v2264
    %v2784 = vunpack.c.l.b16 %v2265
    %v2785 = vunpack.c.l.b16 %v2266
    %v2786 = vunpack.c.l.b16 %v2267
    %v2787 = vunpack.c.l.b16 %v2268
    %v2788 = vunpack.c.l.b16 %v2269
    %v2789 = vunpack.c.l.b16 %v2270
    %v2790 = vunpack.c.l.b16 %v2271
    %v2791 = vunpack.c.l.b16 %v2272
    %v2792 = vunpack.c.l.b16 %v2273
    %v2793 = vunpack.c.l.b16 %v2274
    %v2794 = vunpack.c.l.b16 %v2275
    %v2795 = vunpack.c.l.b16 %v2276
    %v2796 = vunpack.c.l.b16 %v2277
    %v2797 = vunpack.c.l.b16 %v2278
    %v2798 = vunpack.c.l.b16 %v2279
    %v2799 = vunpack.c.l.b16 %v2280
    %v2800 = vunpack.c.l.b16 %v2281
    %v2801 = vunpack.c.l.b16 %v2282
    %v2802 = vunpack.c.l.b16 %v2283
    %v2803 = vunpack.c.l.b16 %v2284
    %v2804 = vunpack.c.l.b16 %v2285
    %v2805 = vunpack.c.l.b16 %v2286
    %v2806 = vunpack.c.l.b16 %v2287
    %v2807 = vunpack.c.l.b16 %v2288
    %v2808 = vunpack.c.l.b16 %v2289
    %v2809 = vunpack.c.l.b16 %v2290
    %v2810 = vunpack.c.l.b16 %v2291
    %v2811 = vunpack.c.l.b16 %v2292
    %v2812 = vunpack.c.l.b16 %v2293
    %v2813 = vunpack.c.l.b16 %v2294
    %v2814 = vunpack.c.l.b16 %v2295
    %v2815 = vunpack.c.l.b16 %v2296
    %v2816 = vunpack.c.l.b16 %v2297
    %v2817 = vunpack.c.l.b16 %v2298
    %v2818 = vunpack.c.l.b16 %v2299
    %v2819 = vunpack.c.l.b16 %v2300
    %v2820 = vunpack.c.l.b16 %v2301
    %v2821 = vunpack.c.l.b16 %v2302
    %v2822 = vunpack.c.l.b16 %v2303
    %v2823 = vunpack.c.l.b16 %v2304
    %v2824 = vunpack.c.l.b16 %v2305
    %v2825 = vunpack.c.l.b16 %v2306
    %v2826 = vunpack.c.l.b16 %v2307
    %v2827 = vunpack.c.l.b16 %v2308
    %v2828 = vunpack.c.l.b16 %v2309
    %v2829 = vunpack.c.l.b16 %v2310
    %v2830 = vunpack.c.l.b16 %v2311
    %v2831 = vunpack.c.l.b16 %v2312
    %v2832 = vunpack.c.l.b16 %v2313
    %v2833 = vunpack.c.l.b16 %v2314
    %v2834 = vunpack.c.l.b16 %v2315
    %v2835 = vunpack.c.l.b16 %v2316
    %v2836 = vunpack.c.l.b16 %v2317
    %v2837 = vunpack.c.l.b16 %v2318
    %v2838 = vunpack.c.l.b16 %v2319
    %v2839 = vunpack.c.l.b16 %v2320
    %v2840 = vunpack.c.l.b16 %v2321
    %v2841 = vunpack.c.l.b16 %v2322
    %v2842 = vunpack.c.l.b16 %v2323
    %v2843 = vunpack.c.l.b16 %v2324
    %v2844 = vunpack.c.l.b16 %v2325
    %v2845 = vunpack.c.l.b16 %v2326
    %v2846 = vunpack.c.l.b16 %v2327
    %v2847 = vunpack.c.l.b16 %v2328
    %v2848 = vunpack.c.l.b16 %v2329
    %v2849 = vunpack.c.l.b16 %v2330
    %v2850 = vunpack.c.l.b16 %v2331
    %v2851 = vunpack.c.l.b16 %v2332
    %v2852 = vunpack.c.l.b16 %v2333
    %v2853 = vunpack.c.l.b16 %v2334
    %v2854 = vunpack.c.l.b16 %v2335
    %v2855 = vunpack.c.l.b16 %v2336
    %v2856 = vunpack.c.l.b16 %v2337
    %v2857 = vunpack.c.l.b16 %v2338
    %v2858 = vunpack.c.l.b16 %v2339
    %v2859 = vunpack.c.l.b16 %v2340
    %v2860 = vunpack.c.l.b16 %v2341
    %v2861 = vunpack.c.l.b16 %v2342
    %v2862 = vunpack.c.l.b16 %v2343
    %v2863 = vunpack.c.l.b16 %v2344
    %v2864 = vunpack.c.l.b16 %v2345
    %v2865 = vunpack.c.l.b16 %v2346
    %v2866 = vunpack.c.l.b16 %v2347
    %v2867 = vunpack.c.l.b16 %v2348
    %v2868 = vunpack.c.l.b16 %v2349
    %v2869 = vunpack.c.l.b16 %v2350
    %v2870 = vunpack.c.l.b16 %v2351
    %v2871 = vunpack.c.l.b16 %v2352
    %v2872 = vunpack.c.l.b16 %v2353
    %v2873 = vunpack.c.l.b16 %v2354
    %v2874 = vunpack.c.l.b16 %v2355
    %v2875 = vunpack.c.l.b16 %v2356
    %v2876 = vunpack.c.l.b16 %v2357
    %v2877 = vunpack.c.l.b16 %v2358
    %v2878 = vunpack.c.l.b16 %v2359
    %v2879 = vunpack.c.l.b16 %v2360
    %v2880 = vunpack.c.l.b16 %v2361
    %v2881 = vunpack.c.l.b16 %v2362
    %v2882 = vunpack.c.l.b16 %v2363
    %v2883 = vunpack.c.l.b16 %v2364
    %v2884 = vunpack.c.l.b16 %v2365
    %v2885 = vunpack.c.l.b16 %v2366
    %v2886 = vunpack.c.l.b16 %v2367
    %v2887 = vunpack.c.l.b16 %v2368
    %v2888 = vunpack.c.l.b16 %v2369
    %v2889 = vunpack.c.l.b16 %v2370
    %v2890 = vunpack.c.l.b16 %v2371
    %v2891 = vunpack.c.l.b16 %v2372
    %v2892 = vunpack.c.l.b16 %v2373
    %v2893 = vunpack.c.l.b16 %v2374
    %v2894 = vunpack.c.l.b16 %v2375
    %v2895 = vunpack.c.l.b16 %v2376
    %v2896 = vunpack.c.l.b16 %v2377
    %v2897 = vunpack.c.l.b16 %v2378
    %v2898 = vunpack.c.l.b16 %v2379
    %v2899 = vunpack.c.l.b16 %v2380
    %v2900 = vunpack.c.l.b16 %v2381
    %v2901 = vunpack.c.l.b16 %v2382
    %v2902 = vunpack.c.l.b16 %v2383
    %v2903 = vunpack.c.l.b16 %v2384
    %v2904 = vunpack.c.l.b16 %v2385
    %v2905 = vunpack.c.l.b16 %v2386
    %v2906 = vunpack.c.l.b16 %v2387
    %v2907 = vunpack.c.l.b16 %v2388
    %v2908 = vunpack.c.l.b16 %v2389
    %v2909 = vunpack.c.l.b16 %v2390
    %v2910 = vunpack.c.l.b16 %v2391
    %v2911 = vunpack.c.l.b16 %v2392
    %v2912 = vunpack.c.l.b16 %v2393
    %v2913 = vunpack.c.l.b16 %v2394
    %v2914 = vunpack.c.l.b16 %v2395
    %v2915 = vunpack.c.l.b16 %v2396
    %v2916 = vunpack.c.l.b16 %v2397
    %v2917 = vunpack.c.l.b16 %v2398
    %v2918 = vunpack.c.l.b16 %v2399
    %v2919 = vunpack.c.l.b16 %v2400
    %v2920 = vunpack.c.l.b16 %v2401
    %v2921 = vunpack.c.l.b16 %v2402
    %v2922 = vunpack.c.l.b16 %v2403
    %v2923 = vunpack.c.l.b16 %v2404
    %v2924 = vunpack.c.l.b16 %v2405
    %v2925 = vunpack.c.l.b16 %v2406
    %v2926 = vunpack.c.l.b16 %v2407
    %v2927 = vunpack.c.l.b16 %v2408
    %v2928 = vunpack.c.l.b16 %v2409
    %v2929 = vunpack.c.l.b16 %v2410
    %v2930 = vunpack.c.l.b16 %v2411
    %v2931 = vunpack.c.l.b16 %v2412
    %v2932 = vunpack.c.l.b16 %v2413
    %v2933 = vunpack.c.l.b16 %v2414
    %v2934 = vunpack.c.l.b16 %v2415
    %v2935 = vunpack.c.l.b16 %v2416
    %v2936 = vunpack.c.l.b16 %v2417
    %v2937 = vunpack.c.l.b16 %v2418
    %v2938 = vunpack.c.l.b16 %v2419
    %v2939 = vunpack.c.l.b16 %v2420
    %v2940 = vunpack.c.l.b16 %v2421
    %v2941 = vunpack.c.l.b16 %v2422
    %v2942 = vunpack.c.l.b16 %v2423
    %v2943 = vunpack.c.l.b16 %v2424
    %v2944 = vunpack.c.l.b16 %v2425
    %v2945 = vunpack.c.l.b16 %v2426
    %v2946 = vunpack.c.l.b16 %v2427
    %v2947 = vunpack.c.l.b16 %v2428
    %v2948 = vunpack.c.l.b16 %v2429
    %v2949 = vunpack.c.l.b16 %v2430
    %v2950 = vunpack.c.l.b16 %v2431
    %v2951 = vunpack.c.l.b16 %v2432
    %v2952 = vunpack.c.l.b16 %v2433
    %v2953 = vunpack.c.l.b16 %v2434
    %v2954 = vunpack.c.l.b16 %v2435
    %v2955 = vunpack.c.l.b16 %v2436
    %v2956 = vunpack.c.l.b16 %v2437
    %v2957 = vunpack.c.l.b16 %v2438
    %v2958 = vunpack.c.l.b16 %v2439
    %v2959 = vunpack.c.l.b16 %v2440
    %v2960 = vunpack.c.l.b16 %v2441
    %v2961 = vunpack.c.l.b16 %v2442
    %v2962 = vunpack.c.l.b16 %v2443
    %v2963 = vunpack.c.l.b16 %v2444
    %v2964 = vunpack.c.l.b16 %v2445
    %v2965 = vunpack.c.l.b16 %v2446
    %v2966 = vunpack.c.l.b16 %v2447
    %v2967 = vunpack.c.l.b16 %v2448
    %v2968 = vunpack.c.l.b16 %v2449
    %v2969 = vunpack.c.l.b16 %v2450
    %v2970 = vunpack.c.l.b16 %v2451
    %v2971 = vunpack.c.l.b16 %v2452
    %v2972 = vunpack.c.l.b16 %v2453
    %v2973 = vunpack.c.l.b16 %v2454
    %v2974 = vunpack.c.l.b16 %v2455
    %v2975 = vunpack.c.l.b16 %v2456
    %v2976 = vunpack.c.l.b16 %v2457
    %v2977 = vunpack.c.l.b16 %v2458
    %v2978 = vunpack.c.l.b16 %v2459
    %v2979 = vunpack.c.l.b16 %v2460
    %v2980 = vunpack.c.l.b16 %v2461
    %v2981 = vunpack.c.l.b16 %v2462
    %v2982 = vunpack.c.l.b16 %v2463
    %v2983 = vpack.c.b16 %v2728, %v2727
    %v2984 = vpack.c.b16 %v2730, %v2729
    %v2985 = vpack.c.b16 %v2732, %v2731
    %v2986 = vpack.c.b16 %v2734, %v2733
    %v2987 = vpack.c.b16 %v2736, %v2735
    %v2988 = vpack.c.b16 %v2738, %v2737
    %v2989 = vpack.c.b16 %v2740, %v2739
    %v2990 = vpack.c.b16 %v2742, %v2741
    %v2991 = vpack.c.b16 %v2744, %v2743
    %v2992 = vpack.c.b16 %v2746, %v2745
    %v2993 = vpack.c.b16 %v2748, %v2747
    %v2994 = vpack.c.b16 %v2750, %v2749
    %v2995 = vpack.c.b16 %v2752, %v2751
    %v2996 = vpack.c.b16 %v2754, %v2753
    %v2997 = vpack.c.b16 %v2756, %v2755
    %v2998 = vpack.c.b16 %v2758, %v2757
    %v2999 = vpack.c.b16 %v2760, %v2759
    %v3000 = vpack.c.b16 %v2762, %v2761
    %v3001 = vpack.c.b16 %v2764, %v2763
    %v3002 = vpack.c.b16 %v2766, %v2765
    %v3003 = vpack.c.b16 %v2768, %v2767
    %v3004 = vpack.c.b16 %v2770, %v2769
    %v3005 = vpack.c.b16 %v2772, %v2771
    %v3006 = vpack.c.b16 %v2774, %v2773
    %v3007 = vpack.c.b16 %v2776, %v2775
    %v3008 = vpack.c.b16 %v2778, %v2777
    %v3009 = vpack.c.b16 %v2780, %v2779
    %v3010 = vpack.c.b16 %v2782, %v2781
    %v3011 = vpack.c.b16 %v2784, %v2783
    %v3012 = vpack.c.b16 %v2786, %v2785
    %v3013 = vpack.c.b16 %v2788, %v2787
    %v3014 = vpack.c.b16 %v2790, %v2789
    %v3015 = vpack.c.b16 %v2792, %v2791
    %v3016 = vpack.c.b16 %v2794, %v2793
    %v3017 = vpack.c.b16 %v2796, %v2795
    %v3018 = vpack.c.b16 %v2798, %v2797
    %v3019 = vpack.c.b16 %v2800, %v2799
    %v3020 = vpack.c.b16 %v2802, %v2801
    %v3021 = vpack.c.b16 %v2804, %v2803
    %v3022 = vpack.c.b16 %v2806, %v2805
    %v3023 = vpack.c.b16 %v2808, %v2807
    %v3024 = vpack.c.b16 %v2810, %v2809
    %v3025 = vpack.c.b16 %v2812, %v2811
    %v3026 = vpack.c.b16 %v2814, %v2813
    %v3027 = vpack.c.b16 %v2816, %v2815
    %v3028 = vpack.c.b16 %v2818, %v2817
    %v3029 = vpack.c.b16 %v2820, %v2819
    %v3030 = vpack.c.b16 %v2822, %v2821
    %v3031 = vpack.c.b16 %v2824, %v2823
    %v3032 = vpack.c.b16 %v2826, %v2825
    %v3033 = vpack.c.b16 %v2828, %v2827
    %v3034 = vpack.c.b16 %v2830, %v2829
    %v3035 = vpack.c.b16 %v2832, %v2831
    %v3036 = vpack.c.b16 %v2834, %v2833
    %v3037 = vpack.c.b16 %v2836, %v2835
    %v3038 = vpack.c.b16 %v2838, %v2837
    %v3039 = vpack.c.b16 %v2840, %v2839
    %v3040 = vpack.c.b16 %v2842, %v2841
    %v3041 = vpack.c.b16 %v2844, %v2843
    %v3042 = vpack.c.b16 %v2846, %v2845
    %v3043 = vpack.c.b16 %v2848, %v2847
    %v3044 = vpack.c.b16 %v2850, %v2849
    %v3045 = vpack.c.b16 %v2852, %v2851
    %v3046 = vpack.c.b16 %v2854, %v2853
    %v3047 = vpack.c.b16 %v2856, %v2855
    %v3048 = vpack.c.b16 %v2858, %v2857
    %v3049 = vpack.c.b16 %v2860, %v2859
    %v3050 = vpack.c.b16 %v2862, %v2861
    %v3051 = vpack.c.b16 %v2864, %v2863
    %v3052 = vpack.c.b16 %v2866, %v2865
    %v3053 = vpack.c.b16 %v2868, %v2867
    %v3054 = vpack.c.b16 %v2870, %v2869
    %v3055 = vpack.c.b16 %v2872, %v2871
    %v3056 = vpack.c.b16 %v2874, %v2873
    %v3057 = vpack.c.b16 %v2876, %v2875
    %v3058 = vpack.c.b16 %v2878, %v2877
    %v3059 = vpack.c.b16 %v2880, %v2879
    %v3060 = vpack.c.b16 %v2882, %v2881
    %v3061 = vpack.c.b16 %v2884, %v2883
    %v3062 = vpack.c.b16 %v2886, %v2885
    %v3063 = vpack.c.b16 %v2888, %v2887
    %v3064 = vpack.c.b16 %v2890, %v2889
    %v3065 = vpack.c.b16 %v2892, %v2891
    %v3066 = vpack.c.b16 %v2894, %v2893
    %v3067 = vpack.c.b16 %v2896, %v2895
    %v3068 = vpack.c.b16 %v2898, %v2897
    %v3069 = vpack.c.b16 %v2900, %v2899
    %v3070 = vpack.c.b16 %v2902, %v2901
    %v3071 = vpack.c.b16 %v2904, %v2903
    %v3072 = vpack.c.b16 %v2906, %v2905
    %v3073 = vpack.c.b16 %v2908, %v2907
    %v3074 = vpack.c.b16 %v2910, %v2909
    %v3075 = vpack.c.b16 %v2912, %v2911
    %v3076 = vpack.c.b16 %v2914, %v2913
    %v3077 = vpack.c.b16 %v2916, %v2915
    %v3078 = vpack.c.b16 %v2918, %v2917
    %v3079 = vpack.c.b16 %v2920, %v2919
    %v3080 = vpack.c.b16 %v2922, %v2921
    %v3081 = vpack.c.b16 %v2924, %v2923
    %v3082 = vpack.c.b16 %v2926, %v2925
    %v3083 = vpack.c.b16 %v2928, %v2927
    %v3084 = vpack.c.b16 %v2930, %v2929
    %v3085 = vpack.c.b16 %v2932, %v2931
    %v3086 = vpack.c.b16 %v2934, %v2933
    %v3087 = vpack.c.b16 %v2936, %v2935
    %v3088 = vpack.c.b16 %v2938, %v2937
    %v3089 = vpack.c.b16 %v2940, %v2939
    %v3090 = vpack.c.b16 %v2942, %v2941
    %v3091 = vpack.c.b16 %v2944, %v2943
    %v3092 = vpack.c.b16 %v2946, %v2945
    %v3093 = vpack.c.b16 %v2948, %v2947
    %v3094 = vpack.c.b16 %v2950, %v2949
    %v3095 = vpack.c.b16 %v2952, %v2951
    %v3096 = vpack.c.b16 %v2954, %v2953
    %v3097 = vpack.c.b16 %v2956, %v2955
    %v3098 = vpack.c.b16 %v2958, %v2957
    %v3099 = vpack.c.b16 %v2960, %v2959
    %v3100 = vpack.c.b16 %v2962, %v2961
    %v3101 = vpack.c.b16 %v2964, %v2963
    %v3102 = vpack.c.b16 %v2966, %v2965
    %v3103 = vpack.c.b16 %v2968, %v2967
    %v3104 = vpack.c.b16 %v2970, %v2969
    %v3105 = vpack.c.b16 %v2972, %v2971
    %v3106 = vpack.c.b16 %v2974, %v2973
    %v3107 = vpack.c.b16 %v2976, %v2975
    %v3108 = vpack.c.b16 %v2978, %v2977
    %v3109 = vpack.c.b16 %v2980, %v2979
    %v3110 = vpack.c.b16 %v2982, %v2981
    %3239 = vmatprep.subr.bf16.mxu0 0
    %3240 = vmatpush1.bf16.msra.mxu0 %v2983
    %3241 = vmatprep.subr.bf16.mxu0 0
    %3242 = vmatpush1.bf16.msra.mxu0 %v2984
    %3243 = vmatprep.subr.bf16.mxu0 0
    %3244 = vmatpush1.bf16.msra.mxu0 %v2985
    %3245 = vmatprep.subr.bf16.mxu0 0
    %3246 = vmatpush1.bf16.msra.mxu0 %v2986
    %3247 = vmatprep.subr.bf16.mxu0 0
    %3248 = vmatpush1.bf16.msra.mxu0 %v2987
    %3249 = vmatprep.subr.bf16.mxu0 0
    %3250 = vmatpush1.bf16.msra.mxu0 %v2988
    %3251 = vmatprep.subr.bf16.mxu0 0
    %3252 = vmatpush1.bf16.msra.mxu0 %v2989
    %3253 = vmatprep.subr.bf16.mxu0 0
    %3254 = vmatpush1.bf16.msra.mxu0 %v2990
    %3255 = vmatprep.subr.bf16.mxu0 0
    %3256 = vmatpush1.bf16.msra.mxu0 %v2991
    %3257 = vmatprep.subr.bf16.mxu0 0
    %3258 = vmatpush1.bf16.msra.mxu0 %v2992
    %3259 = vmatprep.subr.bf16.mxu0 0
    %3260 = vmatpush1.bf16.msra.mxu0 %v2993
    %3261 = vmatprep.subr.bf16.mxu0 0
    %3262 = vmatpush1.bf16.msra.mxu0 %v2994
    %3263 = vmatprep.subr.bf16.mxu0 0
    %3264 = vmatpush1.bf16.msra.mxu0 %v2995
    %3265 = vmatprep.subr.bf16.mxu0 0
    %3266 = vmatpush1.bf16.msra.mxu0 %v2996
    %3267 = vmatprep.subr.bf16.mxu0 0
    %3268 = vmatpush1.bf16.msra.mxu0 %v2997
    %3269 = vmatprep.subr.bf16.mxu0 0
    %3270 = vmatpush1.bf16.msra.mxu0 %v2998
    %3271 = vmatprep.mubr.bf16.mxu0 %v2081
    %3272 = vmatmul.mubr.bf16.gmra.mrb[0].mxu0 %v2080
    %v3273 = vpop.f32.mrb[0].mxu0
    %v3274 = vadd.f32 %v2469, %v3273
    %v3275 = vpop.f32.mrb[0].mxu0
    %v3276 = vpop.f32.mrb[0].mxu0
    %v3277 = vadd.f32 %v2469, %v3276
    %v3278 = vpop.f32.mrb[0].mxu0
    %3279 = vmatprep.mubr.bf16.mxu0 %v2097
    %3280 = vmatmul.mubr.bf16.gmra.mrb[0].mxu0 %v2096
    %v3281 = vpop.f32.mrb[0].mxu0
    %v3282 = vadd.f32 %v2469, %v3281
    %v3283 = vpop.f32.mrb[0].mxu0
    %v3284 = vpop.f32.mrb[0].mxu0
    %v3285 = vadd.f32 %v2469, %v3284
    %v3286 = vpop.f32.mrb[0].mxu0
    %3287 = vmatprep.mubr.bf16.mxu0 %v2113
    %3288 = vmatmul.mubr.bf16.gmra.mrb[0].mxu0 %v2112
    %v3289 = vpop.f32.mrb[0].mxu0
    %v3290 = vadd.f32 %v2469, %v3289
    %v3291 = vpop.f32.mrb[0].mxu0
    %v3292 = vpop.f32.mrb[0].mxu0
    %v3293 = vadd.f32 %v2469, %v3292
    %v3294 = vpop.f32.mrb[0].mxu0
    %3295 = vmatprep.mubr.bf16.mxu0 %v2129
    %3296 = vmatmul.mubr.bf16.gmra.mrb[0].mxu0 %v2128
    %v3297 = vpop.f32.mrb[0].mxu0
    %v3298 = vadd.f32 %v2469, %v3297
    %v3299 = vpop.f32.mrb[0].mxu0
    %v3300 = vpop.f32.mrb[0].mxu0
    %v3301 = vadd.f32 %v2469, %v3300
    %v3302 = vpop.f32.mrb[0].mxu0
    %3303 = vmatprep.mubr.bf16.mxu0 %v2145
    %3304 = vmatmul.mubr.bf16.gmra.mrb[0].mxu0 %v2144
    %v3305 = vpop.f32.mrb[0].mxu0
    %v3306 = vadd.f32 %v2469, %v3305
    %v3307 = vpop.f32.mrb[0].mxu0
    %v3308 = vpop.f32.mrb[0].mxu0
    %v3309 = vadd.f32 %v2469, %v3308
    %v3310 = vpop.f32.mrb[0].mxu0
    %3311 = vmatprep.mubr.bf16.mxu0 %v2161
    %3312 = vmatmul.mubr.bf16.gmra.mrb[0].mxu0 %v2160
    %v3313 = vpop.f32.mrb[0].mxu0
    %v3314 = vadd.f32 %v2469, %v3313
    %v3315 = vpop.f32.mrb[0].mxu0
    %v3316 = vpop.f32.mrb[0].mxu0
    %v3317 = vadd.f32 %v2469, %v3316
    %v3318 = vpop.f32.mrb[0].mxu0
    %3319 = vmatprep.mubr.bf16.mxu0 %v2177
    %3320 = vmatmul.mubr.bf16.gmra.mrb[0].mxu0 %v2176
    %v3321 = vpop.f32.mrb[0].mxu0
    %v3322 = vadd.f32 %v2469, %v3321
    %v3323 = vpop.f32.mrb[0].mxu0
    %v3324 = vpop.f32.mrb[0].mxu0
    %v3325 = vadd.f32 %v2469, %v3324
    %v3326 = vpop.f32.mrb[0].mxu0
    %3327 = vmatprep.mubr.bf16.mxu0 %v2193
    %3328 = vmatmul.mubr.bf16.gmra.mrb[0].mxu0 %v2192
    %v3329 = vpop.f32.mrb[0].mxu0
    %v3330 = vadd.f32 %v2469, %v3329
    %v3331 = vpop.f32.mrb[0].mxu0
    %v3332 = vpop.f32.mrb[0].mxu0
    %v3333 = vadd.f32 %v2469, %v3332
    %v3334 = vpop.f32.mrb[0].mxu0
    %3335 = vdwg.mxu0
    %3336 = vmatprep.subr.bf16.mxu0 0
    %3337 = vmatpush1.bf16.msra.mxu0 %v2999
    %3338 = vmatprep.subr.bf16.mxu0 0
    %3339 = vmatpush1.bf16.msra.mxu0 %v3000
    %3340 = vmatprep.subr.bf16.mxu0 0
    %3341 = vmatpush1.bf16.msra.mxu0 %v3001
    %3342 = vmatprep.subr.bf16.mxu0 0
    %3343 = vmatpush1.bf16.msra.mxu0 %v3002
    %3344 = vmatprep.subr.bf16.mxu0 0
    %3345 = vmatpush1.bf16.msra.mxu0 %v3003
    %3346 = vmatprep.subr.bf16.mxu0 0
    %3347 = vmatpush1.bf16.msra.mxu0 %v3004
    %3348 = vmatprep.subr.bf16.mxu0 0
    %3349 = vmatpush1.bf16.msra.mxu0 %v3005
    %3350 = vmatprep.subr.bf16.mxu0 0
    %3351 = vmatpush1.bf16.msra.mxu0 %v3006
    %3352 = vmatprep.subr.bf16.mxu0 0
    %3353 = vmatpush1.bf16.msra.mxu0 %v3007
    %3354 = vmatprep.subr.bf16.mxu0 0
    %3355 = vmatpush1.bf16.msra.mxu0 %v3008
    %3356 = vmatprep.subr.bf16.mxu0 0
    %3357 = vmatpush1.bf16.msra.mxu0 %v3009
    %3358 = vmatprep.subr.bf16.mxu0 0
    %3359 = vmatpush1.bf16.msra.mxu0 %v3010
    %3360 = vmatprep.subr.bf16.mxu0 0
    %3361 = vmatpush1.bf16.msra.mxu0 %v3011
    %3362 = vmatprep.subr.bf16.mxu0 0
    %3363 = vmatpush1.bf16.msra.mxu0 %v3012
    %3364 = vmatprep.subr.bf16.mxu0 0
    %3365 = vmatpush1.bf16.msra.mxu0 %v3013
    %3366 = vmatprep.subr.bf16.mxu0 0
    %3367 = vmatpush1.bf16.msra.mxu0 %v3014
    %3368 = vmatprep.mubr.bf16.mxu0 %v2083
    %3369 = vmatmul.mubr.bf16.gmra.mrb[0].mxu0 %v2082
    %v3370 = vpop.f32.mrb[0].mxu0
    %v3371 = vadd.f32 %v3274, %v3370
    %v3372 = vpop.f32.mrb[0].mxu0
    %v3373 = vpop.f32.mrb[0].mxu0
    %v3374 = vadd.f32 %v3277, %v3373
    %v3375 = vpop.f32.mrb[0].mxu0
    %3376 = vmatprep.mubr.bf16.mxu0 %v2099
    %3377 = vmatmul.mubr.bf16.gmra.mrb[0].mxu0 %v2098
    %v3378 = vpop.f32.mrb[0].mxu0
    %v3379 = vadd.f32 %v3282, %v3378
    %v3380 = vpop.f32.mrb[0].mxu0
    %v3381 = vpop.f32.mrb[0].mxu0
    %v3382 = vadd.f32 %v3285, %v3381
    %v3383 = vpop.f32.mrb[0].mxu0
    %3384 = vmatprep.mubr.bf16.mxu0 %v2115
    %3385 = vmatmul.mubr.bf16.gmra.mrb[0].mxu0 %v2114
    %v3386 = vpop.f32.mrb[0].mxu0
    %v3387 = vadd.f32 %v3290, %v3386
    %v3388 = vpop.f32.mrb[0].mxu0
    %v3389 = vpop.f32.mrb[0].mxu0
    %v3390 = vadd.f32 %v3293, %v3389
    %v3391 = vpop.f32.mrb[0].mxu0
    %3392 = vmatprep.mubr.bf16.mxu0 %v2131
    %3393 = vmatmul.mubr.bf16.gmra.mrb[0].mxu0 %v2130
    %v3394 = vpop.f32.mrb[0].mxu0
    %v3395 = vadd.f32 %v3298, %v3394
    %v3396 = vpop.f32.mrb[0].mxu0
    %v3397 = vpop.f32.mrb[0].mxu0
    %v3398 = vadd.f32 %v3301, %v3397
    %v3399 = vpop.f32.mrb[0].mxu0
    %3400 = vmatprep.mubr.bf16.mxu0 %v2147
    %3401 = vmatmul.mubr.bf16.gmra.mrb[0].mxu0 %v2146
    %v3402 = vpop.f32.mrb[0].mxu0
    %v3403 = vadd.f32 %v3306, %v3402
    %v3404 = vpop.f32.mrb[0].mxu0
    %v3405 = vpop.f32.mrb[0].mxu0
    %v3406 = vadd.f32 %v3309, %v3405
    %v3407 = vpop.f32.mrb[0].mxu0
    %3408 = vmatprep.mubr.bf16.mxu0 %v2163
    %3409 = vmatmul.mubr.bf16.gmra.mrb[0].mxu0 %v2162
    %v3410 = vpop.f32.mrb[0].mxu0
    %v3411 = vadd.f32 %v3314, %v3410
    %v3412 = vpop.f32.mrb[0].mxu0
    %v3413 = vpop.f32.mrb[0].mxu0
    %v3414 = vadd.f32 %v3317, %v3413
    %v3415 = vpop.f32.mrb[0].mxu0
    %3416 = vmatprep.mubr.bf16.mxu0 %v2179
    %3417 = vmatmul.mubr.bf16.gmra.mrb[0].mxu0 %v2178
    %v3418 = vpop.f32.mrb[0].mxu0
    %v3419 = vadd.f32 %v3322, %v3418
    %v3420 = vpop.f32.mrb[0].mxu0
    %v3421 = vpop.f32.mrb[0].mxu0
    %v3422 = vadd.f32 %v3325, %v3421
    %v3423 = vpop.f32.mrb[0].mxu0
    %3424 = vmatprep.mubr.bf16.mxu0 %v2195
    %3425 = vmatmul.mubr.bf16.gmra.mrb[0].mxu0 %v2194
    %v3426 = vpop.f32.mrb[0].mxu0
    %v3427 = vadd.f32 %v3330, %v3426
    %v3428 = vpop.f32.mrb[0].mxu0
    %v3429 = vpop.f32.mrb[0].mxu0
    %v3430 = vadd.f32 %v3333, %v3429
    %v3431 = vpop.f32.mrb[0].mxu0
    %3432 = vdwg.mxu0
    %3433 = vmatprep.subr.bf16.mxu0 0
    %3434 = vmatpush1.bf16.msra.mxu0 %v3015
    %3435 = vmatprep.subr.bf16.mxu0 0
    %3436 = vmatpush1.bf16.msra.mxu0 %v3016
    %3437 = vmatprep.subr.bf16.mxu0 0
    %3438 = vmatpush1.bf16.msra.mxu0 %v3017
    %3439 = vmatprep.subr.bf16.mxu0 0
    %3440 = vmatpush1.bf16.msra.mxu0 %v3018
    %3441 = vmatprep.subr.bf16.mxu0 0
    %3442 = vmatpush1.bf16.msra.mxu0 %v3019
    %3443 = vmatprep.subr.bf16.mxu0 0
    %3444 = vmatpush1.bf16.msra.mxu0 %v3020
    %3445 = vmatprep.subr.bf16.mxu0 0
    %3446 = vmatpush1.bf16.msra.mxu0 %v3021
    %3447 = vmatprep.subr.bf16.mxu0 0
    %3448 = vmatpush1.bf16.msra.mxu0 %v3022
    %3449 = vmatprep.subr.bf16.mxu0 0
    %3450 = vmatpush1.bf16.msra.mxu0 %v3023
    %3451 = vmatprep.subr.bf16.mxu0 0
    %3452 = vmatpush1.bf16.msra.mxu0 %v3024
    %3453 = vmatprep.subr.bf16.mxu0 0
    %3454 = vmatpush1.bf16.msra.mxu0 %v3025
    %3455 = vmatprep.subr.bf16.mxu0 0
    %3456 = vmatpush1.bf16.msra.mxu0 %v3026
    %3457 = vmatprep.subr.bf16.mxu0 0
    %3458 = vmatpush1.bf16.msra.mxu0 %v3027
    %3459 = vmatprep.subr.bf16.mxu0 0
    %3460 = vmatpush1.bf16.msra.mxu0 %v3028
    %3461 = vmatprep.subr.bf16.mxu0 0
    %3462 = vmatpush1.bf16.msra.mxu0 %v3029
    %3463 = vmatprep.subr.bf16.mxu0 0
    %3464 = vmatpush1.bf16.msra.mxu0 %v3030
    %3465 = vmatprep.mubr.bf16.mxu0 %v2085
    %3466 = vmatmul.mubr.bf16.gmra.mrb[0].mxu0 %v2084
    %v3467 = vpop.f32.mrb[0].mxu0
    %v3468 = vadd.f32 %v3371, %v3467
    %v3469 = vpop.f32.mrb[0].mxu0
    %v3470 = vpop.f32.mrb[0].mxu0
    %v3471 = vadd.f32 %v3374, %v3470
    %v3472 = vpop.f32.mrb[0].mxu0
    %3473 = vmatprep.mubr.bf16.mxu0 %v2101
    %3474 = vmatmul.mubr.bf16.gmra.mrb[0].mxu0 %v2100
    %v3475 = vpop.f32.mrb[0].mxu0
    %v3476 = vadd.f32 %v3379, %v3475
    %v3477 = vpop.f32.mrb[0].mxu0
    %v3478 = vpop.f32.mrb[0].mxu0
    %v3479 = vadd.f32 %v3382, %v3478
    %v3480 = vpop.f32.mrb[0].mxu0
    %3481 = vmatprep.mubr.bf16.mxu0 %v2117
    %3482 = vmatmul.mubr.bf16.gmra.mrb[0].mxu0 %v2116
    %v3483 = vpop.f32.mrb[0].mxu0
    %v3484 = vadd.f32 %v3387, %v3483
    %v3485 = vpop.f32.mrb[0].mxu0
    %v3486 = vpop.f32.mrb[0].mxu0
    %v3487 = vadd.f32 %v3390, %v3486
    %v3488 = vpop.f32.mrb[0].mxu0
    %3489 = vmatprep.mubr.bf16.mxu0 %v2133
    %3490 = vmatmul.mubr.bf16.gmra.mrb[0].mxu0 %v2132
    %v3491 = vpop.f32.mrb[0].mxu0
    %v3492 = vadd.f32 %v3395, %v3491
    %v3493 = vpop.f32.mrb[0].mxu0
    %v3494 = vpop.f32.mrb[0].mxu0
    %v3495 = vadd.f32 %v3398, %v3494
    %v3496 = vpop.f32.mrb[0].mxu0
    %3497 = vmatprep.mubr.bf16.mxu0 %v2149
    %3498 = vmatmul.mubr.bf16.gmra.mrb[0].mxu0 %v2148
    %v3499 = vpop.f32.mrb[0].mxu0
    %v3500 = vadd.f32 %v3403, %v3499
    %v3501 = vpop.f32.mrb[0].mxu0
    %v3502 = vpop.f32.mrb[0].mxu0
    %v3503 = vadd.f32 %v3406, %v3502
    %v3504 = vpop.f32.mrb[0].mxu0
    %3505 = vmatprep.mubr.bf16.mxu0 %v2165
    %3506 = vmatmul.mubr.bf16.gmra.mrb[0].mxu0 %v2164
    %v3507 = vpop.f32.mrb[0].mxu0
    %v3508 = vadd.f32 %v3411, %v3507
    %v3509 = vpop.f32.mrb[0].mxu0
    %v3510 = vpop.f32.mrb[0].mxu0
    %v3511 = vadd.f32 %v3414, %v3510
    %v3512 = vpop.f32.mrb[0].mxu0
    %3513 = vmatprep.mubr.bf16.mxu0 %v2181
    %3514 = vmatmul.mubr.bf16.gmra.mrb[0].mxu0 %v2180
    %v3515 = vpop.f32.mrb[0].mxu0
    %v3516 = vadd.f32 %v3419, %v3515
    %v3517 = vpop.f32.mrb[0].mxu0
    %v3518 = vpop.f32.mrb[0].mxu0
    %v3519 = vadd.f32 %v3422, %v3518
    %v3520 = vpop.f32.mrb[0].mxu0
    %3521 = vmatprep.mubr.bf16.mxu0 %v2197
    %3522 = vmatmul.mubr.bf16.gmra.mrb[0].mxu0 %v2196
    %v3523 = vpop.f32.mrb[0].mxu0
    %v3524 = vadd.f32 %v3427, %v3523
    %v3525 = vpop.f32.mrb[0].mxu0
    %v3526 = vpop.f32.mrb[0].mxu0
    %v3527 = vadd.f32 %v3430, %v3526
    %v3528 = vpop.f32.mrb[0].mxu0
    %3529 = vdwg.mxu0
    %3530 = vmatprep.subr.bf16.mxu0 0
    %3531 = vmatpush1.bf16.msra.mxu0 %v3031
    %3532 = vmatprep.subr.bf16.mxu0 0
    %3533 = vmatpush1.bf16.msra.mxu0 %v3032
    %3534 = vmatprep.subr.bf16.mxu0 0
    %3535 = vmatpush1.bf16.msra.mxu0 %v3033
    %3536 = vmatprep.subr.bf16.mxu0 0
    %3537 = vmatpush1.bf16.msra.mxu0 %v3034
    %3538 = vmatprep.subr.bf16.mxu0 0
    %3539 = vmatpush1.bf16.msra.mxu0 %v3035
    %3540 = vmatprep.subr.bf16.mxu0 0
    %3541 = vmatpush1.bf16.msra.mxu0 %v3036
    %3542 = vmatprep.subr.bf16.mxu0 0
    %3543 = vmatpush1.bf16.msra.mxu0 %v3037
    %3544 = vmatprep.subr.bf16.mxu0 0
    %3545 = vmatpush1.bf16.msra.mxu0 %v3038
    %3546 = vmatprep.subr.bf16.mxu0 0
    %3547 = vmatpush1.bf16.msra.mxu0 %v3039
    %3548 = vmatprep.subr.bf16.mxu0 0
    %3549 = vmatpush1.bf16.msra.mxu0 %v3040
    %3550 = vmatprep.subr.bf16.mxu0 0
    %3551 = vmatpush1.bf16.msra.mxu0 %v3041
    %3552 = vmatprep.subr.bf16.mxu0 0
    %3553 = vmatpush1.bf16.msra.mxu0 %v3042
    %3554 = vmatprep.subr.bf16.mxu0 0
    %3555 = vmatpush1.bf16.msra.mxu0 %v3043
    %3556 = vmatprep.subr.bf16.mxu0 0
    %3557 = vmatpush1.bf16.msra.mxu0 %v3044
    %3558 = vmatprep.subr.bf16.mxu0 0
    %3559 = vmatpush1.bf16.msra.mxu0 %v3045
    %3560 = vmatprep.subr.bf16.mxu0 0
    %3561 = vmatpush1.bf16.msra.mxu0 %v3046
    %3562 = vmatprep.mubr.bf16.mxu0 %v2087
    %3563 = vmatmul.mubr.bf16.gmra.mrb[0].mxu0 %v2086
    %v3564 = vpop.f32.mrb[0].mxu0
    %v3565 = vadd.f32 %v3468, %v3564
    %v3566 = vpop.f32.mrb[0].mxu0
    %v3567 = vpop.f32.mrb[0].mxu0
    %v3568 = vadd.f32 %v3471, %v3567
    %v3569 = vpop.f32.mrb[0].mxu0
    %3570 = vmatprep.mubr.bf16.mxu0 %v2103
    %3571 = vmatmul.mubr.bf16.gmra.mrb[0].mxu0 %v2102
    %v3572 = vpop.f32.mrb[0].mxu0
    %v3573 = vadd.f32 %v3476, %v3572
    %v3574 = vpop.f32.mrb[0].mxu0
    %v3575 = vpop.f32.mrb[0].mxu0
    %v3576 = vadd.f32 %v3479, %v3575
    %v3577 = vpop.f32.mrb[0].mxu0
    %3578 = vmatprep.mubr.bf16.mxu0 %v2119
    %3579 = vmatmul.mubr.bf16.gmra.mrb[0].mxu0 %v2118
    %v3580 = vpop.f32.mrb[0].mxu0
    %v3581 = vadd.f32 %v3484, %v3580
    %v3582 = vpop.f32.mrb[0].mxu0
    %v3583 = vpop.f32.mrb[0].mxu0
    %v3584 = vadd.f32 %v3487, %v3583
    %v3585 = vpop.f32.mrb[0].mxu0
    %3586 = vmatprep.mubr.bf16.mxu0 %v2135
    %3587 = vmatmul.mubr.bf16.gmra.mrb[0].mxu0 %v2134
    %v3588 = vpop.f32.mrb[0].mxu0
    %v3589 = vadd.f32 %v3492, %v3588
    %v3590 = vpop.f32.mrb[0].mxu0
    %v3591 = vpop.f32.mrb[0].mxu0
    %v3592 = vadd.f32 %v3495, %v3591
    %v3593 = vpop.f32.mrb[0].mxu0
    %3594 = vmatprep.mubr.bf16.mxu0 %v2151
    %3595 = vmatmul.mubr.bf16.gmra.mrb[0].mxu0 %v2150
    %v3596 = vpop.f32.mrb[0].mxu0
    %v3597 = vadd.f32 %v3500, %v3596
    %v3598 = vpop.f32.mrb[0].mxu0
    %v3599 = vpop.f32.mrb[0].mxu0
    %v3600 = vadd.f32 %v3503, %v3599
    %v3601 = vpop.f32.mrb[0].mxu0
    %3602 = vmatprep.mubr.bf16.mxu0 %v2167
    %3603 = vmatmul.mubr.bf16.gmra.mrb[0].mxu0 %v2166
    %v3604 = vpop.f32.mrb[0].mxu0
    %v3605 = vadd.f32 %v3508, %v3604
    %v3606 = vpop.f32.mrb[0].mxu0
    %v3607 = vpop.f32.mrb[0].mxu0
    %v3608 = vadd.f32 %v3511, %v3607
    %v3609 = vpop.f32.mrb[0].mxu0
    %3610 = vmatprep.mubr.bf16.mxu0 %v2183
    %3611 = vmatmul.mubr.bf16.gmra.mrb[0].mxu0 %v2182
    %v3612 = vpop.f32.mrb[0].mxu0
    %v3613 = vadd.f32 %v3516, %v3612
    %v3614 = vpop.f32.mrb[0].mxu0
    %v3615 = vpop.f32.mrb[0].mxu0
    %v3616 = vadd.f32 %v3519, %v3615
    %v3617 = vpop.f32.mrb[0].mxu0
    %3618 = vmatprep.mubr.bf16.mxu0 %v2199
    %3619 = vmatmul.mubr.bf16.gmra.mrb[0].mxu0 %v2198
    %v3620 = vpop.f32.mrb[0].mxu0
    %v3621 = vadd.f32 %v3524, %v3620
    %v3622 = vpop.f32.mrb[0].mxu0
    %v3623 = vpop.f32.mrb[0].mxu0
    %v3624 = vadd.f32 %v3527, %v3623
    %v3625 = vpop.f32.mrb[0].mxu0
    %3626 = vdwg.mxu0
    %3627 = vmatprep.subr.bf16.mxu0 0
    %3628 = vmatpush1.bf16.msra.mxu0 %v3047
    %3629 = vmatprep.subr.bf16.mxu0 0
    %3630 = vmatpush1.bf16.msra.mxu0 %v3048
    %3631 = vmatprep.subr.bf16.mxu0 0
    %3632 = vmatpush1.bf16.msra.mxu0 %v3049
    %3633 = vmatprep.subr.bf16.mxu0 0
    %3634 = vmatpush1.bf16.msra.mxu0 %v3050
    %3635 = vmatprep.subr.bf16.mxu0 0
    %3636 = vmatpush1.bf16.msra.mxu0 %v3051
    %3637 = vmatprep.subr.bf16.mxu0 0
    %3638 = vmatpush1.bf16.msra.mxu0 %v3052
    %3639 = vmatprep.subr.bf16.mxu0 0
    %3640 = vmatpush1.bf16.msra.mxu0 %v3053
    %3641 = vmatprep.subr.bf16.mxu0 0
    %3642 = vmatpush1.bf16.msra.mxu0 %v3054
    %3643 = vmatprep.subr.bf16.mxu0 0
    %3644 = vmatpush1.bf16.msra.mxu0 %v3055
    %3645 = vmatprep.subr.bf16.mxu0 0
    %3646 = vmatpush1.bf16.msra.mxu0 %v3056
    %3647 = vmatprep.subr.bf16.mxu0 0
    %3648 = vmatpush1.bf16.msra.mxu0 %v3057
    %3649 = vmatprep.subr.bf16.mxu0 0
    %3650 = vmatpush1.bf16.msra.mxu0 %v3058
    %3651 = vmatprep.subr.bf16.mxu0 0
    %3652 = vmatpush1.bf16.msra.mxu0 %v3059
    %3653 = vmatprep.subr.bf16.mxu0 0
    %3654 = vmatpush1.bf16.msra.mxu0 %v3060
    %3655 = vmatprep.subr.bf16.mxu0 0
    %3656 = vmatpush1.bf16.msra.mxu0 %v3061
    %3657 = vmatprep.subr.bf16.mxu0 0
    %3658 = vmatpush1.bf16.msra.mxu0 %v3062
    %3659 = vmatprep.mubr.bf16.mxu0 %v2089
    %3660 = vmatmul.mubr.bf16.gmra.mrb[0].mxu0 %v2088
    %v3661 = vpop.f32.mrb[0].mxu0
    %v3662 = vadd.f32 %v3565, %v3661
    %v3663 = vpop.f32.mrb[0].mxu0
    %v3664 = vpop.f32.mrb[0].mxu0
    %v3665 = vadd.f32 %v3568, %v3664
    %v3666 = vpop.f32.mrb[0].mxu0
    %3667 = vmatprep.mubr.bf16.mxu0 %v2105
    %3668 = vmatmul.mubr.bf16.gmra.mrb[0].mxu0 %v2104
    %v3669 = vpop.f32.mrb[0].mxu0
    %v3670 = vadd.f32 %v3573, %v3669
    %v3671 = vpop.f32.mrb[0].mxu0
    %v3672 = vpop.f32.mrb[0].mxu0
    %v3673 = vadd.f32 %v3576, %v3672
    %v3674 = vpop.f32.mrb[0].mxu0
    %3675 = vmatprep.mubr.bf16.mxu0 %v2121
    %3676 = vmatmul.mubr.bf16.gmra.mrb[0].mxu0 %v2120
    %v3677 = vpop.f32.mrb[0].mxu0
    %v3678 = vadd.f32 %v3581, %v3677
    %v3679 = vpop.f32.mrb[0].mxu0
    %v3680 = vpop.f32.mrb[0].mxu0
    %v3681 = vadd.f32 %v3584, %v3680
    %v3682 = vpop.f32.mrb[0].mxu0
    %3683 = vmatprep.mubr.bf16.mxu0 %v2137
    %3684 = vmatmul.mubr.bf16.gmra.mrb[0].mxu0 %v2136
    %v3685 = vpop.f32.mrb[0].mxu0
    %v3686 = vadd.f32 %v3589, %v3685
    %v3687 = vpop.f32.mrb[0].mxu0
    %v3688 = vpop.f32.mrb[0].mxu0
    %v3689 = vadd.f32 %v3592, %v3688
    %v3690 = vpop.f32.mrb[0].mxu0
    %3691 = vmatprep.mubr.bf16.mxu0 %v2153
    %3692 = vmatmul.mubr.bf16.gmra.mrb[0].mxu0 %v2152
    %v3693 = vpop.f32.mrb[0].mxu0
    %v3694 = vadd.f32 %v3597, %v3693
    %v3695 = vpop.f32.mrb[0].mxu0
    %v3696 = vpop.f32.mrb[0].mxu0
    %v3697 = vadd.f32 %v3600, %v3696
    %v3698 = vpop.f32.mrb[0].mxu0
    %3699 = vmatprep.mubr.bf16.mxu0 %v2169
    %3700 = vmatmul.mubr.bf16.gmra.mrb[0].mxu0 %v2168
    %v3701 = vpop.f32.mrb[0].mxu0
    %v3702 = vadd.f32 %v3605, %v3701
    %v3703 = vpop.f32.mrb[0].mxu0
    %v3704 = vpop.f32.mrb[0].mxu0
    %v3705 = vadd.f32 %v3608, %v3704
    %v3706 = vpop.f32.mrb[0].mxu0
    %3707 = vmatprep.mubr.bf16.mxu0 %v2185
    %3708 = vmatmul.mubr.bf16.gmra.mrb[0].mxu0 %v2184
    %v3709 = vpop.f32.mrb[0].mxu0
    %v3710 = vadd.f32 %v3613, %v3709
    %v3711 = vpop.f32.mrb[0].mxu0
    %v3712 = vpop.f32.mrb[0].mxu0
    %v3713 = vadd.f32 %v3616, %v3712
    %v3714 = vpop.f32.mrb[0].mxu0
    %3715 = vmatprep.mubr.bf16.mxu0 %v2201
    %3716 = vmatmul.mubr.bf16.gmra.mrb[0].mxu0 %v2200
    %v3717 = vpop.f32.mrb[0].mxu0
    %v3718 = vadd.f32 %v3621, %v3717
    %v3719 = vpop.f32.mrb[0].mxu0
    %v3720 = vpop.f32.mrb[0].mxu0
    %v3721 = vadd.f32 %v3624, %v3720
    %v3722 = vpop.f32.mrb[0].mxu0
    %3723 = vdwg.mxu0
    %3724 = vmatprep.subr.bf16.mxu0 0
    %3725 = vmatpush1.bf16.msra.mxu0 %v3063
    %3726 = vmatprep.subr.bf16.mxu0 0
    %3727 = vmatpush1.bf16.msra.mxu0 %v3064
    %3728 = vmatprep.subr.bf16.mxu0 0
    %3729 = vmatpush1.bf16.msra.mxu0 %v3065
    %3730 = vmatprep.subr.bf16.mxu0 0
    %3731 = vmatpush1.bf16.msra.mxu0 %v3066
    %3732 = vmatprep.subr.bf16.mxu0 0
    %3733 = vmatpush1.bf16.msra.mxu0 %v3067
    %3734 = vmatprep.subr.bf16.mxu0 0
    %3735 = vmatpush1.bf16.msra.mxu0 %v3068
    %3736 = vmatprep.subr.bf16.mxu0 0
    %3737 = vmatpush1.bf16.msra.mxu0 %v3069
    %3738 = vmatprep.subr.bf16.mxu0 0
    %3739 = vmatpush1.bf16.msra.mxu0 %v3070
    %3740 = vmatprep.subr.bf16.mxu0 0
    %3741 = vmatpush1.bf16.msra.mxu0 %v3071
    %3742 = vmatprep.subr.bf16.mxu0 0
    %3743 = vmatpush1.bf16.msra.mxu0 %v3072
    %3744 = vmatprep.subr.bf16.mxu0 0
    %3745 = vmatpush1.bf16.msra.mxu0 %v3073
    %3746 = vmatprep.subr.bf16.mxu0 0
    %3747 = vmatpush1.bf16.msra.mxu0 %v3074
    %3748 = vmatprep.subr.bf16.mxu0 0
    %3749 = vmatpush1.bf16.msra.mxu0 %v3075
    %3750 = vmatprep.subr.bf16.mxu0 0
    %3751 = vmatpush1.bf16.msra.mxu0 %v3076
    %3752 = vmatprep.subr.bf16.mxu0 0
    %3753 = vmatpush1.bf16.msra.mxu0 %v3077
    %3754 = vmatprep.subr.bf16.mxu0 0
    %3755 = vmatpush1.bf16.msra.mxu0 %v3078
    %3756 = vmatprep.mubr.bf16.mxu0 %v2091
    %3757 = vmatmul.mubr.bf16.gmra.mrb[0].mxu0 %v2090
    %v3758 = vpop.f32.mrb[0].mxu0
    %v3759 = vadd.f32 %v3662, %v3758
    %v3760 = vpop.f32.mrb[0].mxu0
    %v3761 = vpop.f32.mrb[0].mxu0
    %v3762 = vadd.f32 %v3665, %v3761
    %v3763 = vpop.f32.mrb[0].mxu0
    %3764 = vmatprep.mubr.bf16.mxu0 %v2107
    %3765 = vmatmul.mubr.bf16.gmra.mrb[0].mxu0 %v2106
    %v3766 = vpop.f32.mrb[0].mxu0
    %v3767 = vadd.f32 %v3670, %v3766
    %v3768 = vpop.f32.mrb[0].mxu0
    %v3769 = vpop.f32.mrb[0].mxu0
    %v3770 = vadd.f32 %v3673, %v3769
    %v3771 = vpop.f32.mrb[0].mxu0
    %3772 = vmatprep.mubr.bf16.mxu0 %v2123
    %3773 = vmatmul.mubr.bf16.gmra.mrb[0].mxu0 %v2122
    %v3774 = vpop.f32.mrb[0].mxu0
    %v3775 = vadd.f32 %v3678, %v3774
    %v3776 = vpop.f32.mrb[0].mxu0
    %v3777 = vpop.f32.mrb[0].mxu0
    %v3778 = vadd.f32 %v3681, %v3777
    %v3779 = vpop.f32.mrb[0].mxu0
    %3780 = vmatprep.mubr.bf16.mxu0 %v2139
    %3781 = vmatmul.mubr.bf16.gmra.mrb[0].mxu0 %v2138
    %v3782 = vpop.f32.mrb[0].mxu0
    %v3783 = vadd.f32 %v3686, %v3782
    %v3784 = vpop.f32.mrb[0].mxu0
    %v3785 = vpop.f32.mrb[0].mxu0
    %v3786 = vadd.f32 %v3689, %v3785
    %v3787 = vpop.f32.mrb[0].mxu0
    %3788 = vmatprep.mubr.bf16.mxu0 %v2155
    %3789 = vmatmul.mubr.bf16.gmra.mrb[0].mxu0 %v2154
    %v3790 = vpop.f32.mrb[0].mxu0
    %v3791 = vadd.f32 %v3694, %v3790
    %v3792 = vpop.f32.mrb[0].mxu0
    %v3793 = vpop.f32.mrb[0].mxu0
    %v3794 = vadd.f32 %v3697, %v3793
    %v3795 = vpop.f32.mrb[0].mxu0
    %3796 = vmatprep.mubr.bf16.mxu0 %v2171
    %3797 = vmatmul.mubr.bf16.gmra.mrb[0].mxu0 %v2170
    %v3798 = vpop.f32.mrb[0].mxu0
    %v3799 = vadd.f32 %v3702, %v3798
    %v3800 = vpop.f32.mrb[0].mxu0
    %v3801 = vpop.f32.mrb[0].mxu0
    %v3802 = vadd.f32 %v3705, %v3801
    %v3803 = vpop.f32.mrb[0].mxu0
    %3804 = vmatprep.mubr.bf16.mxu0 %v2187
    %3805 = vmatmul.mubr.bf16.gmra.mrb[0].mxu0 %v2186
    %v3806 = vpop.f32.mrb[0].mxu0
    %v3807 = vadd.f32 %v3710, %v3806
    %v3808 = vpop.f32.mrb[0].mxu0
    %v3809 = vpop.f32.mrb[0].mxu0
    %v3810 = vadd.f32 %v3713, %v3809
    %v3811 = vpop.f32.mrb[0].mxu0
    %3812 = vmatprep.mubr.bf16.mxu0 %v2203
    %3813 = vmatmul.mubr.bf16.gmra.mrb[0].mxu0 %v2202
    %v3814 = vpop.f32.mrb[0].mxu0
    %v3815 = vadd.f32 %v3718, %v3814
    %v3816 = vpop.f32.mrb[0].mxu0
    %v3817 = vpop.f32.mrb[0].mxu0
    %v3818 = vadd.f32 %v3721, %v3817
    %v3819 = vpop.f32.mrb[0].mxu0
    %3820 = vdwg.mxu0
    %3821 = vmatprep.subr.bf16.mxu0 0
    %3822 = vmatpush1.bf16.msra.mxu0 %v3079
    %3823 = vmatprep.subr.bf16.mxu0 0
    %3824 = vmatpush1.bf16.msra.mxu0 %v3080
    %3825 = vmatprep.subr.bf16.mxu0 0
    %3826 = vmatpush1.bf16.msra.mxu0 %v3081
    %3827 = vmatprep.subr.bf16.mxu0 0
    %3828 = vmatpush1.bf16.msra.mxu0 %v3082
    %3829 = vmatprep.subr.bf16.mxu0 0
    %3830 = vmatpush1.bf16.msra.mxu0 %v3083
    %3831 = vmatprep.subr.bf16.mxu0 0
    %3832 = vmatpush1.bf16.msra.mxu0 %v3084
    %3833 = vmatprep.subr.bf16.mxu0 0
    %3834 = vmatpush1.bf16.msra.mxu0 %v3085
    %3835 = vmatprep.subr.bf16.mxu0 0
    %3836 = vmatpush1.bf16.msra.mxu0 %v3086
    %3837 = vmatprep.subr.bf16.mxu0 0
    %3838 = vmatpush1.bf16.msra.mxu0 %v3087
    %3839 = vmatprep.subr.bf16.mxu0 0
    %3840 = vmatpush1.bf16.msra.mxu0 %v3088
    %3841 = vmatprep.subr.bf16.mxu0 0
    %3842 = vmatpush1.bf16.msra.mxu0 %v3089
    %3843 = vmatprep.subr.bf16.mxu0 0
    %3844 = vmatpush1.bf16.msra.mxu0 %v3090
    %3845 = vmatprep.subr.bf16.mxu0 0
    %3846 = vmatpush1.bf16.msra.mxu0 %v3091
    %3847 = vmatprep.subr.bf16.mxu0 0
    %3848 = vmatpush1.bf16.msra.mxu0 %v3092
    %3849 = vmatprep.subr.bf16.mxu0 0
    %3850 = vmatpush1.bf16.msra.mxu0 %v3093
    %3851 = vmatprep.subr.bf16.mxu0 0
    %3852 = vmatpush1.bf16.msra.mxu0 %v3094
    %3853 = vmatprep.mubr.bf16.mxu0 %v2093
    %3854 = vmatmul.mubr.bf16.gmra.mrb[0].mxu0 %v2092
    %v3855 = vpop.f32.mrb[0].mxu0
    %v3856 = vadd.f32 %v3759, %v3855
    %v3857 = vpop.f32.mrb[0].mxu0
    %v3858 = vpop.f32.mrb[0].mxu0
    %v3859 = vadd.f32 %v3762, %v3858
    %v3860 = vpop.f32.mrb[0].mxu0
    %3861 = vmatprep.mubr.bf16.mxu0 %v2109
    %3862 = vmatmul.mubr.bf16.gmra.mrb[0].mxu0 %v2108
    %v3863 = vpop.f32.mrb[0].mxu0
    %v3864 = vadd.f32 %v3767, %v3863
    %v3865 = vpop.f32.mrb[0].mxu0
    %v3866 = vpop.f32.mrb[0].mxu0
    %v3867 = vadd.f32 %v3770, %v3866
    %v3868 = vpop.f32.mrb[0].mxu0
    %3869 = vmatprep.mubr.bf16.mxu0 %v2125
    %3870 = vmatmul.mubr.bf16.gmra.mrb[0].mxu0 %v2124
    %v3871 = vpop.f32.mrb[0].mxu0
    %v3872 = vadd.f32 %v3775, %v3871
    %v3873 = vpop.f32.mrb[0].mxu0
    %v3874 = vpop.f32.mrb[0].mxu0
    %v3875 = vadd.f32 %v3778, %v3874
    %v3876 = vpop.f32.mrb[0].mxu0
    %3877 = vmatprep.mubr.bf16.mxu0 %v2141
    %3878 = vmatmul.mubr.bf16.gmra.mrb[0].mxu0 %v2140
    %v3879 = vpop.f32.mrb[0].mxu0
    %v3880 = vadd.f32 %v3783, %v3879
    %v3881 = vpop.f32.mrb[0].mxu0
    %v3882 = vpop.f32.mrb[0].mxu0
    %v3883 = vadd.f32 %v3786, %v3882
    %v3884 = vpop.f32.mrb[0].mxu0
    %3885 = vmatprep.mubr.bf16.mxu0 %v2157
    %3886 = vmatmul.mubr.bf16.gmra.mrb[0].mxu0 %v2156
    %v3887 = vpop.f32.mrb[0].mxu0
    %v3888 = vadd.f32 %v3791, %v3887
    %v3889 = vpop.f32.mrb[0].mxu0
    %v3890 = vpop.f32.mrb[0].mxu0
    %v3891 = vadd.f32 %v3794, %v3890
    %v3892 = vpop.f32.mrb[0].mxu0
    %3893 = vmatprep.mubr.bf16.mxu0 %v2173
    %3894 = vmatmul.mubr.bf16.gmra.mrb[0].mxu0 %v2172
    %v3895 = vpop.f32.mrb[0].mxu0
    %v3896 = vadd.f32 %v3799, %v3895
    %v3897 = vpop.f32.mrb[0].mxu0
    %v3898 = vpop.f32.mrb[0].mxu0
    %v3899 = vadd.f32 %v3802, %v3898
    %v3900 = vpop.f32.mrb[0].mxu0
    %3901 = vmatprep.mubr.bf16.mxu0 %v2189
    %3902 = vmatmul.mubr.bf16.gmra.mrb[0].mxu0 %v2188
    %v3903 = vpop.f32.mrb[0].mxu0
    %v3904 = vadd.f32 %v3807, %v3903
    %v3905 = vpop.f32.mrb[0].mxu0
    %v3906 = vpop.f32.mrb[0].mxu0
    %v3907 = vadd.f32 %v3810, %v3906
    %v3908 = vpop.f32.mrb[0].mxu0
    %3909 = vmatprep.mubr.bf16.mxu0 %v2205
    %3910 = vmatmul.mubr.bf16.gmra.mrb[0].mxu0 %v2204
    %v3911 = vpop.f32.mrb[0].mxu0
    %v3912 = vadd.f32 %v3815, %v3911
    %v3913 = vpop.f32.mrb[0].mxu0
    %v3914 = vpop.f32.mrb[0].mxu0
    %v3915 = vadd.f32 %v3818, %v3914
    %v3916 = vpop.f32.mrb[0].mxu0
    %3917 = vdwg.mxu0
    %3918 = vmatprep.subr.bf16.mxu0 0
    %3919 = vmatpush1.bf16.msra.mxu0 %v3095
    %3920 = vmatprep.subr.bf16.mxu0 0
    %3921 = vmatpush1.bf16.msra.mxu0 %v3096
    %3922 = vmatprep.subr.bf16.mxu0 0
    %3923 = vmatpush1.bf16.msra.mxu0 %v3097
    %3924 = vmatprep.subr.bf16.mxu0 0
    %3925 = vmatpush1.bf16.msra.mxu0 %v3098
    %3926 = vmatprep.subr.bf16.mxu0 0
    %3927 = vmatpush1.bf16.msra.mxu0 %v3099
    %3928 = vmatprep.subr.bf16.mxu0 0
    %3929 = vmatpush1.bf16.msra.mxu0 %v3100
    %3930 = vmatprep.subr.bf16.mxu0 0
    %3931 = vmatpush1.bf16.msra.mxu0 %v3101
    %3932 = vmatprep.subr.bf16.mxu0 0
    %3933 = vmatpush1.bf16.msra.mxu0 %v3102
    %3934 = vmatprep.subr.bf16.mxu0 0
    %3935 = vmatpush1.bf16.msra.mxu0 %v3103
    %3936 = vmatprep.subr.bf16.mxu0 0
    %3937 = vmatpush1.bf16.msra.mxu0 %v3104
    %3938 = vmatprep.subr.bf16.mxu0 0
    %3939 = vmatpush1.bf16.msra.mxu0 %v3105
    %3940 = vmatprep.subr.bf16.mxu0 0
    %3941 = vmatpush1.bf16.msra.mxu0 %v3106
    %3942 = vmatprep.subr.bf16.mxu0 0
    %3943 = vmatpush1.bf16.msra.mxu0 %v3107
    %3944 = vmatprep.subr.bf16.mxu0 0
    %3945 = vmatpush1.bf16.msra.mxu0 %v3108
    %3946 = vmatprep.subr.bf16.mxu0 0
    %3947 = vmatpush1.bf16.msra.mxu0 %v3109
    %3948 = vmatprep.subr.bf16.mxu0 0
    %3949 = vmatpush1.bf16.msra.mxu0 %v3110
    %3950 = vmatprep.mubr.bf16.mxu0 %v2095
    %3951 = vmatmul.mubr.bf16.gmra.mrb[0].mxu0 %v2094
    %v3952 = vpop.f32.mrb[0].mxu0
    %v3953 = vadd.f32 %v3856, %v3952
    %v3954 = vpop.f32.mrb[0].mxu0
    %v3955 = vpop.f32.mrb[0].mxu0
    %v3956 = vadd.f32 %v3859, %v3955
    %v3957 = vpop.f32.mrb[0].mxu0
    %3958 = vmatprep.mubr.bf16.mxu0 %v2111
    %3959 = vmatmul.mubr.bf16.gmra.mrb[0].mxu0 %v2110
    %v3960 = vpop.f32.mrb[0].mxu0
    %v3961 = vadd.f32 %v3864, %v3960
    %v3962 = vpop.f32.mrb[0].mxu0
    %v3963 = vpop.f32.mrb[0].mxu0
    %v3964 = vadd.f32 %v3867, %v3963
    %v3965 = vpop.f32.mrb[0].mxu0
    %3966 = vmatprep.mubr.bf16.mxu0 %v2127
    %3967 = vmatmul.mubr.bf16.gmra.mrb[0].mxu0 %v2126
    %v3968 = vpop.f32.mrb[0].mxu0
    %v3969 = vadd.f32 %v3872, %v3968
    %v3970 = vpop.f32.mrb[0].mxu0
    %v3971 = vpop.f32.mrb[0].mxu0
    %v3972 = vadd.f32 %v3875, %v3971
    %v3973 = vpop.f32.mrb[0].mxu0
    %3974 = vmatprep.mubr.bf16.mxu0 %v2143
    %3975 = vmatmul.mubr.bf16.gmra.mrb[0].mxu0 %v2142
    %v3976 = vpop.f32.mrb[0].mxu0
    %v3977 = vadd.f32 %v3880, %v3976
    %v3978 = vpop.f32.mrb[0].mxu0
    %v3979 = vpop.f32.mrb[0].mxu0
    %v3980 = vadd.f32 %v3883, %v3979
    %v3981 = vpop.f32.mrb[0].mxu0
    %3982 = vmatprep.mubr.bf16.mxu0 %v2159
    %3983 = vmatmul.mubr.bf16.gmra.mrb[0].mxu0 %v2158
    %v3984 = vpop.f32.mrb[0].mxu0
    %v3985 = vadd.f32 %v3888, %v3984
    %v3986 = vpop.f32.mrb[0].mxu0
    %v3987 = vpop.f32.mrb[0].mxu0
    %v3988 = vadd.f32 %v3891, %v3987
    %v3989 = vpop.f32.mrb[0].mxu0
    %3990 = vmatprep.mubr.bf16.mxu0 %v2175
    %3991 = vmatmul.mubr.bf16.gmra.mrb[0].mxu0 %v2174
    %v3992 = vpop.f32.mrb[0].mxu0
    %v3993 = vadd.f32 %v3896, %v3992
    %v3994 = vpop.f32.mrb[0].mxu0
    %v3995 = vpop.f32.mrb[0].mxu0
    %v3996 = vadd.f32 %v3899, %v3995
    %v3997 = vpop.f32.mrb[0].mxu0
    %3998 = vmatprep.mubr.bf16.mxu0 %v2191
    %3999 = vmatmul.mubr.bf16.gmra.mrb[0].mxu0 %v2190
    %v4000 = vpop.f32.mrb[0].mxu0
    %v4001 = vadd.f32 %v3904, %v4000
    %v4002 = vpop.f32.mrb[0].mxu0
    %v4003 = vpop.f32.mrb[0].mxu0
    %v4004 = vadd.f32 %v3907, %v4003
    %v4005 = vpop.f32.mrb[0].mxu0
    %4006 = vmatprep.mubr.bf16.mxu0 %v2207
    %4007 = vmatmul.mubr.bf16.gmra.mrb[0].mxu0 %v2206
    %v4008 = vpop.f32.mrb[0].mxu0
    %v4009 = vadd.f32 %v3912, %v4008
    %v4010 = vpop.f32.mrb[0].mxu0
    %v4011 = vpop.f32.mrb[0].mxu0
    %v4012 = vadd.f32 %v3915, %v4011
    %v4013 = vpop.f32.mrb[0].mxu0
    %4014 = vdwg.mxu0
    %4015 = vst [vmem:[#allocation9] sm:$0xff] %v3953
    %4016 = vst [vmem:[#allocation9 + $0x8] sm:$0xff] %v3956
    %4017 = vst [vmem:[#allocation9 + $0x10] sm:$0xff] %v3961
    %4018 = vst [vmem:[#allocation9 + $0x18] sm:$0xff] %v3964
    %4019 = vst [vmem:[#allocation9 + $0x20] sm:$0xff] %v3969
    %4020 = vst [vmem:[#allocation9 + $0x28] sm:$0xff] %v3972
    %4021 = vst [vmem:[#allocation9 + $0x30] sm:$0xff] %v3977
    %4022 = vst [vmem:[#allocation9 + $0x38] sm:$0xff] %v3980
    %4023 = vst [vmem:[#allocation9 + $0x40] sm:$0xff] %v3985
    %4024 = vst [vmem:[#allocation9 + $0x48] sm:$0xff] %v3988
    %4025 = vst [vmem:[#allocation9 + $0x50] sm:$0xff] %v3993
    %4026 = vst [vmem:[#allocation9 + $0x58] sm:$0xff] %v3996
    %4027 = vst [vmem:[#allocation9 + $0x60] sm:$0xff] %v4001
    %4028 = vst [vmem:[#allocation9 + $0x68] sm:$0xff] %v4004
    %4029 = vst [vmem:[#allocation9 + $0x70] sm:$0xff] %v4009
    %4030 = vst [vmem:[#allocation9 + $0x78] sm:$0xff] %v4012
    %v4031 = vld [vmem:[%s1] sm:$0xff]
    %v4032 = vld [vmem:[%s1 + $0x8] sm:$0xff]
    %v4033 = vld [vmem:[%s1 + $0x10] sm:$0xff]
    %v4034 = vld [vmem:[%s1 + $0x18] sm:$0xff]
    %v4035 = vld [vmem:[%s1 + $0x20] sm:$0xff]
    %v4036 = vld [vmem:[%s1 + $0x28] sm:$0xff]
    %v4037 = vld [vmem:[%s1 + $0x30] sm:$0xff]
    %v4038 = vld [vmem:[%s1 + $0x38] sm:$0xff]
    %v4039 = vld [vmem:[%s1 + $0x40] sm:$0xff]
    %v4040 = vld [vmem:[%s1 + $0x48] sm:$0xff]
    %v4041 = vld [vmem:[%s1 + $0x50] sm:$0xff]
    %v4042 = vld [vmem:[%s1 + $0x58] sm:$0xff]
    %v4043 = vld [vmem:[%s1 + $0x60] sm:$0xff]
    %v4044 = vld [vmem:[%s1 + $0x68] sm:$0xff]
    %v4045 = vld [vmem:[%s1 + $0x70] sm:$0xff]
    %v4046 = vld [vmem:[%s1 + $0x78] sm:$0xff]
    %v4047 = vlaneseq
    %v4048 = vand.u32 %v4047, 127
    %s4049 = smul.u32 0, 128
    %v4050 = vstv %s4049
    %v4051 = vadd.s32 %v4048, %v4050
    %v4052 = vld [vmem:[#allocation5] sm:$0xff]
    %v4053 = vld [vmem:[#allocation5 + $0x8] sm:$0xff]
    %v4054 = vld [vmem:[#allocation5 + $0x10] sm:$0xff]
    %v4055 = vld [vmem:[#allocation5 + $0x18] sm:$0xff]
    %v4056 = vld [vmem:[#allocation5 + $0x20] sm:$0xff]
    %v4057 = vld [vmem:[#allocation5 + $0x28] sm:$0xff]
    %v4058 = vld [vmem:[#allocation5 + $0x30] sm:$0xff]
    %v4059 = vld [vmem:[#allocation5 + $0x38] sm:$0xff]
    %v4060 = vld [vmem:[#allocation5 + $0x40] sm:$0xff]
    %v4061 = vld [vmem:[#allocation5 + $0x48] sm:$0xff]
    %v4062 = vld [vmem:[#allocation5 + $0x50] sm:$0xff]
    %v4063 = vld [vmem:[#allocation5 + $0x58] sm:$0xff]
    %v4064 = vld [vmem:[#allocation5 + $0x60] sm:$0xff]
    %v4065 = vld [vmem:[#allocation5 + $0x68] sm:$0xff]
    %v4066 = vld [vmem:[#allocation5 + $0x70] sm:$0xff]
    %v4067 = vld [vmem:[#allocation5 + $0x78] sm:$0xff]
    %4068 = vset.pattern.permute.xlu0 0
    %4069 = vperm.xlu0 %4068, %v4031
    %v4070 = vpop.permute.xlu0 %4069
    %4071 = vset.pattern.permute.xlu0 0
    %4072 = vperm.xlu0 %4071, %v4032
    %v4073 = vpop.permute.xlu0 %4072
    %4074 = vset.pattern.permute.xlu0 0
    %4075 = vperm.xlu0 %4074, %v4033
    %v4076 = vpop.permute.xlu0 %4075
    %4077 = vset.pattern.permute.xlu0 0
    %4078 = vperm.xlu0 %4077, %v4034
    %v4079 = vpop.permute.xlu0 %4078
    %4080 = vset.pattern.permute.xlu0 0
    %4081 = vperm.xlu0 %4080, %v4035
    %v4082 = vpop.permute.xlu0 %4081
    %4083 = vset.pattern.permute.xlu0 0
    %4084 = vperm.xlu0 %4083, %v4036
    %v4085 = vpop.permute.xlu0 %4084
    %4086 = vset.pattern.permute.xlu0 0
    %4087 = vperm.xlu0 %4086, %v4037
    %v4088 = vpop.permute.xlu0 %4087
    %4089 = vset.pattern.permute.xlu0 0
    %4090 = vperm.xlu0 %4089, %v4038
    %v4091 = vpop.permute.xlu0 %4090
    %4092 = vset.pattern.permute.xlu0 0
    %4093 = vperm.xlu0 %4092, %v4039
    %v4094 = vpop.permute.xlu0 %4093
    %4095 = vset.pattern.permute.xlu0 0
    %4096 = vperm.xlu0 %4095, %v4040
    %v4097 = vpop.permute.xlu0 %4096
    %4098 = vset.pattern.permute.xlu0 0
    %4099 = vperm.xlu0 %4098, %v4041
    %v4100 = vpop.permute.xlu0 %4099
    %4101 = vset.pattern.permute.xlu0 0
    %4102 = vperm.xlu0 %4101, %v4042
    %v4103 = vpop.permute.xlu0 %4102
    %4104 = vset.pattern.permute.xlu0 0
    %4105 = vperm.xlu0 %4104, %v4043
    %v4106 = vpop.permute.xlu0 %4105
    %4107 = vset.pattern.permute.xlu0 0
    %4108 = vperm.xlu0 %4107, %v4044
    %v4109 = vpop.permute.xlu0 %4108
    %4110 = vset.pattern.permute.xlu0 0
    %4111 = vperm.xlu0 %4110, %v4045
    %v4112 = vpop.permute.xlu0 %4111
    %4113 = vset.pattern.permute.xlu0 0
    %4114 = vperm.xlu0 %4113, %v4046
    %v4115 = vpop.permute.xlu0 %4114
    %vm4116 = vcmp.eq.s32.totalorder %v4051, %v4070
    %vm4117 = vcmp.eq.s32.totalorder %v4051, %v4073
    %vm4118 = vcmp.eq.s32.totalorder %v4051, %v4076
    %vm4119 = vcmp.eq.s32.totalorder %v4051, %v4079
    %vm4120 = vcmp.eq.s32.totalorder %v4051, %v4082
    %vm4121 = vcmp.eq.s32.totalorder %v4051, %v4085
    %vm4122 = vcmp.eq.s32.totalorder %v4051, %v4088
    %vm4123 = vcmp.eq.s32.totalorder %v4051, %v4091
    %vm4124 = vcmp.eq.s32.totalorder %v4051, %v4094
    %vm4125 = vcmp.eq.s32.totalorder %v4051, %v4097
    %vm4126 = vcmp.eq.s32.totalorder %v4051, %v4100
    %vm4127 = vcmp.eq.s32.totalorder %v4051, %v4103
    %vm4128 = vcmp.eq.s32.totalorder %v4051, %v4106
    %vm4129 = vcmp.eq.s32.totalorder %v4051, %v4109
    %vm4130 = vcmp.eq.s32.totalorder %v4051, %v4112
    %vm4131 = vcmp.eq.s32.totalorder %v4051, %v4115
    %v4132 = vsel %vm4116, %v3953, 0.0
    %v4133 = vsel %vm4117, %v3956, 0.0
    %v4134 = vsel %vm4118, %v3961, 0.0
    %v4135 = vsel %vm4119, %v3964, 0.0
    %v4136 = vsel %vm4120, %v3969, 0.0
    %v4137 = vsel %vm4121, %v3972, 0.0
    %v4138 = vsel %vm4122, %v3977, 0.0
    %v4139 = vsel %vm4123, %v3980, 0.0
    %v4140 = vsel %vm4124, %v3985, 0.0
    %v4141 = vsel %vm4125, %v3988, 0.0
    %v4142 = vsel %vm4126, %v3993, 0.0
    %v4143 = vsel %vm4127, %v3996, 0.0
    %v4144 = vsel %vm4128, %v4001, 0.0
    %v4145 = vsel %vm4129, %v4004, 0.0
    %v4146 = vsel %vm4130, %v4009, 0.0
    %v4147 = vsel %vm4131, %v4012, 0.0
    %4148 = vadd.xlane.f32.xlu0 %v4132
    %v4149 = vpop.xlane.xlu0 %4148
    %4150 = vadd.xlane.f32.xlu0 %v4133
    %v4151 = vpop.xlane.xlu0 %4150
    %4152 = vadd.xlane.f32.xlu0 %v4134
    %v4153 = vpop.xlane.xlu0 %4152
    %4154 = vadd.xlane.f32.xlu0 %v4135
    %v4155 = vpop.xlane.xlu0 %4154
    %4156 = vadd.xlane.f32.xlu0 %v4136
    %v4157 = vpop.xlane.xlu0 %4156
    %4158 = vadd.xlane.f32.xlu0 %v4137
    %v4159 = vpop.xlane.xlu0 %4158
    %4160 = vadd.xlane.f32.xlu0 %v4138
    %v4161 = vpop.xlane.xlu0 %4160
    %4162 = vadd.xlane.f32.xlu0 %v4139
    %v4163 = vpop.xlane.xlu0 %4162
    %4164 = vadd.xlane.f32.xlu0 %v4140
    %v4165 = vpop.xlane.xlu0 %4164
    %4166 = vadd.xlane.f32.xlu0 %v4141
    %v4167 = vpop.xlane.xlu0 %4166
    %4168 = vadd.xlane.f32.xlu0 %v4142
    %v4169 = vpop.xlane.xlu0 %4168
    %4170 = vadd.xlane.f32.xlu0 %v4143
    %v4171 = vpop.xlane.xlu0 %4170
    %4172 = vadd.xlane.f32.xlu0 %v4144
    %v4173 = vpop.xlane.xlu0 %4172
    %4174 = vadd.xlane.f32.xlu0 %v4145
    %v4175 = vpop.xlane.xlu0 %4174
    %4176 = vadd.xlane.f32.xlu0 %v4146
    %v4177 = vpop.xlane.xlu0 %4176
    %4178 = vadd.xlane.f32.xlu0 %v4147
    %v4179 = vpop.xlane.xlu0 %4178
    %v4180 = vadd.f32 %v4052, %v4149
    %v4181 = vadd.f32 %v4053, %v4151
    %v4182 = vadd.f32 %v4054, %v4153
    %v4183 = vadd.f32 %v4055, %v4155
    %v4184 = vadd.f32 %v4056, %v4157
    %v4185 = vadd.f32 %v4057, %v4159
    %v4186 = vadd.f32 %v4058, %v4161
    %v4187 = vadd.f32 %v4059, %v4163
    %v4188 = vadd.f32 %v4060, %v4165
    %v4189 = vadd.f32 %v4061, %v4167
    %v4190 = vadd.f32 %v4062, %v4169
    %v4191 = vadd.f32 %v4063, %v4171
    %v4192 = vadd.f32 %v4064, %v4173
    %v4193 = vadd.f32 %v4065, %v4175
    %v4194 = vadd.f32 %v4066, %v4177
    %v4195 = vadd.f32 %v4067, %v4179
    %vm4196 = vcmask 7168
    %4197 = vst.msk [vmem:[#allocation5] sm:$0xff] %vm4196, %v4180
    %4198 = vst.msk [vmem:[#allocation5 + $0x8] sm:$0xff] %vm4196, %v4181
    %4199 = vst.msk [vmem:[#allocation5 + $0x10] sm:$0xff] %vm4196, %v4182
    %4200 = vst.msk [vmem:[#allocation5 + $0x18] sm:$0xff] %vm4196, %v4183
    %4201 = vst.msk [vmem:[#allocation5 + $0x20] sm:$0xff] %vm4196, %v4184
    %4202 = vst.msk [vmem:[#allocation5 + $0x28] sm:$0xff] %vm4196, %v4185
    %4203 = vst.msk [vmem:[#allocation5 + $0x30] sm:$0xff] %vm4196, %v4186
    %4204 = vst.msk [vmem:[#allocation5 + $0x38] sm:$0xff] %vm4196, %v4187
    %4205 = vst.msk [vmem:[#allocation5 + $0x40] sm:$0xff] %vm4196, %v4188
    %4206 = vst.msk [vmem:[#allocation5 + $0x48] sm:$0xff] %vm4196, %v4189
    %4207 = vst.msk [vmem:[#allocation5 + $0x50] sm:$0xff] %vm4196, %v4190
    %4208 = vst.msk [vmem:[#allocation5 + $0x58] sm:$0xff] %vm4196, %v4191
    %4209 = vst.msk [vmem:[#allocation5 + $0x60] sm:$0xff] %vm4196, %v4192
    %4210 = vst.msk [vmem:[#allocation5 + $0x68] sm:$0xff] %vm4196, %v4193
    %4211 = vst.msk [vmem:[#allocation5 + $0x70] sm:$0xff] %vm4196, %v4194
    %4212 = vst.msk [vmem:[#allocation5 + $0x78] sm:$0xff] %vm4196, %v4195
    %v4213 = vld [vmem:[#allocation3] sm:$0xff]
    %v4214 = vld [vmem:[#allocation3 + $0x8] sm:$0xff]
    %v4215 = vld [vmem:[#allocation3 + $0x10] sm:$0xff]
    %v4216 = vld [vmem:[#allocation3 + $0x18] sm:$0xff]
    %v4217 = vld [vmem:[#allocation3 + $0x20] sm:$0xff]
    %v4218 = vld [vmem:[#allocation3 + $0x28] sm:$0xff]
    %v4219 = vld [vmem:[#allocation3 + $0x30] sm:$0xff]
    %v4220 = vld [vmem:[#allocation3 + $0x38] sm:$0xff]
    %v4221 = vld [vmem:[#allocation3 + $0x40] sm:$0xff]
    %v4222 = vld [vmem:[#allocation3 + $0x48] sm:$0xff]
    %v4223 = vld [vmem:[#allocation3 + $0x50] sm:$0xff]
    %v4224 = vld [vmem:[#allocation3 + $0x58] sm:$0xff]
    %v4225 = vld [vmem:[#allocation3 + $0x60] sm:$0xff]
    %v4226 = vld [vmem:[#allocation3 + $0x68] sm:$0xff]
    %v4227 = vld [vmem:[#allocation3 + $0x70] sm:$0xff]
    %v4228 = vld [vmem:[#allocation3 + $0x78] sm:$0xff]
    %4229 = vmax.xlane.f32.xlu0 %v3953
    %v4230 = vpop.xlane.xlu0 %4229
    %4231 = vmax.xlane.f32.xlu0 %v3956
    %v4232 = vpop.xlane.xlu0 %4231
    %4233 = vmax.xlane.f32.xlu0 %v3961
    %v4234 = vpop.xlane.xlu0 %4233
    %4235 = vmax.xlane.f32.xlu0 %v3964
    %v4236 = vpop.xlane.xlu0 %4235
    %4237 = vmax.xlane.f32.xlu0 %v3969
    %v4238 = vpop.xlane.xlu0 %4237
    %4239 = vmax.xlane.f32.xlu0 %v3972
    %v4240 = vpop.xlane.xlu0 %4239
    %4241 = vmax.xlane.f32.xlu0 %v3977
    %v4242 = vpop.xlane.xlu0 %4241
    %4243 = vmax.xlane.f32.xlu0 %v3980
    %v4244 = vpop.xlane.xlu0 %4243
    %4245 = vmax.xlane.f32.xlu0 %v3985
    %v4246 = vpop.xlane.xlu0 %4245
    %4247 = vmax.xlane.f32.xlu0 %v3988
    %v4248 = vpop.xlane.xlu0 %4247
    %4249 = vmax.xlane.f32.xlu0 %v3993
    %v4250 = vpop.xlane.xlu0 %4249
    %4251 = vmax.xlane.f32.xlu0 %v3996
    %v4252 = vpop.xlane.xlu0 %4251
    %4253 = vmax.xlane.f32.xlu0 %v4001
    %v4254 = vpop.xlane.xlu0 %4253
    %4255 = vmax.xlane.f32.xlu0 %v4004
    %v4256 = vpop.xlane.xlu0 %4255
    %4257 = vmax.xlane.f32.xlu0 %v4009
    %v4258 = vpop.xlane.xlu0 %4257
    %4259 = vmax.xlane.f32.xlu0 %v4012
    %v4260 = vpop.xlane.xlu0 %4259
    %v4261 = vmax.f32 %v4213, %v4230
    %v4262 = vmax.f32 %v4214, %v4232
    %v4263 = vmax.f32 %v4215, %v4234
    %v4264 = vmax.f32 %v4216, %v4236
    %v4265 = vmax.f32 %v4217, %v4238
    %v4266 = vmax.f32 %v4218, %v4240
    %v4267 = vmax.f32 %v4219, %v4242
    %v4268 = vmax.f32 %v4220, %v4244
    %v4269 = vmax.f32 %v4221, %v4246
    %v4270 = vmax.f32 %v4222, %v4248
    %v4271 = vmax.f32 %v4223, %v4250
    %v4272 = vmax.f32 %v4224, %v4252
    %v4273 = vmax.f32 %v4225, %v4254
    %v4274 = vmax.f32 %v4226, %v4256
    %v4275 = vmax.f32 %v4227, %v4258
    %v4276 = vmax.f32 %v4228, %v4260
    %v4277 = vld [vmem:[#allocation4] sm:$0xff]
    %v4278 = vld [vmem:[#allocation4 + $0x8] sm:$0xff]
    %v4279 = vld [vmem:[#allocation4 + $0x10] sm:$0xff]
    %v4280 = vld [vmem:[#allocation4 + $0x18] sm:$0xff]
    %v4281 = vld [vmem:[#allocation4 + $0x20] sm:$0xff]
    %v4282 = vld [vmem:[#allocation4 + $0x28] sm:$0xff]
    %v4283 = vld [vmem:[#allocation4 + $0x30] sm:$0xff]
    %v4284 = vld [vmem:[#allocation4 + $0x38] sm:$0xff]
    %v4285 = vld [vmem:[#allocation4 + $0x40] sm:$0xff]
    %v4286 = vld [vmem:[#allocation4 + $0x48] sm:$0xff]
    %v4287 = vld [vmem:[#allocation4 + $0x50] sm:$0xff]
    %v4288 = vld [vmem:[#allocation4 + $0x58] sm:$0xff]
    %v4289 = vld [vmem:[#allocation4 + $0x60] sm:$0xff]
    %v4290 = vld [vmem:[#allocation4 + $0x68] sm:$0xff]
    %v4291 = vld [vmem:[#allocation4 + $0x70] sm:$0xff]
    %v4292 = vld [vmem:[#allocation4 + $0x78] sm:$0xff]
    %v4293 = vsub.f32 %v4213, %v4261
    %v4294 = vsub.f32 %v4214, %v4262
    %v4295 = vsub.f32 %v4215, %v4263
    %v4296 = vsub.f32 %v4216, %v4264
    %v4297 = vsub.f32 %v4217, %v4265
    %v4298 = vsub.f32 %v4218, %v4266
    %v4299 = vsub.f32 %v4219, %v4267
    %v4300 = vsub.f32 %v4220, %v4268
    %v4301 = vsub.f32 %v4221, %v4269
    %v4302 = vsub.f32 %v4222, %v4270
    %v4303 = vsub.f32 %v4223, %v4271
    %v4304 = vsub.f32 %v4224, %v4272
    %v4305 = vsub.f32 %v4225, %v4273
    %v4306 = vsub.f32 %v4226, %v4274
    %v4307 = vsub.f32 %v4227, %v4275
    %v4308 = vsub.f32 %v4228, %v4276
    %v4309 = vmul.f32 %v4293, 1.442695
    %v4310 = vpow.pop %v4309
    %v4311 = vmul.f32 %v4294, 1.442695
    %v4312 = vpow.pop %v4311
    %v4313 = vmul.f32 %v4295, 1.442695
    %v4314 = vpow.pop %v4313
    %v4315 = vmul.f32 %v4296, 1.442695
    %v4316 = vpow.pop %v4315
    %v4317 = vmul.f32 %v4297, 1.442695
    %v4318 = vpow.pop %v4317
    %v4319 = vmul.f32 %v4298, 1.442695
    %v4320 = vpow.pop %v4319
    %v4321 = vmul.f32 %v4299, 1.442695
    %v4322 = vpow.pop %v4321
    %v4323 = vmul.f32 %v4300, 1.442695
    %v4324 = vpow.pop %v4323
    %v4325 = vmul.f32 %v4301, 1.442695
    %v4326 = vpow.pop %v4325
    %v4327 = vmul.f32 %v4302, 1.442695
    %v4328 = vpow.pop %v4327
    %v4329 = vmul.f32 %v4303, 1.442695
    %v4330 = vpow.pop %v4329
    %v4331 = vmul.f32 %v4304, 1.442695
    %v4332 = vpow.pop %v4331
    %v4333 = vmul.f32 %v4305, 1.442695
    %v4334 = vpow.pop %v4333
    %v4335 = vmul.f32 %v4306, 1.442695
    %v4336 = vpow.pop %v4335
    %v4337 = vmul.f32 %v4307, 1.442695
    %v4338 = vpow.pop %v4337
    %v4339 = vmul.f32 %v4308, 1.442695
    %v4340 = vpow.pop %v4339
    %v4341 = vmul.f32 %v4277, %v4310
    %v4342 = vmul.f32 %v4278, %v4312
    %v4343 = vmul.f32 %v4279, %v4314
    %v4344 = vmul.f32 %v4280, %v4316
    %v4345 = vmul.f32 %v4281, %v4318
    %v4346 = vmul.f32 %v4282, %v4320
    %v4347 = vmul.f32 %v4283, %v4322
    %v4348 = vmul.f32 %v4284, %v4324
    %v4349 = vmul.f32 %v4285, %v4326
    %v4350 = vmul.f32 %v4286, %v4328
    %v4351 = vmul.f32 %v4287, %v4330
    %v4352 = vmul.f32 %v4288, %v4332
    %v4353 = vmul.f32 %v4289, %v4334
    %v4354 = vmul.f32 %v4290, %v4336
    %v4355 = vmul.f32 %v4291, %v4338
    %v4356 = vmul.f32 %v4292, %v4340
    %4358 = vset.pattern.permute.xlu0 0
    %4359 = vperm.xlu0 %4358, %v4261
    %v4360 = vpop.permute.xlu0 %4359
    %4363 = vset.pattern.permute.xlu0 0
    %4364 = vperm.xlu0 %4363, %v4262
    %v4365 = vpop.permute.xlu0 %4364
    %4368 = vset.pattern.permute.xlu0 0
    %4369 = vperm.xlu0 %4368, %v4263
    %v4370 = vpop.permute.xlu0 %4369
    %4373 = vset.pattern.permute.xlu0 0
    %4374 = vperm.xlu0 %4373, %v4264
    %v4375 = vpop.permute.xlu0 %4374
    %4378 = vset.pattern.permute.xlu0 0
    %4379 = vperm.xlu0 %4378, %v4265
    %v4380 = vpop.permute.xlu0 %4379
    %4383 = vset.pattern.permute.xlu0 0
    %4384 = vperm.xlu0 %4383, %v4266
    %v4385 = vpop.permute.xlu0 %4384
    %4388 = vset.pattern.permute.xlu0 0
    %4389 = vperm.xlu0 %4388, %v4267
    %v4390 = vpop.permute.xlu0 %4389
    %4393 = vset.pattern.permute.xlu0 0
    %4394 = vperm.xlu0 %4393, %v4268
    %v4395 = vpop.permute.xlu0 %4394
    %4398 = vset.pattern.permute.xlu0 0
    %4399 = vperm.xlu0 %4398, %v4269
    %v4400 = vpop.permute.xlu0 %4399
    %4403 = vset.pattern.permute.xlu0 0
    %4404 = vperm.xlu0 %4403, %v4270
    %v4405 = vpop.permute.xlu0 %4404
    %4408 = vset.pattern.permute.xlu0 0
    %4409 = vperm.xlu0 %4408, %v4271
    %v4410 = vpop.permute.xlu0 %4409
    %4413 = vset.pattern.permute.xlu0 0
    %4414 = vperm.xlu0 %4413, %v4272
    %v4415 = vpop.permute.xlu0 %4414
    %4418 = vset.pattern.permute.xlu0 0
    %4419 = vperm.xlu0 %4418, %v4273
    %v4420 = vpop.permute.xlu0 %4419
    %4423 = vset.pattern.permute.xlu0 0
    %4424 = vperm.xlu0 %4423, %v4274
    %v4425 = vpop.permute.xlu0 %4424
    %4428 = vset.pattern.permute.xlu0 0
    %4429 = vperm.xlu0 %4428, %v4275
    %v4430 = vpop.permute.xlu0 %4429
    %4433 = vset.pattern.permute.xlu0 0
    %4434 = vperm.xlu0 %4433, %v4276
    %v4435 = vpop.permute.xlu0 %4434
    %v4437 = vsub.f32 %v3953, %v4360
    %v4438 = vsub.f32 %v3956, %v4365
    %v4439 = vsub.f32 %v3961, %v4370
    %v4440 = vsub.f32 %v3964, %v4375
    %v4441 = vsub.f32 %v3969, %v4380
    %v4442 = vsub.f32 %v3972, %v4385
    %v4443 = vsub.f32 %v3977, %v4390
    %v4444 = vsub.f32 %v3980, %v4395
    %v4445 = vsub.f32 %v3985, %v4400
    %v4446 = vsub.f32 %v3988, %v4405
    %v4447 = vsub.f32 %v3993, %v4410
    %v4448 = vsub.f32 %v3996, %v4415
    %v4449 = vsub.f32 %v4001, %v4420
    %v4450 = vsub.f32 %v4004, %v4425
    %v4451 = vsub.f32 %v4009, %v4430
    %v4452 = vsub.f32 %v4012, %v4435
    %v4453 = vmul.f32 %v4437, 1.442695
    %v4454 = vpow.pop %v4453
    %v4455 = vmul.f32 %v4438, 1.442695
    %v4456 = vpow.pop %v4455
    %v4457 = vmul.f32 %v4439, 1.442695
    %v4458 = vpow.pop %v4457
    %v4459 = vmul.f32 %v4440, 1.442695
    %v4460 = vpow.pop %v4459
    %v4461 = vmul.f32 %v4441, 1.442695
    %v4462 = vpow.pop %v4461
    %v4463 = vmul.f32 %v4442, 1.442695
    %v4464 = vpow.pop %v4463
    %v4465 = vmul.f32 %v4443, 1.442695
    %v4466 = vpow.pop %v4465
    %v4467 = vmul.f32 %v4444, 1.442695
    %v4468 = vpow.pop %v4467
    %v4469 = vmul.f32 %v4445, 1.442695
    %v4470 = vpow.pop %v4469
    %v4471 = vmul.f32 %v4446, 1.442695
    %v4472 = vpow.pop %v4471
    %v4473 = vmul.f32 %v4447, 1.442695
    %v4474 = vpow.pop %v4473
    %v4475 = vmul.f32 %v4448, 1.442695
    %v4476 = vpow.pop %v4475
    %v4477 = vmul.f32 %v4449, 1.442695
    %v4478 = vpow.pop %v4477
    %v4479 = vmul.f32 %v4450, 1.442695
    %v4480 = vpow.pop %v4479
    %v4481 = vmul.f32 %v4451, 1.442695
    %v4482 = vpow.pop %v4481
    %v4483 = vmul.f32 %v4452, 1.442695
    %v4484 = vpow.pop %v4483
    %4485 = vadd.xlane.f32.xlu0 %v4454
    %v4486 = vpop.xlane.xlu0 %4485
    %4487 = vadd.xlane.f32.xlu0 %v4456
    %v4488 = vpop.xlane.xlu0 %4487
    %4489 = vadd.xlane.f32.xlu0 %v4458
    %v4490 = vpop.xlane.xlu0 %4489
    %4491 = vadd.xlane.f32.xlu0 %v4460
    %v4492 = vpop.xlane.xlu0 %4491
    %4493 = vadd.xlane.f32.xlu0 %v4462
    %v4494 = vpop.xlane.xlu0 %4493
    %4495 = vadd.xlane.f32.xlu0 %v4464
    %v4496 = vpop.xlane.xlu0 %4495
    %4497 = vadd.xlane.f32.xlu0 %v4466
    %v4498 = vpop.xlane.xlu0 %4497
    %4499 = vadd.xlane.f32.xlu0 %v4468
    %v4500 = vpop.xlane.xlu0 %4499
    %4501 = vadd.xlane.f32.xlu0 %v4470
    %v4502 = vpop.xlane.xlu0 %4501
    %4503 = vadd.xlane.f32.xlu0 %v4472
    %v4504 = vpop.xlane.xlu0 %4503
    %4505 = vadd.xlane.f32.xlu0 %v4474
    %v4506 = vpop.xlane.xlu0 %4505
    %4507 = vadd.xlane.f32.xlu0 %v4476
    %v4508 = vpop.xlane.xlu0 %4507
    %4509 = vadd.xlane.f32.xlu0 %v4478
    %v4510 = vpop.xlane.xlu0 %4509
    %4511 = vadd.xlane.f32.xlu0 %v4480
    %v4512 = vpop.xlane.xlu0 %4511
    %4513 = vadd.xlane.f32.xlu0 %v4482
    %v4514 = vpop.xlane.xlu0 %4513
    %4515 = vadd.xlane.f32.xlu0 %v4484
    %v4516 = vpop.xlane.xlu0 %4515
    %v4517 = vadd.f32 %v4341, %v4486
    %v4518 = vadd.f32 %v4342, %v4488
    %v4519 = vadd.f32 %v4343, %v4490
    %v4520 = vadd.f32 %v4344, %v4492
    %v4521 = vadd.f32 %v4345, %v4494
    %v4522 = vadd.f32 %v4346, %v4496
    %v4523 = vadd.f32 %v4347, %v4498
    %v4524 = vadd.f32 %v4348, %v4500
    %v4525 = vadd.f32 %v4349, %v4502
    %v4526 = vadd.f32 %v4350, %v4504
    %v4527 = vadd.f32 %v4351, %v4506
    %v4528 = vadd.f32 %v4352, %v4508
    %v4529 = vadd.f32 %v4353, %v4510
    %v4530 = vadd.f32 %v4354, %v4512
    %v4531 = vadd.f32 %v4355, %v4514
    %v4532 = vadd.f32 %v4356, %v4516
    %4533 = vst.msk [vmem:[#allocation4] sm:$0xff] %vm4196, %v4517
    %4534 = vst.msk [vmem:[#allocation4 + $0x8] sm:$0xff] %vm4196, %v4518
    %4535 = vst.msk [vmem:[#allocation4 + $0x10] sm:$0xff] %vm4196, %v4519
    %4536 = vst.msk [vmem:[#allocation4 + $0x18] sm:$0xff] %vm4196, %v4520
    %4537 = vst.msk [vmem:[#allocation4 + $0x20] sm:$0xff] %vm4196, %v4521
    %4538 = vst.msk [vmem:[#allocation4 + $0x28] sm:$0xff] %vm4196, %v4522
    %4539 = vst.msk [vmem:[#allocation4 + $0x30] sm:$0xff] %vm4196, %v4523
    %4540 = vst.msk [vmem:[#allocation4 + $0x38] sm:$0xff] %vm4196, %v4524
    %4541 = vst.msk [vmem:[#allocation4 + $0x40] sm:$0xff] %vm4196, %v4525
    %4542 = vst.msk [vmem:[#allocation4 + $0x48] sm:$0xff] %vm4196, %v4526
    %4543 = vst.msk [vmem:[#allocation4 + $0x50] sm:$0xff] %vm4196, %v4527
    %4544 = vst.msk [vmem:[#allocation4 + $0x58] sm:$0xff] %vm4196, %v4528
    %4545 = vst.msk [vmem:[#allocation4 + $0x60] sm:$0xff] %vm4196, %v4529
    %4546 = vst.msk [vmem:[#allocation4 + $0x68] sm:$0xff] %vm4196, %v4530
    %4547 = vst.msk [vmem:[#allocation4 + $0x70] sm:$0xff] %vm4196, %v4531
    %4548 = vst.msk [vmem:[#allocation4 + $0x78] sm:$0xff] %vm4196, %v4532
    %4549 = vst.msk [vmem:[#allocation3] sm:$0xff] %vm4196, %v4261
    %4550 = vst.msk [vmem:[#allocation3 + $0x8] sm:$0xff] %vm4196, %v4262
    %4551 = vst.msk [vmem:[#allocation3 + $0x10] sm:$0xff] %vm4196, %v4263
    %4552 = vst.msk [vmem:[#allocation3 + $0x18] sm:$0xff] %vm4196, %v4264
    %4553 = vst.msk [vmem:[#allocation3 + $0x20] sm:$0xff] %vm4196, %v4265
    %4554 = vst.msk [vmem:[#allocation3 + $0x28] sm:$0xff] %vm4196, %v4266
    %4555 = vst.msk [vmem:[#allocation3 + $0x30] sm:$0xff] %vm4196, %v4267
    %4556 = vst.msk [vmem:[#allocation3 + $0x38] sm:$0xff] %vm4196, %v4268
    %4557 = vst.msk [vmem:[#allocation3 + $0x40] sm:$0xff] %vm4196, %v4269
    %4558 = vst.msk [vmem:[#allocation3 + $0x48] sm:$0xff] %vm4196, %v4270
    %4559 = vst.msk [vmem:[#allocation3 + $0x50] sm:$0xff] %vm4196, %v4271
    %4560 = vst.msk [vmem:[#allocation3 + $0x58] sm:$0xff] %vm4196, %v4272
    %4561 = vst.msk [vmem:[#allocation3 + $0x60] sm:$0xff] %vm4196, %v4273
    %4562 = vst.msk [vmem:[#allocation3 + $0x68] sm:$0xff] %vm4196, %v4274
    %4563 = vst.msk [vmem:[#allocation3 + $0x70] sm:$0xff] %vm4196, %v4275
    %4564 = vst.msk [vmem:[#allocation3 + $0x78] sm:$0xff] %vm4196, %v4276
    // Predicated region
    $region38: #{tpu_custom_call.1} parent=1 // pred_check
      %p4565 = pneg %p46
    $region39: #{tpu_custom_call.1} parent=1 // pred_check_branch
      %4567 = sbr.rel (%p4565) target = $region41
    $region40: #{tpu_custom_call.1} parent=1 // pred_region
      %v4568 = vld [vmem:[%s0] sm:$0xff]
      %v4569 = vld [vmem:[%s0 + $0x8] sm:$0xff]
      %v4570 = vld [vmem:[%s0 + $0x10] sm:$0xff]
      %v4571 = vld [vmem:[%s0 + $0x18] sm:$0xff]
      %v4572 = vld [vmem:[%s0 + $0x20] sm:$0xff]
      %v4573 = vld [vmem:[%s0 + $0x28] sm:$0xff]
      %v4574 = vld [vmem:[%s0 + $0x30] sm:$0xff]
      %v4575 = vld [vmem:[%s0 + $0x38] sm:$0xff]
      %v4576 = vld [vmem:[%s0 + $0x40] sm:$0xff]
      %v4577 = vld [vmem:[%s0 + $0x48] sm:$0xff]
      %v4578 = vld [vmem:[%s0 + $0x50] sm:$0xff]
      %v4579 = vld [vmem:[%s0 + $0x58] sm:$0xff]
      %v4580 = vld [vmem:[%s0 + $0x60] sm:$0xff]
      %v4581 = vld [vmem:[%s0 + $0x68] sm:$0xff]
      %v4582 = vld [vmem:[%s0 + $0x70] sm:$0xff]
      %v4583 = vld [vmem:[%s0 + $0x78] sm:$0xff]
      %vm4584 = vcmp.gt.f32.partialorder %v4568, 0.5
      %vm4585 = vcmp.gt.f32.partialorder %v4569, 0.5
      %vm4586 = vcmp.gt.f32.partialorder %v4570, 0.5
      %vm4587 = vcmp.gt.f32.partialorder %v4571, 0.5
      %vm4588 = vcmp.gt.f32.partialorder %v4572, 0.5
      %vm4589 = vcmp.gt.f32.partialorder %v4573, 0.5
      %vm4590 = vcmp.gt.f32.partialorder %v4574, 0.5
      %vm4591 = vcmp.gt.f32.partialorder %v4575, 0.5
      %vm4592 = vcmp.gt.f32.partialorder %v4576, 0.5
      %vm4593 = vcmp.gt.f32.partialorder %v4577, 0.5
      %vm4594 = vcmp.gt.f32.partialorder %v4578, 0.5
      %vm4595 = vcmp.gt.f32.partialorder %v4579, 0.5
      %vm4596 = vcmp.gt.f32.partialorder %v4580, 0.5
      %vm4597 = vcmp.gt.f32.partialorder %v4581, 0.5
      %vm4598 = vcmp.gt.f32.partialorder %v4582, 0.5
      %vm4599 = vcmp.gt.f32.partialorder %v4583, 0.5
      %v4600 = vsel %vm4584, 1, 0
      %v4601 = vsel %vm4585, 1, 0
      %v4602 = vsel %vm4586, 1, 0
      %v4603 = vsel %vm4587, 1, 0
      %v4604 = vsel %vm4588, 1, 0
      %v4605 = vsel %vm4589, 1, 0
      %v4606 = vsel %vm4590, 1, 0
      %v4607 = vsel %vm4591, 1, 0
      %v4608 = vsel %vm4592, 1, 0
      %v4609 = vsel %vm4593, 1, 0
      %v4610 = vsel %vm4594, 1, 0
      %v4611 = vsel %vm4595, 1, 0
      %v4612 = vsel %vm4596, 1, 0
      %v4613 = vsel %vm4597, 1, 0
      %v4614 = vsel %vm4598, 1, 0
      %v4615 = vsel %vm4599, 1, 0
      %v4616 = vcvt.s32.f32 %v4600
      %v4617 = vcvt.s32.f32 %v4601
      %v4618 = vcvt.s32.f32 %v4602
      %v4619 = vcvt.s32.f32 %v4603
      %v4620 = vcvt.s32.f32 %v4604
      %v4621 = vcvt.s32.f32 %v4605
      %v4622 = vcvt.s32.f32 %v4606
      %v4623 = vcvt.s32.f32 %v4607
      %v4624 = vcvt.s32.f32 %v4608
      %v4625 = vcvt.s32.f32 %v4609
      %v4626 = vcvt.s32.f32 %v4610
      %v4627 = vcvt.s32.f32 %v4611
      %v4628 = vcvt.s32.f32 %v4612
      %v4629 = vcvt.s32.f32 %v4613
      %v4630 = vcvt.s32.f32 %v4614
      %v4631 = vcvt.s32.f32 %v4615
      %v4632 = vld [vmem:[#allocation3] sm:$0xff]
      %v4633 = vld [vmem:[#allocation3 + $0x8] sm:$0xff]
      %v4634 = vld [vmem:[#allocation3 + $0x10] sm:$0xff]
      %v4635 = vld [vmem:[#allocation3 + $0x18] sm:$0xff]
      %v4636 = vld [vmem:[#allocation3 + $0x20] sm:$0xff]
      %v4637 = vld [vmem:[#allocation3 + $0x28] sm:$0xff]
      %v4638 = vld [vmem:[#allocation3 + $0x30] sm:$0xff]
      %v4639 = vld [vmem:[#allocation3 + $0x38] sm:$0xff]
      %v4640 = vld [vmem:[#allocation3 + $0x40] sm:$0xff]
      %v4641 = vld [vmem:[#allocation3 + $0x48] sm:$0xff]
      %v4642 = vld [vmem:[#allocation3 + $0x50] sm:$0xff]
      %v4643 = vld [vmem:[#allocation3 + $0x58] sm:$0xff]
      %v4644 = vld [vmem:[#allocation3 + $0x60] sm:$0xff]
      %v4645 = vld [vmem:[#allocation3 + $0x68] sm:$0xff]
      %v4646 = vld [vmem:[#allocation3 + $0x70] sm:$0xff]
      %v4647 = vld [vmem:[#allocation3 + $0x78] sm:$0xff]
      %v4648 = vld [vmem:[#allocation4] sm:$0xff]
      %v4649 = vld [vmem:[#allocation4 + $0x8] sm:$0xff]
      %v4650 = vld [vmem:[#allocation4 + $0x10] sm:$0xff]
      %v4651 = vld [vmem:[#allocation4 + $0x18] sm:$0xff]
      %v4652 = vld [vmem:[#allocation4 + $0x20] sm:$0xff]
      %v4653 = vld [vmem:[#allocation4 + $0x28] sm:$0xff]
      %v4654 = vld [vmem:[#allocation4 + $0x30] sm:$0xff]
      %v4655 = vld [vmem:[#allocation4 + $0x38] sm:$0xff]
      %v4656 = vld [vmem:[#allocation4 + $0x40] sm:$0xff]
      %v4657 = vld [vmem:[#allocation4 + $0x48] sm:$0xff]
      %v4658 = vld [vmem:[#allocation4 + $0x50] sm:$0xff]
      %v4659 = vld [vmem:[#allocation4 + $0x58] sm:$0xff]
      %v4660 = vld [vmem:[#allocation4 + $0x60] sm:$0xff]
      %v4661 = vld [vmem:[#allocation4 + $0x68] sm:$0xff]
      %v4662 = vld [vmem:[#allocation4 + $0x70] sm:$0xff]
      %v4663 = vld [vmem:[#allocation4 + $0x78] sm:$0xff]
      %v4664 = vlog2.pop %v4648
      %v4665 = vmul.f32 %v4664, 0.6931472
      %v4666 = vlog2.pop %v4649
      %v4667 = vmul.f32 %v4666, 0.6931472
      %v4668 = vlog2.pop %v4650
      %v4669 = vmul.f32 %v4668, 0.6931472
      %v4670 = vlog2.pop %v4651
      %v4671 = vmul.f32 %v4670, 0.6931472
      %v4672 = vlog2.pop %v4652
      %v4673 = vmul.f32 %v4672, 0.6931472
      %v4674 = vlog2.pop %v4653
      %v4675 = vmul.f32 %v4674, 0.6931472
      %v4676 = vlog2.pop %v4654
      %v4677 = vmul.f32 %v4676, 0.6931472
      %v4678 = vlog2.pop %v4655
      %v4679 = vmul.f32 %v4678, 0.6931472
      %v4680 = vlog2.pop %v4656
      %v4681 = vmul.f32 %v4680, 0.6931472
      %v4682 = vlog2.pop %v4657
      %v4683 = vmul.f32 %v4682, 0.6931472
      %v4684 = vlog2.pop %v4658
      %v4685 = vmul.f32 %v4684, 0.6931472
      %v4686 = vlog2.pop %v4659
      %v4687 = vmul.f32 %v4686, 0.6931472
      %v4688 = vlog2.pop %v4660
      %v4689 = vmul.f32 %v4688, 0.6931472
      %v4690 = vlog2.pop %v4661
      %v4691 = vmul.f32 %v4690, 0.6931472
      %v4692 = vlog2.pop %v4662
      %v4693 = vmul.f32 %v4692, 0.6931472
      %v4694 = vlog2.pop %v4663
      %v4695 = vmul.f32 %v4694, 0.6931472
      %v4696 = vadd.f32 %v4632, %v4665
      %v4697 = vadd.f32 %v4633, %v4667
      %v4698 = vadd.f32 %v4634, %v4669
      %v4699 = vadd.f32 %v4635, %v4671
      %v4700 = vadd.f32 %v4636, %v4673
      %v4701 = vadd.f32 %v4637, %v4675
      %v4702 = vadd.f32 %v4638, %v4677
      %v4703 = vadd.f32 %v4639, %v4679
      %v4704 = vadd.f32 %v4640, %v4681
      %v4705 = vadd.f32 %v4641, %v4683
      %v4706 = vadd.f32 %v4642, %v4685
      %v4707 = vadd.f32 %v4643, %v4687
      %v4708 = vadd.f32 %v4644, %v4689
      %v4709 = vadd.f32 %v4645, %v4691
      %v4710 = vadd.f32 %v4646, %v4693
      %v4711 = vadd.f32 %v4647, %v4695
      %v4712 = vld [vmem:[#allocation5] sm:$0xff]
      %v4713 = vld [vmem:[#allocation5 + $0x8] sm:$0xff]
      %v4714 = vld [vmem:[#allocation5 + $0x10] sm:$0xff]
      %v4715 = vld [vmem:[#allocation5 + $0x18] sm:$0xff]
      %v4716 = vld [vmem:[#allocation5 + $0x20] sm:$0xff]
      %v4717 = vld [vmem:[#allocation5 + $0x28] sm:$0xff]
      %v4718 = vld [vmem:[#allocation5 + $0x30] sm:$0xff]
      %v4719 = vld [vmem:[#allocation5 + $0x38] sm:$0xff]
      %v4720 = vld [vmem:[#allocation5 + $0x40] sm:$0xff]
      %v4721 = vld [vmem:[#allocation5 + $0x48] sm:$0xff]
      %v4722 = vld [vmem:[#allocation5 + $0x50] sm:$0xff]
      %v4723 = vld [vmem:[#allocation5 + $0x58] sm:$0xff]
      %v4724 = vld [vmem:[#allocation5 + $0x60] sm:$0xff]
      %v4725 = vld [vmem:[#allocation5 + $0x68] sm:$0xff]
      %v4726 = vld [vmem:[#allocation5 + $0x70] sm:$0xff]
      %v4727 = vld [vmem:[#allocation5 + $0x78] sm:$0xff]
      %v4728 = vsub.f32 %v4696, %v4712
      %v4729 = vsub.f32 %v4697, %v4713
      %v4730 = vsub.f32 %v4698, %v4714
      %v4731 = vsub.f32 %v4699, %v4715
      %v4732 = vsub.f32 %v4700, %v4716
      %v4733 = vsub.f32 %v4701, %v4717
      %v4734 = vsub.f32 %v4702, %v4718
      %v4735 = vsub.f32 %v4703, %v4719
      %v4736 = vsub.f32 %v4704, %v4720
      %v4737 = vsub.f32 %v4705, %v4721
      %v4738 = vsub.f32 %v4706, %v4722
      %v4739 = vsub.f32 %v4707, %v4723
      %v4740 = vsub.f32 %v4708, %v4724
      %v4741 = vsub.f32 %v4709, %v4725
      %v4742 = vsub.f32 %v4710, %v4726
      %v4743 = vsub.f32 %v4711, %v4727
      %v4744 = vmul.f32 %v4728, %v4616
      %v4745 = vmul.f32 %v4729, %v4617
      %v4746 = vmul.f32 %v4730, %v4618
      %v4747 = vmul.f32 %v4731, %v4619
      %v4748 = vmul.f32 %v4732, %v4620
      %v4749 = vmul.f32 %v4733, %v4621
      %v4750 = vmul.f32 %v4734, %v4622
      %v4751 = vmul.f32 %v4735, %v4623
      %v4752 = vmul.f32 %v4736, %v4624
      %v4753 = vmul.f32 %v4737, %v4625
      %v4754 = vmul.f32 %v4738, %v4626
      %v4755 = vmul.f32 %v4739, %v4627
      %v4756 = vmul.f32 %v4740, %v4628
      %v4757 = vmul.f32 %v4741, %v4629
      %v4758 = vmul.f32 %v4742, %v4630
      %v4759 = vmul.f32 %v4743, %v4631
      %v4760 = vsel %vm4196, %v4744, 0.0
      %v4761 = vsel %vm4196, %v4745, 0.0
      %v4762 = vadd.f32 %v4760, %v4761
      %v4763 = vsel %vm4196, %v4746, 0.0
      %v4764 = vadd.f32 %v4762, %v4763
      %v4765 = vsel %vm4196, %v4747, 0.0
      %v4766 = vadd.f32 %v4764, %v4765
      %v4767 = vsel %vm4196, %v4748, 0.0
      %v4768 = vadd.f32 %v4766, %v4767
      %v4769 = vsel %vm4196, %v4749, 0.0
      %v4770 = vadd.f32 %v4768, %v4769
      %v4771 = vsel %vm4196, %v4750, 0.0
      %v4772 = vadd.f32 %v4770, %v4771
      %v4773 = vsel %vm4196, %v4751, 0.0
      %v4774 = vadd.f32 %v4772, %v4773
      %v4775 = vsel %vm4196, %v4752, 0.0
      %v4776 = vadd.f32 %v4774, %v4775
      %v4777 = vsel %vm4196, %v4753, 0.0
      %v4778 = vadd.f32 %v4776, %v4777
      %v4779 = vsel %vm4196, %v4754, 0.0
      %v4780 = vadd.f32 %v4778, %v4779
      %v4781 = vsel %vm4196, %v4755, 0.0
      %v4782 = vadd.f32 %v4780, %v4781
      %v4783 = vsel %vm4196, %v4756, 0.0
      %v4784 = vadd.f32 %v4782, %v4783
      %v4785 = vsel %vm4196, %v4757, 0.0
      %v4786 = vadd.f32 %v4784, %v4785
      %v4787 = vsel %vm4196, %v4758, 0.0
      %v4788 = vadd.f32 %v4786, %v4787
      %v4789 = vsel %vm4196, %v4759, 0.0
      %v4790 = vadd.f32 %v4788, %v4789
      %4791 = vadd.xlane.f32.xlu0 %v4790
      %v4792 = vpop.xlane.xlu0 %4791
      %v4793 = vrot.slane %v4792, 4
      %v4794 = vadd.f32 %v4792, %v4793
      %v4795 = vrot.slane %v4794, 2
      %v4796 = vadd.f32 %v4794, %v4795
      %v4797 = vrot.slane %v4796, 1
      %v4798 = vadd.f32 %v4796, %v4797
      %s4799 = vtos %v4798
      %v4800 = vstv %s4799
      %v4801 = vadd.f32 %v4800, 0.0
      %4802 = vst [vmem:[#allocation10] sm:$0xff] %v4801
      %v4803 = vsel %vm4196, %v4616, 0.0
      %v4804 = vsel %vm4196, %v4617, 0.0
      %v4805 = vadd.f32 %v4803, %v4804
      %v4806 = vsel %vm4196, %v4618, 0.0
      %v4807 = vadd.f32 %v4805, %v4806
      %v4808 = vsel %vm4196, %v4619, 0.0
      %v4809 = vadd.f32 %v4807, %v4808
      %v4810 = vsel %vm4196, %v4620, 0.0
      %v4811 = vadd.f32 %v4809, %v4810
      %v4812 = vsel %vm4196, %v4621, 0.0
      %v4813 = vadd.f32 %v4811, %v4812
      %v4814 = vsel %vm4196, %v4622, 0.0
      %v4815 = vadd.f32 %v4813, %v4814
      %v4816 = vsel %vm4196, %v4623, 0.0
      %v4817 = vadd.f32 %v4815, %v4816
      %v4818 = vsel %vm4196, %v4624, 0.0
      %v4819 = vadd.f32 %v4817, %v4818
      %v4820 = vsel %vm4196, %v4625, 0.0
      %v4821 = vadd.f32 %v4819, %v4820
      %v4822 = vsel %vm4196, %v4626, 0.0
      %v4823 = vadd.f32 %v4821, %v4822
      %v4824 = vsel %vm4196, %v4627, 0.0
      %v4825 = vadd.f32 %v4823, %v4824
      %v4826 = vsel %vm4196, %v4628, 0.0
      %v4827 = vadd.f32 %v4825, %v4826
      %v4828 = vsel %vm4196, %v4629, 0.0
      %v4829 = vadd.f32 %v4827, %v4828
      %v4830 = vsel %vm4196, %v4630, 0.0
      %v4831 = vadd.f32 %v4829, %v4830
      %v4832 = vsel %vm4196, %v4631, 0.0
      %v4833 = vadd.f32 %v4831, %v4832
      %4834 = vadd.xlane.f32.xlu0 %v4833
      %v4835 = vpop.xlane.xlu0 %4834
      %v4836 = vrot.slane %v4835, 4
      %v4837 = vadd.f32 %v4835, %v4836
      %v4838 = vrot.slane %v4837, 2
      %v4839 = vadd.f32 %v4837, %v4838
      %v4840 = vrot.slane %v4839, 1
      %v4841 = vadd.f32 %v4839, %v4840
      %s4842 = vtos %v4841
      %v4843 = vstv %s4842
      %v4844 = vadd.f32 %v4843, 0.0
      %4845 = vst [vmem:[#allocation12] sm:$0xff] %v4844
    $region41: #{tpu_custom_call.1} parent=1 // pred_fallthru
      _
    // Predicated region
    $region42: #{tpu_custom_call.1} parent=1 // pred_check
      _
    $region43: #{tpu_custom_call.1} parent=1 // pred_check_branch
      %4847 = sbr.rel (0) target = $region45
    $region44: #{tpu_custom_call.1} parent=1 // pred_region
      %s4849 = ssub.s32 2048, 2048
      %4850 = vsyncadd [#allocation8], %s4849
      %s4851 = sshll.u32 [#allocation9], 4
      %s4852 = int_to_ptr.vmem [resolvable:$true] %s4851
      %4857 = dma.vmem_to_hbm [thread:$0]  %s4852, 2048, %s7, [#allocation8], 128, 128, 8
    $region45: #{tpu_custom_call.1} parent=1 // pred_fallthru
      _
    // Predicated region
    $region46: #{tpu_custom_call.1} parent=1 // pred_check
      _
    $region47: #{tpu_custom_call.1} parent=1 // pred_check_branch
      %4859 = sbr.rel (0) target = $region49
    $region48: #{tpu_custom_call.1} parent=1 // pred_region
      %s4861 = ssub.s32 128, 128
      %4862 = vsyncadd [#allocation11], %s4861
      %s4864 = sshll.u32 [#allocation10], 4
      %s4865 = int_to_ptr.vmem [resolvable:$true] %s4864
      %4867 = dma.vmem_to_hbm [thread:$0]  %s4865, 128, %s8, [#allocation11]
    $region49: #{tpu_custom_call.1} parent=1 // pred_fallthru
      _
    // Predicated region
    $region50: #{tpu_custom_call.1} parent=1 // pred_check
      _
    $region51: #{tpu_custom_call.1} parent=1 // pred_check_branch
      %4869 = sbr.rel (0) target = $region53
    $region52: #{tpu_custom_call.1} parent=1 // pred_region
      %s4871 = ssub.s32 128, 128
      %4872 = vsyncadd [#allocation11], %s4871
      %s4874 = sshll.u32 [#allocation12], 4
      %s4875 = int_to_ptr.vmem [resolvable:$true] %s4874
      %4877 = dma.vmem_to_hbm [thread:$0]  %s4875, 128, %s9, [#allocation11]
    $region53: #{tpu_custom_call.1} parent=1 // pred_fallthru
      _
    // Predicated region
    $region54: #{tpu_custom_call.1} parent=1 // pred_check
      _
    $region55: #{tpu_custom_call.1} parent=1 // pred_check_branch
      %4879 = sbr.rel (0) target = $region57
    $region56: #{tpu_custom_call.1} parent=1 // pred_region
      %4880 = dma.done [#allocation8], 2048
    $region57: #{tpu_custom_call.1} parent=1 // pred_fallthru
      _
    // Predicated region
    $region58: #{tpu_custom_call.1} parent=1 // pred_check
      _
    $region59: #{tpu_custom_call.1} parent=1 // pred_check_branch
      %4882 = sbr.rel (0) target = $region61
    $region60: #{tpu_custom_call.1} parent=1 // pred_region
      %4883 = dma.done [#allocation11], 128
    $region61: #{tpu_custom_call.1} parent=1 // pred_fallthru
      _
    // Predicated region
    $region62: #{tpu_custom_call.1} parent=1 // pred_check
      _
    $region63: #{tpu_custom_call.1} parent=1 // pred_check_branch
      %4885 = sbr.rel (0) target = $region65
    $region64: #{tpu_custom_call.1} parent=1 // pred_region
      %4886 = dma.done [#allocation11], 128
    $region65: #{tpu_custom_call.1} parent=1 // pred_fallthru
      _
    %4887 = vsyncpa [#allocation7], 1
    %4888 = vsyncpa [#allocation8], 1
    %4889 = vsyncpa [#allocation11], 1

</llo_original>
